<compile_context>
chip_gen: v6e
topology: v6e:2x2x1
jax: 0.10.0
libtpu: 0.0.40
codegen_flags: <defaults>
</compile_context>

<pallas_src>
import functools

import jax
import jax.numpy as jnp
from jax.experimental import pallas as pl
from jax.experimental.pallas import tpu as pltpu


# ----------------------------------------------------------------------------
# Helpers
# ----------------------------------------------------------------------------
def _round_up(x, m):
    return ((x + m - 1) // m) * m


def _layernorm(x, g, b, eps=1e-5):
    m = jnp.mean(x, axis=-1, keepdims=True)
    v = jnp.mean((x - m) ** 2, axis=-1, keepdims=True)
    return (x - m) * jax.lax.rsqrt(v + eps) * g + b


def _pick_tm(S):
    if S >= 256:
        return 256
    return _round_up(S, 32)


def _pick_head_group(nH, hd):
    # Largest head group whose lane width is <=256 and 128-aligned (BlockSpec
    # lane constraint).  Fallback: all heads in one group (width == hidden,
    # which is always a legal full-dim block) for small models.
    for hg in range(nH, 0, -1):
        if nH % hg:
            continue
        w = hg * hd
        if w <= 256 and w % 128 == 0:
            return hg
    return nH


# ----------------------------------------------------------------------------
# Kernel A: patch-embedding matmul + class token + pos embedding + pre-LN
# ----------------------------------------------------------------------------
def embed_kernel(p_ref, wp_ref, cls_ref, pos_ref, g_ref, b_ref, out_ref):
    emb = jnp.dot(p_ref[0], wp_ref[...], preferred_element_type=jnp.float32)
    out_ref[0] = _layernorm(emb + pos_ref[...], g_ref[...], b_ref[...])

    # Only the first seq tile holds the CLS slot (row 0 of the sequence).
    @pl.when(pl.program_id(1) == 0)
    def _():
        cls_row = cls_ref[...] + pos_ref[0:1, :]
        out_ref[0, 0:1, :] = _layernorm(cls_row, g_ref[...], b_ref[...])


def embed_call(patches, wp, cls, pos, g, b, *, tm):
    B, S_pad, CKK = patches.shape
    H = wp.shape[1]
    n_s = S_pad // tm
    return pl.pallas_call(
        embed_kernel,
        out_shape=jax.ShapeDtypeStruct((B, S_pad, H), jnp.float32),
        grid=(B, n_s),
        in_specs=[
            pl.BlockSpec((1, tm, CKK), lambda bi, s: (bi, s, 0)),
            pl.BlockSpec((CKK, H), lambda bi, s: (0, 0)),
            pl.BlockSpec((1, H), lambda bi, s: (0, 0)),
            pl.BlockSpec((tm, H), lambda bi, s: (s, 0)),
            pl.BlockSpec((1, H), lambda bi, s: (0, 0)),
            pl.BlockSpec((1, H), lambda bi, s: (0, 0)),
        ],
        out_specs=pl.BlockSpec((1, tm, H), lambda bi, s: (bi, s, 0)),
        compiler_params=pltpu.CompilerParams(
            dimension_semantics=("parallel", "parallel")),
    )(patches, wp, cls, pos, g, b)


# ----------------------------------------------------------------------------
# Kernel B: LN1 + fused QKV projection; Q/K/V written in (B, S, H) layout
# ----------------------------------------------------------------------------
def ln_qkv_kernel(x_ref, g_ref, b_ref, w_ref, bias_ref, q_ref, k_ref, v_ref):
    H = q_ref.shape[2]
    hln = _layernorm(x_ref[0], g_ref[...], b_ref[...]).astype(jnp.bfloat16)
    qkv = (jnp.dot(hln, w_ref[...], preferred_element_type=jnp.float32)
           + bias_ref[...]).astype(jnp.bfloat16)
    q_ref[0] = qkv[:, 0:H]
    k_ref[0] = qkv[:, H:2 * H]
    v_ref[0] = qkv[:, 2 * H:3 * H]


def ln_qkv_call(x, g1, b1, wqkv, bqkv, *, tm):
    B, S_pad, H = x.shape
    H3 = wqkv.shape[1]
    n_s = S_pad // tm
    out_sds = jax.ShapeDtypeStruct((B, S_pad, H), jnp.bfloat16)
    return pl.pallas_call(
        ln_qkv_kernel,
        out_shape=(out_sds, out_sds, out_sds),
        grid=(B, n_s),
        in_specs=[
            pl.BlockSpec((1, tm, H), lambda bi, s: (bi, s, 0)),
            pl.BlockSpec((1, H), lambda bi, s: (0, 0)),
            pl.BlockSpec((1, H), lambda bi, s: (0, 0)),
            pl.BlockSpec((H, H3), lambda bi, s: (0, 0)),   # resident weights
            pl.BlockSpec((1, H3), lambda bi, s: (0, 0)),
        ],
        out_specs=(
            pl.BlockSpec((1, tm, H), lambda bi, s: (bi, s, 0)),
            pl.BlockSpec((1, tm, H), lambda bi, s: (bi, s, 0)),
            pl.BlockSpec((1, tm, H), lambda bi, s: (bi, s, 0)),
        ),
        compiler_params=pltpu.CompilerParams(
            dimension_semantics=("parallel", "parallel"),
            vmem_limit_bytes=48 * 1024 * 1024),
    )(x, g1, b1, wqkv, bqkv)


# ----------------------------------------------------------------------------
# Kernel C: flash attention with head folding and an in-kernel kv loop
#   grid = (B, head_groups, q_tiles); K/V for the group are VMEM-resident.
#   Only the final kv tile applies the key-padding mask.
# ----------------------------------------------------------------------------
def flash_kernel(q_ref, k_ref, v_ref, o_ref, *, scale, hg, hd, tk, n_kv,
                 s_valid, mask_tail):
    tq = q_ref.shape[1]
    q_heads = [q_ref[0, :, h * hd:(h + 1) * hd] for h in range(hg)]

    def tile_step(start, carry, masked):
        k_blk = k_ref[0, pl.ds(start, tk), :]
        v_blk = v_ref[0, pl.ds(start, tk), :]
        if masked:
            kpos = start + jax.lax.broadcasted_iota(jnp.int32, (1, tk), 1)
            kmask = kpos < s_valid
        new_carry = []
        for h in range(hg):
            m_prev, l_prev, acc = carry[h]
            k_h = k_blk[:, h * hd:(h + 1) * hd]
            v_h = v_blk[:, h * hd:(h + 1) * hd]
            s = jax.lax.dot_general(
                q_heads[h], k_h, (((1,), (1,)), ((), ())),
                preferred_element_type=jnp.float32) * scale
            if masked:
                s = jnp.where(kmask, s, -1e30)
            m_new = jnp.maximum(m_prev, jnp.max(s, axis=-1, keepdims=True))
            alpha = jnp.exp(m_prev - m_new)
            p = jnp.exp(s - m_new)
            l_new = alpha * l_prev + jnp.sum(p, axis=-1, keepdims=True)
            acc_new = alpha * acc + jnp.dot(p.astype(v_h.dtype), v_h,
                                            preferred_element_type=jnp.float32)
            new_carry.append((m_new, l_new, acc_new))
        return tuple(new_carry)

    carry = tuple((jnp.full((tq, 1), -1e30, jnp.float32),
                   jnp.zeros((tq, 1), jnp.float32),
                   jnp.zeros((tq, hd), jnp.float32)) for _ in range(hg))

    n_full = n_kv - 1 if mask_tail else n_kv
    if n_full > 0:
        carry = jax.lax.fori_loop(
            0, n_full,
            lambda i, c: tile_step(pl.multiple_of(i * tk, tk), c, False),
            carry)
    if mask_tail:
        carry = tile_step((n_kv - 1) * tk, carry, True)

    outs = [acc * pl.reciprocal(l, approx=True) for (_, l, acc) in carry]
    o_ref[0] = jnp.concatenate(outs, axis=-1).astype(o_ref.dtype)


def flash_attn_call(q, k, v, *, s_valid, scale, tq, tk, hg, hd):
    B, S_pad, H = q.shape
    ghd = hg * hd
    n_groups = H // ghd
    n_q = S_pad // tq
    n_kv = S_pad // tk
    kern = functools.partial(flash_kernel, scale=scale, hg=hg, hd=hd, tk=tk,
                             n_kv=n_kv, s_valid=s_valid,
                             mask_tail=(S_pad != s_valid))
    return pl.pallas_call(
        kern,
        out_shape=jax.ShapeDtypeStruct((B, S_pad, H), jnp.bfloat16),
        grid=(B, n_groups, n_q),
        in_specs=[
            pl.BlockSpec((1, tq, ghd), lambda bi, g, qi: (bi, qi, g)),
            pl.BlockSpec((1, S_pad, ghd), lambda bi, g, qi: (bi, 0, g)),
            pl.BlockSpec((1, S_pad, ghd), lambda bi, g, qi: (bi, 0, g)),
        ],
        out_specs=pl.BlockSpec((1, tq, ghd), lambda bi, g, qi: (bi, qi, g)),
        compiler_params=pltpu.CompilerParams(
            dimension_semantics=("parallel", "parallel", "parallel"),
            vmem_limit_bytes=48 * 1024 * 1024),
    )(q, k, v)


# ----------------------------------------------------------------------------
# Kernel D+E fused: out-proj + residual + LN2 + MLP (QuickGELU) + residual
#   Weights are VMEM-resident (constant index_map); in-place on x.
# ----------------------------------------------------------------------------
def attn_out_mlp_kernel(x_ref, a_ref, wo_ref, bo_ref, g2_ref, b2_ref,
                        w1_ref, c1_ref, w2_ref, c2_ref, out_ref):
    y = x_ref[0] + jnp.dot(a_ref[0], wo_ref[...],
                           preferred_element_type=jnp.float32) + bo_ref[...]
    hln = _layernorm(y, g2_ref[...], b2_ref[...]).astype(jnp.bfloat16)
    h1 = jnp.dot(hln, w1_ref[...], preferred_element_type=jnp.float32) + c1_ref[...]
    h1 = h1 * jax.nn.sigmoid(1.702 * h1)                       # QuickGELU
    out_ref[0] = y + jnp.dot(h1.astype(jnp.bfloat16), w2_ref[...],
                             preferred_element_type=jnp.float32) + c2_ref[...]


def attn_out_mlp_call(x, attn, wo, bo, g2, b2, w1, c1, w2, c2, *, tm):
    B, S_pad, H = x.shape
    mlp = w1.shape[1]
    n_s = S_pad // tm
    # Explicit VMEM budget (2x-buffered bf16 weights + blocks + intermediates),
    # kept comfortably under v7x's 64 MiB physical VMEM.
    weights_b = (H * H + 2 * H * mlp) * 2
    blocks_b = tm * H * (4 + 2 + 4)
    inter_b = tm * (2 * H * 4 + H * 2 + mlp * 4 + mlp * 2)
    vmem_lim = max(32 * 1024 * 1024,
                   min(2 * weights_b + 2 * blocks_b + inter_b + (8 << 20),
                       56 * 1024 * 1024))
    return pl.pallas_call(
        attn_out_mlp_kernel,
        out_shape=jax.ShapeDtypeStruct((B, S_pad, H), jnp.float32),
        grid=(B, n_s),
        in_specs=[
            pl.BlockSpec((1, tm, H), lambda bi, s: (bi, s, 0)),
            pl.BlockSpec((1, tm, H), lambda bi, s: (bi, s, 0)),
            pl.BlockSpec((H, H), lambda bi, s: (0, 0)),
            pl.BlockSpec((1, H), lambda bi, s: (0, 0)),
            pl.BlockSpec((1, H), lambda bi, s: (0, 0)),
            pl.BlockSpec((1, H), lambda bi, s: (0, 0)),
            pl.BlockSpec((H, mlp), lambda bi, s: (0, 0)),
            pl.BlockSpec((1, mlp), lambda bi, s: (0, 0)),
            pl.BlockSpec((mlp, H), lambda bi, s: (0, 0)),
            pl.BlockSpec((1, H), lambda bi, s: (0, 0)),
        ],
        out_specs=pl.BlockSpec((1, tm, H), lambda bi, s: (bi, s, 0)),
        input_output_aliases={0: 0},
        compiler_params=pltpu.CompilerParams(
            dimension_semantics=("parallel", "parallel"),
            vmem_limit_bytes=int(vmem_lim)),
    )(x, attn, wo, bo, g2, b2, w1, c1, w2, c2)


# ----------------------------------------------------------------------------
# Kernel F: post-layernorm on the pooled (CLS) token
# ----------------------------------------------------------------------------
def post_ln_kernel(x_ref, g_ref, b_ref, out_ref):
    out_ref[...] = _layernorm(x_ref[...], g_ref[...], b_ref[...])


def post_ln_call(pooled, g, b):
    B, H = pooled.shape
    return pl.pallas_call(
        post_ln_kernel,
        out_shape=jax.ShapeDtypeStruct((B, H), jnp.float32),
        grid=(1,),
        in_specs=[pl.BlockSpec((B, H), lambda i: (0, 0)),
                  pl.BlockSpec((1, H), lambda i: (0, 0)),
                  pl.BlockSpec((1, H), lambda i: (0, 0))],
        out_specs=pl.BlockSpec((B, H), lambda i: (0, 0)),
    )(pooled, g, b)


# ----------------------------------------------------------------------------
# Glue: patch extraction (data rearrangement only) + full forward
# ----------------------------------------------------------------------------
def extract_patches(x, ps):
    # x: (B, C, H, W) NCHW -> (B, num_patches, C*ps*ps); patch vector ordered
    # (c, kh, kw); row-major spatial order == PyTorch conv flatten(2).
    B, C, H, W = x.shape
    nh, nw = H // ps, W // ps
    x = x.reshape(B, C, nh, ps, nw, ps)
    x = x.transpose(0, 2, 4, 1, 3, 5)
    return x.reshape(B, nh * nw, C * ps * ps)


def vision_tower_forward(x, params, cfg):
    ps, H = cfg["patch_size"], cfg["hidden"]
    nH, hd, mlp = cfg["num_heads"], cfg["head_dim"], cfg["mlp_dim"]
    B = x.shape[0]

    patches = extract_patches(x, ps)                 # (B, P, CKK) f32
    P = patches.shape[1]
    S = P + 1
    tm = _pick_tm(S)
    S_pad = _round_up(S, tm)
    hg = _pick_head_group(nH, hd)

    # dummy row 0 for the CLS slot + pad to a tile-aligned S_pad
    patches = jnp.pad(patches, ((0, 0), (1, S_pad - S), (0, 0)))
    patches = patches.astype(jnp.bfloat16)
    pos = jnp.pad(params["pos_emb"], ((0, S_pad - S), (0, 0)))

    h = embed_call(patches, params["w_patch"], params["class_emb"], pos,
                   params["pre_g"], params["pre_b"], tm=tm)       # (B,S_pad,H) f32

    for lp in params["layers"]:
        q, k, v = ln_qkv_call(h, lp["g1"], lp["b1"], lp["wqkv"], lp["bqkv"],
                              tm=tm)                              # bf16, (B,S_pad,H)
        attn = flash_attn_call(q, k, v, s_valid=S, scale=hd ** -0.5,
                               tq=tm, tk=tm, hg=hg, hd=hd)        # bf16, (B,S_pad,H)
        h = attn_out_mlp_call(h, attn, lp["wo"], lp["bo"], lp["g2"], lp["b2"],
                              lp["w1"], lp["c1"], lp["w2"], lp["c2"], tm=tm)

    pooled = post_ln_call(h[:, 0, :], params["post_g"], params["post_b"])
    return pooled, h[:, :S, :]


# ----------------------------------------------------------------------------
# Pure-JAX reference (same math, same bf16 matmul inputs, standard softmax)
# ----------------------------------------------------------------------------
def vision_tower_ref(x, params, cfg):
    ps, nH, hd, H = cfg["patch_size"], cfg["num_heads"], cfg["head_dim"], cfg["hidden"]
    bf = jnp.bfloat16
    patches = extract_patches(x, ps).astype(bf)
    B, P, _ = patches.shape
    pe = jnp.einsum("bpc,ch->bph", patches, params["w_patch"],
                    preferred_element_type=jnp.float32)
    cls = jnp.broadcast_to(params["class_emb"][None].astype(jnp.float32),
                           (B, 1, H))
    h = jnp.concatenate([cls, pe], axis=1) + params["pos_emb"][None]
    h = _layernorm(h, params["pre_g"], params["pre_b"])
    S = h.shape[1]
    for lp in params["layers"]:
        r = h
        y = _layernorm(h, lp["g1"], lp["b1"]).astype(bf)
        qkv = (jnp.einsum("bsh,hk->bsk", y, lp["wqkv"],
                          preferred_element_type=jnp.float32)
               + lp["bqkv"]).astype(bf)
        qkv = qkv.reshape(B, S, 3, nH, hd)
        q = qkv[:, :, 0].transpose(0, 2, 1, 3)
        k = qkv[:, :, 1].transpose(0, 2, 1, 3)
        v = qkv[:, :, 2].transpose(0, 2, 1, 3)
        s = jnp.einsum("bhqd,bhkd->bhqk", q, k,
                       preferred_element_type=jnp.float32) * hd ** (-0.5)
        p = jax.nn.softmax(s, axis=-1)
        o = jnp.einsum("bhqk,bhkd->bhqd", p.astype(bf), v,
                       preferred_element_type=jnp.float32).astype(bf)
        o = o.transpose(0, 2, 1, 3).reshape(B, S, H)
        attn = jnp.einsum("bsh,hk->bsk", o, lp["wo"],
                          preferred_element_type=jnp.float32) + lp["bo"]
        h = r + attn
        r = h
        y = _layernorm(h, lp["g2"], lp["b2"]).astype(bf)
        y1 = jnp.einsum("bsh,hm->bsm", y, lp["w1"],
                        preferred_element_type=jnp.float32) + lp["c1"]
        y1 = y1 * jax.nn.sigmoid(1.702 * y1)
        y2 = jnp.einsum("bsm,mh->bsh", y1.astype(bf), lp["w2"],
                        preferred_element_type=jnp.float32) + lp["c2"]
        h = r + y2
    pooled = _layernorm(h[:, 0, :], params["post_g"], params["post_b"])
    return pooled, h


# ----------------------------------------------------------------------------
# Deterministic parameter init (synthetic) + kernel-ready packing (bf16 fused)
# ----------------------------------------------------------------------------
def init_params(key, cfg):
    H, ps, mlp, L = cfg["hidden"], cfg["patch_size"], cfg["mlp_dim"], cfg["num_layers"]
    n_pos = (cfg["image_size"] // ps) ** 2 + 1
    ks = jax.random.split(key, 4 + L)
    std = 0.02

    conv_w = std * jax.random.normal(ks[0], (H, 3, ps, ps), jnp.float32)
    params = {
        "w_patch": conv_w.reshape(H, 3 * ps * ps).T,   # (C*ps*ps, H)
        "class_emb": jax.random.normal(ks[1], (1, H), jnp.float32),
        "pos_emb": std * jax.random.normal(ks[2], (n_pos, H), jnp.float32),
        "pre_g": jnp.ones((1, H), jnp.float32), "pre_b": jnp.zeros((1, H), jnp.float32),
        "post_g": jnp.ones((1, H), jnp.float32), "post_b": jnp.zeros((1, H), jnp.float32),
        "layers": [],
    }
    for li in range(L):
        lk = jax.random.split(ks[4 + li], 6)
        params["layers"].append({
            "wq": std * jax.random.normal(lk[0], (H, H), jnp.float32),
            "bq": jnp.zeros((1, H), jnp.float32),
            "wk": std * jax.random.normal(lk[1], (H, H), jnp.float32),
            "bk": jnp.zeros((1, H), jnp.float32),
            "wv": std * jax.random.normal(lk[2], (H, H), jnp.float32),
            "bv": jnp.zeros((1, H), jnp.float32),
            "wo": std * jax.random.normal(lk[3], (H, H), jnp.float32),
            "bo": jnp.zeros((1, H), jnp.float32),
            "g1": jnp.ones((1, H), jnp.float32), "b1": jnp.zeros((1, H), jnp.float32),
            "g2": jnp.ones((1, H), jnp.float32), "b2": jnp.zeros((1, H), jnp.float32),
            "w1": std * jax.random.normal(lk[4], (H, mlp), jnp.float32),
            "c1": jnp.zeros((1, mlp), jnp.float32),
            "w2": std * jax.random.normal(lk[5], (mlp, H), jnp.float32),
            "c2": jnp.zeros((1, H), jnp.float32),
        })
    return params


def prepare_params(raw):
    bf = jnp.bfloat16
    prep = {
        "w_patch": raw["w_patch"].astype(bf),
        "class_emb": raw["class_emb"],
        "pos_emb": raw["pos_emb"],
        "pre_g": raw["pre_g"], "pre_b": raw["pre_b"],
        "post_g": raw["post_g"], "post_b": raw["post_b"],
        "layers": [],
    }
    for lp in raw["layers"]:
        prep["layers"].append({
            "wqkv": jnp.concatenate([lp["wq"], lp["wk"], lp["wv"]], axis=1).astype(bf),
            "bqkv": jnp.concatenate([lp["bq"], lp["bk"], lp["bv"]], axis=1),
            "wo": lp["wo"].astype(bf), "bo": lp["bo"],
            "g1": lp["g1"], "b1": lp["b1"], "g2": lp["g2"], "b2": lp["b2"],
            "w1": lp["w1"].astype(bf), "c1": lp["c1"],
            "w2": lp["w2"].astype(bf), "c2": lp["c2"],
        })
    return prep


# TODO(synk): text tower, detection heads and host-side image preprocessing of
# OwlV2 are out of scope here; only the VisionTower forward pass is ported.
if __name__ == "__main__":
    cfg = dict(hidden=32, patch_size=4, image_size=16,
               num_layers=2, num_heads=4, mlp_dim=64)
    cfg["head_dim"] = cfg["hidden"] // cfg["num_heads"]

    key = jax.random.PRNGKey(0)
    k_param, k_x = jax.random.split(key)
    params = prepare_params(init_params(k_param, cfg))

    B = 2
    x = jax.random.normal(k_x, (B, 3, cfg["image_size"], cfg["image_size"]),
                          jnp.float32)

    fwd = jax.jit(lambda xx, pp: vision_tower_forward(xx, pp, cfg))
    pooled, seq_out = fwd(x, params)
    jax.block_until_ready((pooled, seq_out))

    pooled_ref, seq_ref = vision_tower_ref(x, params, cfg)

    S = (cfg["image_size"] // cfg["patch_size"]) ** 2 + 1
    assert pooled.shape == (B, cfg["hidden"])
    assert seq_out.shape == (B, S, cfg["hidden"])
    assert bool(jnp.all(jnp.isfinite(seq_out)))
    assert jnp.allclose(pooled, pooled_ref, atol=2e-2, rtol=2e-2)
    assert jnp.allclose(seq_out, seq_ref, atol=2e-2, rtol=2e-2)
    print("KERNEL_OK")
</pallas_src>

<mosaic_0001>
module attributes {stable_mosaic.version = 11 : i64} {
  func.func @flash_kernel(%arg0: i32, %arg1: i32, %arg2: i32, %arg3: memref<1x32x32xbf16, #tpu.memory_space<vmem>>, %arg4: memref<1x32x32xbf16, #tpu.memory_space<vmem>>, %arg5: memref<1x32x32xbf16, #tpu.memory_space<vmem>>, %arg6: memref<1x32x32xbf16, #tpu.memory_space<vmem>>) attributes {dimension_semantics = [#tpu.dimension_semantics<parallel>, #tpu.dimension_semantics<parallel>, #tpu.dimension_semantics<parallel>], iteration_bounds = array<i64: 2, 1, 1>, scalar_prefetch = 0 : i64, scratch_operands = 0 : i64, tpu.core_type = #tpu.core_type<tc>, window_params = [{transform_indices = @transform_0, window_bounds = array<i64: 1, 32, 32>}, {transform_indices = @transform_1, window_bounds = array<i64: 1, 32, 32>}, {transform_indices = @transform_2, window_bounds = array<i64: 1, 32, 32>}, {transform_indices = @transform_3, window_bounds = array<i64: 1, 32, 32>}]} {
    %c0 = arith.constant 0 : index
    %c0_0 = arith.constant 0 : index
    %c0_1 = arith.constant 0 : index
    %0 = vector.load %arg3[%c0, %c0_0, %c0_1] : memref<1x32x32xbf16, #tpu.memory_space<vmem>>, vector<1x32x8xbf16>
    %1 = vector.shape_cast %0 : vector<1x32x8xbf16> to vector<32x8xbf16>
    %c0_2 = arith.constant 0 : index
    %c0_3 = arith.constant 0 : index
    %c8 = arith.constant 8 : index
    %2 = vector.load %arg3[%c0_2, %c0_3, %c8] : memref<1x32x32xbf16, #tpu.memory_space<vmem>>, vector<1x32x8xbf16>
    %3 = vector.shape_cast %2 : vector<1x32x8xbf16> to vector<32x8xbf16>
    %c0_4 = arith.constant 0 : index
    %c0_5 = arith.constant 0 : index
    %c16 = arith.constant 16 : index
    %4 = vector.load %arg3[%c0_4, %c0_5, %c16] : memref<1x32x32xbf16, #tpu.memory_space<vmem>>, vector<1x32x8xbf16>
    %5 = vector.shape_cast %4 : vector<1x32x8xbf16> to vector<32x8xbf16>
    %c0_6 = arith.constant 0 : index
    %c0_7 = arith.constant 0 : index
    %c24 = arith.constant 24 : index
    %6 = vector.load %arg3[%c0_6, %c0_7, %c24] : memref<1x32x32xbf16, #tpu.memory_space<vmem>>, vector<1x32x8xbf16>
    %7 = vector.shape_cast %6 : vector<1x32x8xbf16> to vector<32x8xbf16>
    %cst = arith.constant -1.000000e+30 : f32
    %8 = vector.broadcast %cst : f32 to vector<32x1xf32>
    %cst_8 = arith.constant 0.000000e+00 : f32
    %9 = vector.broadcast %cst_8 : f32 to vector<32x1xf32>
    %cst_9 = arith.constant 0.000000e+00 : f32
    %10 = vector.broadcast %cst_9 : f32 to vector<32x8xf32>
    %cst_10 = arith.constant -1.000000e+30 : f32
    %11 = vector.broadcast %cst_10 : f32 to vector<32x1xf32>
    %cst_11 = arith.constant 0.000000e+00 : f32
    %12 = vector.broadcast %cst_11 : f32 to vector<32x1xf32>
    %cst_12 = arith.constant 0.000000e+00 : f32
    %13 = vector.broadcast %cst_12 : f32 to vector<32x8xf32>
    %cst_13 = arith.constant -1.000000e+30 : f32
    %14 = vector.broadcast %cst_13 : f32 to vector<32x1xf32>
    %cst_14 = arith.constant 0.000000e+00 : f32
    %15 = vector.broadcast %cst_14 : f32 to vector<32x1xf32>
    %cst_15 = arith.constant 0.000000e+00 : f32
    %16 = vector.broadcast %cst_15 : f32 to vector<32x8xf32>
    %cst_16 = arith.constant -1.000000e+30 : f32
    %17 = vector.broadcast %cst_16 : f32 to vector<32x1xf32>
    %cst_17 = arith.constant 0.000000e+00 : f32
    %18 = vector.broadcast %cst_17 : f32 to vector<32x1xf32>
    %cst_18 = arith.constant 0.000000e+00 : f32
    %19 = vector.broadcast %cst_18 : f32 to vector<32x8xf32>
    %c0_19 = arith.constant 0 : index
    %c0_20 = arith.constant 0 : index
    %c0_21 = arith.constant 0 : index
    %20 = vector.load %arg4[%c0_19, %c0_20, %c0_21] : memref<1x32x32xbf16, #tpu.memory_space<vmem>>, vector<1x32x32xbf16>
    %21 = vector.shape_cast %20 : vector<1x32x32xbf16> to vector<32x32xbf16>
    %c0_22 = arith.constant 0 : index
    %c0_23 = arith.constant 0 : index
    %c0_24 = arith.constant 0 : index
    %22 = vector.load %arg5[%c0_22, %c0_23, %c0_24] : memref<1x32x32xbf16, #tpu.memory_space<vmem>>, vector<1x32x32xbf16>
    %23 = vector.shape_cast %22 : vector<1x32x32xbf16> to vector<32x32xbf16>
    %24 = tpu.iota {dimensions = array<i32: 1>} : vector<1x32xi32>
    %c0_i32 = arith.constant 0 : i32
    %25 = vector.broadcast %c0_i32 : i32 to vector<1x32xi32>
    %26 = arith.addi %25, %24 : vector<1x32xi32>
    %c17_i32 = arith.constant 17 : i32
    %27 = vector.broadcast %c17_i32 : i32 to vector<1x32xi32>
    %28 = arith.cmpi slt, %26, %27 : vector<1x32xi32>
    %29 = vector.extract_strided_slice %21 {offsets = [0, 0], sizes = [32, 8], strides = [1, 1]} : vector<32x32xbf16> to vector<32x8xbf16>
    %30 = vector.extract_strided_slice %23 {offsets = [0, 0], sizes = [32, 8], strides = [1, 1]} : vector<32x32xbf16> to vector<32x8xbf16>
    %cst_25 = arith.constant dense<0.000000e+00> : vector<32x32xf32>
    %31 = tpu.matmul %1, %29, %cst_25 {dimension_numbers = #tpu.dot_dimension_numbers<[1], [1], [0], [0], [0, 0, 1, 0], [], []>} : vector<32x8xbf16>, vector<32x8xbf16>, vector<32x32xf32> -> vector<32x32xf32>
    %cst_26 = arith.constant 0.353553385 : f32
    %32 = vector.broadcast %cst_26 : f32 to vector<32x32xf32>
    %33 = arith.mulf %31, %32 : vector<32x32xf32>
    %cst_27 = arith.constant -1.000000e+30 : f32
    %34 = vector.shape_cast %28 : vector<1x32xi1> to vector<1x32xi1>
    %35 = vector.broadcast %34 : vector<1x32xi1> to vector<32x32xi1>
    %36 = vector.broadcast %cst_27 : f32 to vector<32x32xf32>
    %37 = arith.select %35, %33, %36 : vector<32x32xi1>, vector<32x32xf32>
    %cst_28 = arith.constant dense<0xFF800000> : vector<32xf32>
    %38 = vector.multi_reduction <maximumf>, %37, %cst_28 [1] : vector<32x32xf32> to vector<32xf32>
    %39 = vector.shape_cast %38 : vector<32xf32> to vector<32x1xf32>
    %40 = arith.maximumf %8, %39 : vector<32x1xf32>
    %41 = arith.subf %8, %40 : vector<32x1xf32>
    %42 = math.exp %41 : vector<32x1xf32>
    %43 = vector.broadcast %40 : vector<32x1xf32> to vector<32x32xf32>
    %44 = arith.subf %37, %43 : vector<32x32xf32>
    %45 = math.exp %44 : vector<32x32xf32>
    %46 = arith.mulf %42, %9 : vector<32x1xf32>
    %cst_29 = arith.constant dense<0.000000e+00> : vector<32xf32>
    %47 = vector.multi_reduction <add>, %45, %cst_29 [1] : vector<32x32xf32> to vector<32xf32>
    %48 = vector.shape_cast %47 : vector<32xf32> to vector<32x1xf32>
    %49 = arith.addf %46, %48 : vector<32x1xf32>
    %50 = vector.broadcast %42 : vector<32x1xf32> to vector<32x8xf32>
    %51 = arith.mulf %50, %10 : vector<32x8xf32>
    %52 = arith.truncf %45 : vector<32x32xf32> to vector<32x32xbf16>
    %cst_30 = arith.constant dense<0.000000e+00> : vector<32x8xf32>
    %53 = tpu.matmul %52, %30, %cst_30 {dimension_numbers = #tpu.dot_dimension_numbers<[1], [0], [0], [1], [0, 0, 1, 1], [], []>} : vector<32x32xbf16>, vector<32x8xbf16>, vector<32x8xf32> -> vector<32x8xf32>
    %54 = arith.addf %51, %53 : vector<32x8xf32>
    %55 = vector.extract_strided_slice %21 {offsets = [0, 8], sizes = [32, 8], strides = [1, 1]} : vector<32x32xbf16> to vector<32x8xbf16>
    %56 = vector.extract_strided_slice %23 {offsets = [0, 8], sizes = [32, 8], strides = [1, 1]} : vector<32x32xbf16> to vector<32x8xbf16>
    %cst_31 = arith.constant dense<0.000000e+00> : vector<32x32xf32>
    %57 = tpu.matmul %3, %55, %cst_31 {dimension_numbers = #tpu.dot_dimension_numbers<[1], [1], [0], [0], [0, 0, 1, 0], [], []>} : vector<32x8xbf16>, vector<32x8xbf16>, vector<32x32xf32> -> vector<32x32xf32>
    %cst_32 = arith.constant 0.353553385 : f32
    %58 = vector.broadcast %cst_32 : f32 to vector<32x32xf32>
    %59 = arith.mulf %57, %58 : vector<32x32xf32>
    %cst_33 = arith.constant -1.000000e+30 : f32
    %60 = vector.shape_cast %28 : vector<1x32xi1> to vector<1x32xi1>
    %61 = vector.broadcast %60 : vector<1x32xi1> to vector<32x32xi1>
    %62 = vector.broadcast %cst_33 : f32 to vector<32x32xf32>
    %63 = arith.select %61, %59, %62 : vector<32x32xi1>, vector<32x32xf32>
    %cst_34 = arith.constant dense<0xFF800000> : vector<32xf32>
    %64 = vector.multi_reduction <maximumf>, %63, %cst_34 [1] : vector<32x32xf32> to vector<32xf32>
    %65 = vector.shape_cast %64 : vector<32xf32> to vector<32x1xf32>
    %66 = arith.maximumf %11, %65 : vector<32x1xf32>
    %67 = arith.subf %11, %66 : vector<32x1xf32>
    %68 = math.exp %67 : vector<32x1xf32>
    %69 = vector.broadcast %66 : vector<32x1xf32> to vector<32x32xf32>
    %70 = arith.subf %63, %69 : vector<32x32xf32>
    %71 = math.exp %70 : vector<32x32xf32>
    %72 = arith.mulf %68, %12 : vector<32x1xf32>
    %cst_35 = arith.constant dense<0.000000e+00> : vector<32xf32>
    %73 = vector.multi_reduction <add>, %71, %cst_35 [1] : vector<32x32xf32> to vector<32xf32>
    %74 = vector.shape_cast %73 : vector<32xf32> to vector<32x1xf32>
    %75 = arith.addf %72, %74 : vector<32x1xf32>
    %76 = vector.broadcast %68 : vector<32x1xf32> to vector<32x8xf32>
    %77 = arith.mulf %76, %13 : vector<32x8xf32>
    %78 = arith.truncf %71 : vector<32x32xf32> to vector<32x32xbf16>
    %cst_36 = arith.constant dense<0.000000e+00> : vector<32x8xf32>
    %79 = tpu.matmul %78, %56, %cst_36 {dimension_numbers = #tpu.dot_dimension_numbers<[1], [0], [0], [1], [0, 0, 1, 1], [], []>} : vector<32x32xbf16>, vector<32x8xbf16>, vector<32x8xf32> -> vector<32x8xf32>
    %80 = arith.addf %77, %79 : vector<32x8xf32>
    %81 = vector.extract_strided_slice %21 {offsets = [0, 16], sizes = [32, 8], strides = [1, 1]} : vector<32x32xbf16> to vector<32x8xbf16>
    %82 = vector.extract_strided_slice %23 {offsets = [0, 16], sizes = [32, 8], strides = [1, 1]} : vector<32x32xbf16> to vector<32x8xbf16>
    %cst_37 = arith.constant dense<0.000000e+00> : vector<32x32xf32>
    %83 = tpu.matmul %5, %81, %cst_37 {dimension_numbers = #tpu.dot_dimension_numbers<[1], [1], [0], [0], [0, 0, 1, 0], [], []>} : vector<32x8xbf16>, vector<32x8xbf16>, vector<32x32xf32> -> vector<32x32xf32>
    %cst_38 = arith.constant 0.353553385 : f32
    %84 = vector.broadcast %cst_38 : f32 to vector<32x32xf32>
    %85 = arith.mulf %83, %84 : vector<32x32xf32>
    %cst_39 = arith.constant -1.000000e+30 : f32
    %86 = vector.shape_cast %28 : vector<1x32xi1> to vector<1x32xi1>
    %87 = vector.broadcast %86 : vector<1x32xi1> to vector<32x32xi1>
    %88 = vector.broadcast %cst_39 : f32 to vector<32x32xf32>
    %89 = arith.select %87, %85, %88 : vector<32x32xi1>, vector<32x32xf32>
    %cst_40 = arith.constant dense<0xFF800000> : vector<32xf32>
    %90 = vector.multi_reduction <maximumf>, %89, %cst_40 [1] : vector<32x32xf32> to vector<32xf32>
    %91 = vector.shape_cast %90 : vector<32xf32> to vector<32x1xf32>
    %92 = arith.maximumf %14, %91 : vector<32x1xf32>
    %93 = arith.subf %14, %92 : vector<32x1xf32>
    %94 = math.exp %93 : vector<32x1xf32>
    %95 = vector.broadcast %92 : vector<32x1xf32> to vector<32x32xf32>
    %96 = arith.subf %89, %95 : vector<32x32xf32>
    %97 = math.exp %96 : vector<32x32xf32>
    %98 = arith.mulf %94, %15 : vector<32x1xf32>
    %cst_41 = arith.constant dense<0.000000e+00> : vector<32xf32>
    %99 = vector.multi_reduction <add>, %97, %cst_41 [1] : vector<32x32xf32> to vector<32xf32>
    %100 = vector.shape_cast %99 : vector<32xf32> to vector<32x1xf32>
    %101 = arith.addf %98, %100 : vector<32x1xf32>
    %102 = vector.broadcast %94 : vector<32x1xf32> to vector<32x8xf32>
    %103 = arith.mulf %102, %16 : vector<32x8xf32>
    %104 = arith.truncf %97 : vector<32x32xf32> to vector<32x32xbf16>
    %cst_42 = arith.constant dense<0.000000e+00> : vector<32x8xf32>
    %105 = tpu.matmul %104, %82, %cst_42 {dimension_numbers = #tpu.dot_dimension_numbers<[1], [0], [0], [1], [0, 0, 1, 1], [], []>} : vector<32x32xbf16>, vector<32x8xbf16>, vector<32x8xf32> -> vector<32x8xf32>
    %106 = arith.addf %103, %105 : vector<32x8xf32>
    %107 = vector.extract_strided_slice %21 {offsets = [0, 24], sizes = [32, 8], strides = [1, 1]} : vector<32x32xbf16> to vector<32x8xbf16>
    %108 = vector.extract_strided_slice %23 {offsets = [0, 24], sizes = [32, 8], strides = [1, 1]} : vector<32x32xbf16> to vector<32x8xbf16>
    %cst_43 = arith.constant dense<0.000000e+00> : vector<32x32xf32>
    %109 = tpu.matmul %7, %107, %cst_43 {dimension_numbers = #tpu.dot_dimension_numbers<[1], [1], [0], [0], [0, 0, 1, 0], [], []>} : vector<32x8xbf16>, vector<32x8xbf16>, vector<32x32xf32> -> vector<32x32xf32>
    %cst_44 = arith.constant 0.353553385 : f32
    %110 = vector.broadcast %cst_44 : f32 to vector<32x32xf32>
    %111 = arith.mulf %109, %110 : vector<32x32xf32>
    %cst_45 = arith.constant -1.000000e+30 : f32
    %112 = vector.shape_cast %28 : vector<1x32xi1> to vector<1x32xi1>
    %113 = vector.broadcast %112 : vector<1x32xi1> to vector<32x32xi1>
    %114 = vector.broadcast %cst_45 : f32 to vector<32x32xf32>
    %115 = arith.select %113, %111, %114 : vector<32x32xi1>, vector<32x32xf32>
    %cst_46 = arith.constant dense<0xFF800000> : vector<32xf32>
    %116 = vector.multi_reduction <maximumf>, %115, %cst_46 [1] : vector<32x32xf32> to vector<32xf32>
    %117 = vector.shape_cast %116 : vector<32xf32> to vector<32x1xf32>
    %118 = arith.maximumf %17, %117 : vector<32x1xf32>
    %119 = arith.subf %17, %118 : vector<32x1xf32>
    %120 = math.exp %119 : vector<32x1xf32>
    %121 = vector.broadcast %118 : vector<32x1xf32> to vector<32x32xf32>
    %122 = arith.subf %115, %121 : vector<32x32xf32>
    %123 = math.exp %122 : vector<32x32xf32>
    %124 = arith.mulf %120, %18 : vector<32x1xf32>
    %cst_47 = arith.constant dense<0.000000e+00> : vector<32xf32>
    %125 = vector.multi_reduction <add>, %123, %cst_47 [1] : vector<32x32xf32> to vector<32xf32>
    %126 = vector.shape_cast %125 : vector<32xf32> to vector<32x1xf32>
    %127 = arith.addf %124, %126 : vector<32x1xf32>
    %128 = vector.broadcast %120 : vector<32x1xf32> to vector<32x8xf32>
    %129 = arith.mulf %128, %19 : vector<32x8xf32>
    %130 = arith.truncf %123 : vector<32x32xf32> to vector<32x32xbf16>
    %cst_48 = arith.constant dense<0.000000e+00> : vector<32x8xf32>
    %131 = tpu.matmul %130, %108, %cst_48 {dimension_numbers = #tpu.dot_dimension_numbers<[1], [0], [0], [1], [0, 0, 1, 1], [], []>} : vector<32x32xbf16>, vector<32x8xbf16>, vector<32x8xf32> -> vector<32x8xf32>
    %132 = arith.addf %129, %131 : vector<32x8xf32>
    %133 = tpu.reciprocal %49 {approx = true} : vector<32x1xf32> -> vector<32x1xf32>
    %134 = vector.broadcast %133 : vector<32x1xf32> to vector<32x8xf32>
    %135 = arith.mulf %54, %134 : vector<32x8xf32>
    %136 = tpu.reciprocal %75 {approx = true} : vector<32x1xf32> -> vector<32x1xf32>
    %137 = vector.broadcast %136 : vector<32x1xf32> to vector<32x8xf32>
    %138 = arith.mulf %80, %137 : vector<32x8xf32>
    %139 = tpu.reciprocal %101 {approx = true} : vector<32x1xf32> -> vector<32x1xf32>
    %140 = vector.broadcast %139 : vector<32x1xf32> to vector<32x8xf32>
    %141 = arith.mulf %106, %140 : vector<32x8xf32>
    %142 = tpu.reciprocal %127 {approx = true} : vector<32x1xf32> -> vector<32x1xf32>
    %143 = vector.broadcast %142 : vector<32x1xf32> to vector<32x8xf32>
    %144 = arith.mulf %132, %143 : vector<32x8xf32>
    %145 = tpu.concatenate %135, %138, %141, %144 in 1 : vector<32x8xf32>, vector<32x8xf32>, vector<32x8xf32>, vector<32x8xf32> -> vector<32x32xf32>
    %146 = arith.truncf %145 : vector<32x32xf32> to vector<32x32xbf16>
    %c0_49 = arith.constant 0 : index
    %c0_50 = arith.constant 0 : index
    %c0_51 = arith.constant 0 : index
    %147 = vector.load %arg6[%c0_49, %c0_50, %c0_51] : memref<1x32x32xbf16, #tpu.memory_space<vmem>>, vector<1x32x32xbf16>
    %148 = vector.shape_cast %147 : vector<1x32x32xbf16> to vector<32x32xbf16>
    %149 = vector.shape_cast %146 : vector<32x32xbf16> to vector<1x32x32xbf16>
    tpu.vector_store %arg6[%c0_49, %c0_50, %c0_51], %149 {strides = array<i32>} : memref<1x32x32xbf16, #tpu.memory_space<vmem>>, vector<1x32x32xbf16>,
    return
  }
  func.func @transform_0(%arg0: i32, %arg1: i32, %arg2: i32) -> (i32, i32, i32) {
    %c0_i32 = arith.constant 0 : i32
    return %arg0, %arg2, %arg1 : i32, i32, i32
  }
  func.func @transform_1(%arg0: i32, %arg1: i32, %arg2: i32) -> (i32, i32, i32) {
    %c0_i32 = arith.constant 0 : i32
    %c0_i32_0 = arith.constant 0 : i32
    return %arg0, %c0_i32, %arg1 : i32, i32, i32
  }
  func.func @transform_2(%arg0: i32, %arg1: i32, %arg2: i32) -> (i32, i32, i32) {
    %c0_i32 = arith.constant 0 : i32
    %c0_i32_0 = arith.constant 0 : i32
    return %arg0, %c0_i32, %arg1 : i32, i32, i32
  }
  func.func @transform_3(%arg0: i32, %arg1: i32, %arg2: i32) -> (i32, i32, i32) {
    %c0_i32 = arith.constant 0 : i32
    return %arg0, %arg2, %arg1 : i32, i32, i32
  }
}

module attributes {stable_mosaic.version = 11 : i64} {
  func.func @embed_kernel(%arg0: i32, %arg1: i32, %arg2: memref<1x32x48xbf16, #tpu.memory_space<vmem>>, %arg3: memref<48x32xbf16, #tpu.memory_space<vmem>>, %arg4: memref<1x32xf32, #tpu.memory_space<vmem>>, %arg5: memref<32x32xf32, #tpu.memory_space<vmem>>, %arg6: memref<1x32xf32, #tpu.memory_space<vmem>>, %arg7: memref<1x32xf32, #tpu.memory_space<vmem>>, %arg8: memref<1x32x32xf32, #tpu.memory_space<vmem>>) attributes {dimension_semantics = [#tpu.dimension_semantics<parallel>, #tpu.dimension_semantics<parallel>], iteration_bounds = array<i64: 2, 1>, scalar_prefetch = 0 : i64, scratch_operands = 0 : i64, tpu.core_type = #tpu.core_type<tc>, window_params = [{transform_indices = @transform_0, window_bounds = array<i64: 1, 32, 48>}, {pipeline_mode = #tpu.pipeline_mode<synchronous>, transform_indices = @transform_1, window_bounds = array<i64: 48, 32>}, {pipeline_mode = #tpu.pipeline_mode<synchronous>, transform_indices = @transform_2, window_bounds = array<i64: 1, 32>}, {transform_indices = @transform_3, window_bounds = array<i64: 32, 32>}, {pipeline_mode = #tpu.pipeline_mode<synchronous>, transform_indices = @transform_4, window_bounds = array<i64: 1, 32>}, {pipeline_mode = #tpu.pipeline_mode<synchronous>, transform_indices = @transform_5, window_bounds = array<i64: 1, 32>}, {transform_indices = @transform_6, window_bounds = array<i64: 1, 32, 32>}]} {
    %c0 = arith.constant 0 : index
    %c0_0 = arith.constant 0 : index
    %c0_1 = arith.constant 0 : index
    %0 = vector.load %arg2[%c0, %c0_0, %c0_1] : memref<1x32x48xbf16, #tpu.memory_space<vmem>>, vector<1x32x48xbf16>
    %1 = vector.shape_cast %0 : vector<1x32x48xbf16> to vector<32x48xbf16>
    %c0_2 = arith.constant 0 : index
    %c0_3 = arith.constant 0 : index
    %2 = vector.load %arg3[%c0_2, %c0_3] : memref<48x32xbf16, #tpu.memory_space<vmem>>, vector<48x32xbf16>
    %cst = arith.constant dense<0.000000e+00> : vector<32x32xf32>
    %3 = tpu.matmul %1, %2, %cst {dimension_numbers = #tpu.dot_dimension_numbers<[1], [0], [0], [1], [0, 0, 1, 1], [], []>} : vector<32x48xbf16>, vector<48x32xbf16>, vector<32x32xf32> -> vector<32x32xf32>
    %c0_4 = arith.constant 0 : index
    %c0_5 = arith.constant 0 : index
    %4 = vector.load %arg5[%c0_4, %c0_5] : memref<32x32xf32, #tpu.memory_space<vmem>>, vector<32x32xf32>
    %5 = arith.addf %3, %4 : vector<32x32xf32>
    %c0_6 = arith.constant 0 : index
    %c0_7 = arith.constant 0 : index
    %6 = vector.load %arg6[%c0_6, %c0_7] : memref<1x32xf32, #tpu.memory_space<vmem>>, vector<1x32xf32>
    %c0_8 = arith.constant 0 : index
    %c0_9 = arith.constant 0 : index
    %7 = vector.load %arg7[%c0_8, %c0_9] : memref<1x32xf32, #tpu.memory_space<vmem>>, vector<1x32xf32>
    %cst_10 = arith.constant dense<0.000000e+00> : vector<32xf32>
    %8 = vector.multi_reduction <add>, %5, %cst_10 [1] : vector<32x32xf32> to vector<32xf32>
    %9 = vector.shape_cast %8 : vector<32xf32> to vector<32x1xf32>
    %cst_11 = arith.constant 3.200000e+01 : f32
    %10 = vector.broadcast %cst_11 : f32 to vector<32x1xf32>
    %11 = arith.divf %9, %10 : vector<32x1xf32>
    %12 = vector.broadcast %11 : vector<32x1xf32> to vector<32x32xf32>
    %13 = arith.subf %5, %12 : vector<32x32xf32>
    %14 = arith.mulf %13, %13 : vector<32x32xf32>
    %cst_12 = arith.constant dense<0.000000e+00> : vector<32xf32>
    %15 = vector.multi_reduction <add>, %14, %cst_12 [1] : vector<32x32xf32> to vector<32xf32>
    %16 = vector.shape_cast %15 : vector<32xf32> to vector<32x1xf32>
    %cst_13 = arith.constant 3.200000e+01 : f32
    %17 = vector.broadcast %cst_13 : f32 to vector<32x1xf32>
    %18 = arith.divf %16, %17 : vector<32x1xf32>
    %19 = vector.broadcast %11 : vector<32x1xf32> to vector<32x32xf32>
    %20 = arith.subf %5, %19 : vector<32x32xf32>
    %cst_14 = arith.constant 9.99999974E-6 : f32
    %21 = vector.broadcast %cst_14 : f32 to vector<32x1xf32>
    %22 = arith.addf %18, %21 : vector<32x1xf32>
    %23 = math.rsqrt %22 : vector<32x1xf32>
    %24 = vector.broadcast %23 : vector<32x1xf32> to vector<32x32xf32>
    %25 = arith.mulf %20, %24 : vector<32x32xf32>
    %26 = vector.broadcast %6 : vector<1x32xf32> to vector<32x32xf32>
    %27 = arith.mulf %25, %26 : vector<32x32xf32>
    %28 = vector.broadcast %7 : vector<1x32xf32> to vector<32x32xf32>
    %29 = arith.addf %27, %28 : vector<32x32xf32>
    %c0_15 = arith.constant 0 : index
    %c0_16 = arith.constant 0 : index
    %c0_17 = arith.constant 0 : index
    %30 = vector.load %arg8[%c0_15, %c0_16, %c0_17] : memref<1x32x32xf32, #tpu.memory_space<vmem>>, vector<1x32x32xf32>
    %31 = vector.shape_cast %30 : vector<1x32x32xf32> to vector<32x32xf32>
    %32 = vector.shape_cast %29 : vector<32x32xf32> to vector<1x32x32xf32>
    tpu.vector_store %arg8[%c0_15, %c0_16, %c0_17], %32 {strides = array<i32>} : memref<1x32x32xf32, #tpu.memory_space<vmem>>, vector<1x32x32xf32>,
    %c0_i32 = arith.constant 0 : i32
    %33 = arith.cmpi eq, %arg1, %c0_i32 : i32
    %34 = arith.extui %33 : i1 to i32
    %c0_i32_18 = arith.constant 0 : i32
    %35 = arith.cmpi ne, %34, %c0_i32_18 : i32
    scf.if %35 {
      %c0_19 = arith.constant 0 : index
      %c0_20 = arith.constant 0 : index
      %36 = vector.load %arg4[%c0_19, %c0_20] : memref<1x32xf32, #tpu.memory_space<vmem>>, vector<1x32xf32>
      %c0_21 = arith.constant 0 : index
      %c0_22 = arith.constant 0 : index
      %37 = vector.load %arg5[%c0_21, %c0_22] : memref<32x32xf32, #tpu.memory_space<vmem>>, vector<1x32xf32>
      %38 = arith.addf %36, %37 : vector<1x32xf32>
      %c0_23 = arith.constant 0 : index
      %c0_24 = arith.constant 0 : index
      %39 = vector.load %arg6[%c0_23, %c0_24] : memref<1x32xf32, #tpu.memory_space<vmem>>, vector<1x32xf32>
      %c0_25 = arith.constant 0 : index
      %c0_26 = arith.constant 0 : index
      %40 = vector.load %arg7[%c0_25, %c0_26] : memref<1x32xf32, #tpu.memory_space<vmem>>, vector<1x32xf32>
      %cst_27 = arith.constant dense<0.000000e+00> : vector<1xf32>
      %41 = vector.multi_reduction <add>, %38, %cst_27 [1] : vector<1x32xf32> to vector<1xf32>
      %42 = vector.shape_cast %41 : vector<1xf32> to vector<1x1xf32>
      %cst_28 = arith.constant 3.200000e+01 : f32
      %43 = vector.broadcast %cst_28 : f32 to vector<1x1xf32>
      %44 = arith.divf %42, %43 : vector<1x1xf32>
      %45 = vector.broadcast %44 : vector<1x1xf32> to vector<1x32xf32>
      %46 = arith.subf %38, %45 : vector<1x32xf32>
      %47 = arith.mulf %46, %46 : vector<1x32xf32>
      %cst_29 = arith.constant dense<0.000000e+00> : vector<1xf32>
      %48 = vector.multi_reduction <add>, %47, %cst_29 [1] : vector<1x32xf32> to vector<1xf32>
      %49 = vector.shape_cast %48 : vector<1xf32> to vector<1x1xf32>
      %cst_30 = arith.constant 3.200000e+01 : f32
      %50 = vector.broadcast %cst_30 : f32 to vector<1x1xf32>
      %51 = arith.divf %49, %50 : vector<1x1xf32>
      %52 = vector.broadcast %44 : vector<1x1xf32> to vector<1x32xf32>
      %53 = arith.subf %38, %52 : vector<1x32xf32>
      %cst_31 = arith.constant 9.99999974E-6 : f32
      %54 = vector.broadcast %cst_31 : f32 to vector<1x1xf32>
      %55 = arith.addf %51, %54 : vector<1x1xf32>
      %56 = math.rsqrt %55 : vector<1x1xf32>
      %57 = vector.broadcast %56 : vector<1x1xf32> to vector<1x32xf32>
      %58 = arith.mulf %53, %57 : vector<1x32xf32>
      %59 = arith.mulf %58, %39 : vector<1x32xf32>
      %60 = arith.addf %59, %40 : vector<1x32xf32>
      %c0_32 = arith.constant 0 : index
      %c0_33 = arith.constant 0 : index
      %c0_34 = arith.constant 0 : index
      %61 = vector.load %arg8[%c0_32, %c0_33, %c0_34] : memref<1x32x32xf32, #tpu.memory_space<vmem>>, vector<1x1x32xf32>
      %62 = vector.shape_cast %61 : vector<1x1x32xf32> to vector<1x32xf32>
      %63 = vector.shape_cast %60 : vector<1x32xf32> to vector<1x1x32xf32>
      tpu.vector_store %arg8[%c0_32, %c0_33, %c0_34], %63 {strides = array<i32>} : memref<1x32x32xf32, #tpu.memory_space<vmem>>, vector<1x1x32xf32>,
    } else {
    }
    return
  }
  func.func @transform_0(%arg0: i32, %arg1: i32) -> (i32, i32, i32) {
    %c0_i32 = arith.constant 0 : i32
    %c0_i32_0 = arith.constant 0 : i32
    return %arg0, %arg1, %c0_i32 : i32, i32, i32
  }
  func.func @transform_1(%arg0: i32, %arg1: i32) -> (i32, i32) {
    %c0_i32 = arith.constant 0 : i32
    %c0_i32_0 = arith.constant 0 : i32
    %c0_i32_1 = arith.constant 0 : i32
    return %c0_i32, %c0_i32_0 : i32, i32
  }
  func.func @transform_2(%arg0: i32, %arg1: i32) -> (i32, i32) {
    %c0_i32 = arith.constant 0 : i32
    %c0_i32_0 = arith.constant 0 : i32
    %c0_i32_1 = arith.constant 0 : i32
    return %c0_i32, %c0_i32_0 : i32, i32
  }
  func.func @transform_3(%arg0: i32, %arg1: i32) -> (i32, i32) {
    %c0_i32 = arith.constant 0 : i32
    %c0_i32_0 = arith.constant 0 : i32
    return %arg1, %c0_i32 : i32, i32
  }
  func.func @transform_4(%arg0: i32, %arg1: i32) -> (i32, i32) {
    %c0_i32 = arith.constant 0 : i32
    %c0_i32_0 = arith.constant 0 : i32
    %c0_i32_1 = arith.constant 0 : i32
    return %c0_i32, %c0_i32_0 : i32, i32
  }
  func.func @transform_5(%arg0: i32, %arg1: i32) -> (i32, i32) {
    %c0_i32 = arith.constant 0 : i32
    %c0_i32_0 = arith.constant 0 : i32
    %c0_i32_1 = arith.constant 0 : i32
    return %c0_i32, %c0_i32_0 : i32, i32
  }
  func.func @transform_6(%arg0: i32, %arg1: i32) -> (i32, i32, i32) {
    %c0_i32 = arith.constant 0 : i32
    %c0_i32_0 = arith.constant 0 : i32
    return %arg0, %arg1, %c0_i32 : i32, i32, i32
  }
}

module attributes {stable_mosaic.version = 11 : i64} {
  func.func @ln_qkv_kernel(%arg0: i32, %arg1: i32, %arg2: memref<1x32x32xf32, #tpu.memory_space<vmem>>, %arg3: memref<1x32xf32, #tpu.memory_space<vmem>>, %arg4: memref<1x32xf32, #tpu.memory_space<vmem>>, %arg5: memref<32x96xbf16, #tpu.memory_space<vmem>>, %arg6: memref<1x96xf32, #tpu.memory_space<vmem>>, %arg7: memref<1x32x32xbf16, #tpu.memory_space<vmem>>, %arg8: memref<1x32x32xbf16, #tpu.memory_space<vmem>>, %arg9: memref<1x32x32xbf16, #tpu.memory_space<vmem>>) attributes {dimension_semantics = [#tpu.dimension_semantics<parallel>, #tpu.dimension_semantics<parallel>], iteration_bounds = array<i64: 2, 1>, scalar_prefetch = 0 : i64, scratch_operands = 0 : i64, tpu.core_type = #tpu.core_type<tc>, window_params = [{transform_indices = @transform_0, window_bounds = array<i64: 1, 32, 32>}, {pipeline_mode = #tpu.pipeline_mode<synchronous>, transform_indices = @transform_1, window_bounds = array<i64: 1, 32>}, {pipeline_mode = #tpu.pipeline_mode<synchronous>, transform_indices = @transform_2, window_bounds = array<i64: 1, 32>}, {pipeline_mode = #tpu.pipeline_mode<synchronous>, transform_indices = @transform_3, window_bounds = array<i64: 32, 96>}, {pipeline_mode = #tpu.pipeline_mode<synchronous>, transform_indices = @transform_4, window_bounds = array<i64: 1, 96>}, {transform_indices = @transform_5, window_bounds = array<i64: 1, 32, 32>}, {transform_indices = @transform_6, window_bounds = array<i64: 1, 32, 32>}, {transform_indices = @transform_7, window_bounds = array<i64: 1, 32, 32>}]} {
    %c0 = arith.constant 0 : index
    %c0_0 = arith.constant 0 : index
    %c0_1 = arith.constant 0 : index
    %0 = vector.load %arg2[%c0, %c0_0, %c0_1] : memref<1x32x32xf32, #tpu.memory_space<vmem>>, vector<1x32x32xf32>
    %1 = vector.shape_cast %0 : vector<1x32x32xf32> to vector<32x32xf32>
    %c0_2 = arith.constant 0 : index
    %c0_3 = arith.constant 0 : index
    %2 = vector.load %arg3[%c0_2, %c0_3] : memref<1x32xf32, #tpu.memory_space<vmem>>, vector<1x32xf32>
    %c0_4 = arith.constant 0 : index
    %c0_5 = arith.constant 0 : index
    %3 = vector.load %arg4[%c0_4, %c0_5] : memref<1x32xf32, #tpu.memory_space<vmem>>, vector<1x32xf32>
    %cst = arith.constant dense<0.000000e+00> : vector<32xf32>
    %4 = vector.multi_reduction <add>, %1, %cst [1] : vector<32x32xf32> to vector<32xf32>
    %5 = vector.shape_cast %4 : vector<32xf32> to vector<32x1xf32>
    %cst_6 = arith.constant 3.200000e+01 : f32
    %6 = vector.broadcast %cst_6 : f32 to vector<32x1xf32>
    %7 = arith.divf %5, %6 : vector<32x1xf32>
    %8 = vector.broadcast %7 : vector<32x1xf32> to vector<32x32xf32>
    %9 = arith.subf %1, %8 : vector<32x32xf32>
    %10 = arith.mulf %9, %9 : vector<32x32xf32>
    %cst_7 = arith.constant dense<0.000000e+00> : vector<32xf32>
    %11 = vector.multi_reduction <add>, %10, %cst_7 [1] : vector<32x32xf32> to vector<32xf32>
    %12 = vector.shape_cast %11 : vector<32xf32> to vector<32x1xf32>
    %cst_8 = arith.constant 3.200000e+01 : f32
    %13 = vector.broadcast %cst_8 : f32 to vector<32x1xf32>
    %14 = arith.divf %12, %13 : vector<32x1xf32>
    %15 = vector.broadcast %7 : vector<32x1xf32> to vector<32x32xf32>
    %16 = arith.subf %1, %15 : vector<32x32xf32>
    %cst_9 = arith.constant 9.99999974E-6 : f32
    %17 = vector.broadcast %cst_9 : f32 to vector<32x1xf32>
    %18 = arith.addf %14, %17 : vector<32x1xf32>
    %19 = math.rsqrt %18 : vector<32x1xf32>
    %20 = vector.broadcast %19 : vector<32x1xf32> to vector<32x32xf32>
    %21 = arith.mulf %16, %20 : vector<32x32xf32>
    %22 = vector.broadcast %2 : vector<1x32xf32> to vector<32x32xf32>
    %23 = arith.mulf %21, %22 : vector<32x32xf32>
    %24 = vector.broadcast %3 : vector<1x32xf32> to vector<32x32xf32>
    %25 = arith.addf %23, %24 : vector<32x32xf32>
    %26 = arith.truncf %25 : vector<32x32xf32> to vector<32x32xbf16>
    %c0_10 = arith.constant 0 : index
    %c0_11 = arith.constant 0 : index
    %27 = vector.load %arg5[%c0_10, %c0_11] : memref<32x96xbf16, #tpu.memory_space<vmem>>, vector<32x96xbf16>
    %cst_12 = arith.constant dense<0.000000e+00> : vector<32x96xf32>
    %28 = tpu.matmul %26, %27, %cst_12 {dimension_numbers = #tpu.dot_dimension_numbers<[1], [0], [0], [1], [0, 0, 1, 1], [], []>} : vector<32x32xbf16>, vector<32x96xbf16>, vector<32x96xf32> -> vector<32x96xf32>
    %c0_13 = arith.constant 0 : index
    %c0_14 = arith.constant 0 : index
    %29 = vector.load %arg6[%c0_13, %c0_14] : memref<1x96xf32, #tpu.memory_space<vmem>>, vector<1x96xf32>
    %30 = vector.broadcast %29 : vector<1x96xf32> to vector<32x96xf32>
    %31 = arith.addf %28, %30 : vector<32x96xf32>
    %32 = arith.truncf %31 : vector<32x96xf32> to vector<32x96xbf16>
    %33 = vector.extract_strided_slice %32 {offsets = [0, 0], sizes = [32, 32], strides = [1, 1]} : vector<32x96xbf16> to vector<32x32xbf16>
    %c0_15 = arith.constant 0 : index
    %c0_16 = arith.constant 0 : index
    %c0_17 = arith.constant 0 : index
    %34 = vector.load %arg7[%c0_15, %c0_16, %c0_17] : memref<1x32x32xbf16, #tpu.memory_space<vmem>>, vector<1x32x32xbf16>
    %35 = vector.shape_cast %34 : vector<1x32x32xbf16> to vector<32x32xbf16>
    %36 = vector.shape_cast %33 : vector<32x32xbf16> to vector<1x32x32xbf16>
    tpu.vector_store %arg7[%c0_15, %c0_16, %c0_17], %36 {strides = array<i32>} : memref<1x32x32xbf16, #tpu.memory_space<vmem>>, vector<1x32x32xbf16>,
    %37 = vector.extract_strided_slice %32 {offsets = [0, 32], sizes = [32, 32], strides = [1, 1]} : vector<32x96xbf16> to vector<32x32xbf16>
    %c0_18 = arith.constant 0 : index
    %c0_19 = arith.constant 0 : index
    %c0_20 = arith.constant 0 : index
    %38 = vector.load %arg8[%c0_18, %c0_19, %c0_20] : memref<1x32x32xbf16, #tpu.memory_space<vmem>>, vector<1x32x32xbf16>
    %39 = vector.shape_cast %38 : vector<1x32x32xbf16> to vector<32x32xbf16>
    %40 = vector.shape_cast %37 : vector<32x32xbf16> to vector<1x32x32xbf16>
    tpu.vector_store %arg8[%c0_18, %c0_19, %c0_20], %40 {strides = array<i32>} : memref<1x32x32xbf16, #tpu.memory_space<vmem>>, vector<1x32x32xbf16>,
    %41 = vector.extract_strided_slice %32 {offsets = [0, 64], sizes = [32, 32], strides = [1, 1]} : vector<32x96xbf16> to vector<32x32xbf16>
    %c0_21 = arith.constant 0 : index
    %c0_22 = arith.constant 0 : index
    %c0_23 = arith.constant 0 : index
    %42 = vector.load %arg9[%c0_21, %c0_22, %c0_23] : memref<1x32x32xbf16, #tpu.memory_space<vmem>>, vector<1x32x32xbf16>
    %43 = vector.shape_cast %42 : vector<1x32x32xbf16> to vector<32x32xbf16>
    %44 = vector.shape_cast %41 : vector<32x32xbf16> to vector<1x32x32xbf16>
    tpu.vector_store %arg9[%c0_21, %c0_22, %c0_23], %44 {strides = array<i32>} : memref<1x32x32xbf16, #tpu.memory_space<vmem>>, vector<1x32x32xbf16>,
    return
  }
  func.func @transform_0(%arg0: i32, %arg1: i32) -> (i32, i32, i32) {
    %c0_i32 = arith.constant 0 : i32
    %c0_i32_0 = arith.constant 0 : i32
    return %arg0, %arg1, %c0_i32 : i32, i32, i32
  }
  func.func @transform_1(%arg0: i32, %arg1: i32) -> (i32, i32) {
    %c0_i32 = arith.constant 0 : i32
    %c0_i32_0 = arith.constant 0 : i32
    %c0_i32_1 = arith.constant 0 : i32
    return %c0_i32, %c0_i32_0 : i32, i32
  }
  func.func @transform_2(%arg0: i32, %arg1: i32) -> (i32, i32) {
    %c0_i32 = arith.constant 0 : i32
    %c0_i32_0 = arith.constant 0 : i32
    %c0_i32_1 = arith.constant 0 : i32
    return %c0_i32, %c0_i32_0 : i32, i32
  }
  func.func @transform_3(%arg0: i32, %arg1: i32) -> (i32, i32) {
    %c0_i32 = arith.constant 0 : i32
    %c0_i32_0 = arith.constant 0 : i32
    %c0_i32_1 = arith.constant 0 : i32
    return %c0_i32, %c0_i32_0 : i32, i32
  }
  func.func @transform_4(%arg0: i32, %arg1: i32) -> (i32, i32) {
    %c0_i32 = arith.constant 0 : i32
    %c0_i32_0 = arith.constant 0 : i32
    %c0_i32_1 = arith.constant 0 : i32
    return %c0_i32, %c0_i32_0 : i32, i32
  }
  func.func @transform_5(%arg0: i32, %arg1: i32) -> (i32, i32, i32) {
    %c0_i32 = arith.constant 0 : i32
    %c0_i32_0 = arith.constant 0 : i32
    return %arg0, %arg1, %c0_i32 : i32, i32, i32
  }
  func.func @transform_6(%arg0: i32, %arg1: i32) -> (i32, i32, i32) {
    %c0_i32 = arith.constant 0 : i32
    %c0_i32_0 = arith.constant 0 : i32
    return %arg0, %arg1, %c0_i32 : i32, i32, i32
  }
  func.func @transform_7(%arg0: i32, %arg1: i32) -> (i32, i32, i32) {
    %c0_i32 = arith.constant 0 : i32
    %c0_i32_0 = arith.constant 0 : i32
    return %arg0, %arg1, %c0_i32 : i32, i32, i32
  }
}

module attributes {stable_mosaic.version = 11 : i64} {
  func.func @attn_out_mlp_kernel(%arg0: i32, %arg1: i32, %arg2: memref<1x32x32xf32, #tpu.memory_space<vmem>>, %arg3: memref<1x32x32xbf16, #tpu.memory_space<vmem>>, %arg4: memref<32x32xbf16, #tpu.memory_space<vmem>>, %arg5: memref<1x32xf32, #tpu.memory_space<vmem>>, %arg6: memref<1x32xf32, #tpu.memory_space<vmem>>, %arg7: memref<1x32xf32, #tpu.memory_space<vmem>>, %arg8: memref<32x64xbf16, #tpu.memory_space<vmem>>, %arg9: memref<1x64xf32, #tpu.memory_space<vmem>>, %arg10: memref<64x32xbf16, #tpu.memory_space<vmem>>, %arg11: memref<1x32xf32, #tpu.memory_space<vmem>>, %arg12: memref<1x32x32xf32, #tpu.memory_space<vmem>>) attributes {dimension_semantics = [#tpu.dimension_semantics<parallel>, #tpu.dimension_semantics<parallel>], iteration_bounds = array<i64: 2, 1>, scalar_prefetch = 0 : i64, scratch_operands = 0 : i64, tpu.core_type = #tpu.core_type<tc>, window_params = [{transform_indices = @transform_0, window_bounds = array<i64: 1, 32, 32>}, {transform_indices = @transform_1, window_bounds = array<i64: 1, 32, 32>}, {pipeline_mode = #tpu.pipeline_mode<synchronous>, transform_indices = @transform_2, window_bounds = array<i64: 32, 32>}, {pipeline_mode = #tpu.pipeline_mode<synchronous>, transform_indices = @transform_3, window_bounds = array<i64: 1, 32>}, {pipeline_mode = #tpu.pipeline_mode<synchronous>, transform_indices = @transform_4, window_bounds = array<i64: 1, 32>}, {pipeline_mode = #tpu.pipeline_mode<synchronous>, transform_indices = @transform_5, window_bounds = array<i64: 1, 32>}, {pipeline_mode = #tpu.pipeline_mode<synchronous>, transform_indices = @transform_6, window_bounds = array<i64: 32, 64>}, {pipeline_mode = #tpu.pipeline_mode<synchronous>, transform_indices = @transform_7, window_bounds = array<i64: 1, 64>}, {pipeline_mode = #tpu.pipeline_mode<synchronous>, transform_indices = @transform_8, window_bounds = array<i64: 64, 32>}, {pipeline_mode = #tpu.pipeline_mode<synchronous>, transform_indices = @transform_9, window_bounds = array<i64: 1, 32>}, {transform_indices = @transform_10, window_bounds = array<i64: 1, 32, 32>}]} {
    %c0 = arith.constant 0 : index
    %c0_0 = arith.constant 0 : index
    %c0_1 = arith.constant 0 : index
    %0 = vector.load %arg2[%c0, %c0_0, %c0_1] : memref<1x32x32xf32, #tpu.memory_space<vmem>>, vector<1x32x32xf32>
    %1 = vector.shape_cast %0 : vector<1x32x32xf32> to vector<32x32xf32>
    %c0_2 = arith.constant 0 : index
    %c0_3 = arith.constant 0 : index
    %c0_4 = arith.constant 0 : index
    %2 = vector.load %arg3[%c0_2, %c0_3, %c0_4] : memref<1x32x32xbf16, #tpu.memory_space<vmem>>, vector<1x32x32xbf16>
    %3 = vector.shape_cast %2 : vector<1x32x32xbf16> to vector<32x32xbf16>
    %c0_5 = arith.constant 0 : index
    %c0_6 = arith.constant 0 : index
    %4 = vector.load %arg4[%c0_5, %c0_6] : memref<32x32xbf16, #tpu.memory_space<vmem>>, vector<32x32xbf16>
    %cst = arith.constant dense<0.000000e+00> : vector<32x32xf32>
    %5 = tpu.matmul %3, %4, %cst {dimension_numbers = #tpu.dot_dimension_numbers<[1], [0], [0], [1], [0, 0, 1, 1], [], []>} : vector<32x32xbf16>, vector<32x32xbf16>, vector<32x32xf32> -> vector<32x32xf32>
    %6 = arith.addf %1, %5 : vector<32x32xf32>
    %c0_7 = arith.constant 0 : index
    %c0_8 = arith.constant 0 : index
    %7 = vector.load %arg5[%c0_7, %c0_8] : memref<1x32xf32, #tpu.memory_space<vmem>>, vector<1x32xf32>
    %8 = vector.broadcast %7 : vector<1x32xf32> to vector<32x32xf32>
    %9 = arith.addf %6, %8 : vector<32x32xf32>
    %c0_9 = arith.constant 0 : index
    %c0_10 = arith.constant 0 : index
    %10 = vector.load %arg6[%c0_9, %c0_10] : memref<1x32xf32, #tpu.memory_space<vmem>>, vector<1x32xf32>
    %c0_11 = arith.constant 0 : index
    %c0_12 = arith.constant 0 : index
    %11 = vector.load %arg7[%c0_11, %c0_12] : memref<1x32xf32, #tpu.memory_space<vmem>>, vector<1x32xf32>
    %cst_13 = arith.constant dense<0.000000e+00> : vector<32xf32>
    %12 = vector.multi_reduction <add>, %9, %cst_13 [1] : vector<32x32xf32> to vector<32xf32>
    %13 = vector.shape_cast %12 : vector<32xf32> to vector<32x1xf32>
    %cst_14 = arith.constant 3.200000e+01 : f32
    %14 = vector.broadcast %cst_14 : f32 to vector<32x1xf32>
    %15 = arith.divf %13, %14 : vector<32x1xf32>
    %16 = vector.broadcast %15 : vector<32x1xf32> to vector<32x32xf32>
    %17 = arith.subf %9, %16 : vector<32x32xf32>
    %18 = arith.mulf %17, %17 : vector<32x32xf32>
    %cst_15 = arith.constant dense<0.000000e+00> : vector<32xf32>
    %19 = vector.multi_reduction <add>, %18, %cst_15 [1] : vector<32x32xf32> to vector<32xf32>
    %20 = vector.shape_cast %19 : vector<32xf32> to vector<32x1xf32>
    %cst_16 = arith.constant 3.200000e+01 : f32
    %21 = vector.broadcast %cst_16 : f32 to vector<32x1xf32>
    %22 = arith.divf %20, %21 : vector<32x1xf32>
    %23 = vector.broadcast %15 : vector<32x1xf32> to vector<32x32xf32>
    %24 = arith.subf %9, %23 : vector<32x32xf32>
    %cst_17 = arith.constant 9.99999974E-6 : f32
    %25 = vector.broadcast %cst_17 : f32 to vector<32x1xf32>
    %26 = arith.addf %22, %25 : vector<32x1xf32>
    %27 = math.rsqrt %26 : vector<32x1xf32>
    %28 = vector.broadcast %27 : vector<32x1xf32> to vector<32x32xf32>
    %29 = arith.mulf %24, %28 : vector<32x32xf32>
    %30 = vector.broadcast %10 : vector<1x32xf32> to vector<32x32xf32>
    %31 = arith.mulf %29, %30 : vector<32x32xf32>
    %32 = vector.broadcast %11 : vector<1x32xf32> to vector<32x32xf32>
    %33 = arith.addf %31, %32 : vector<32x32xf32>
    %34 = arith.truncf %33 : vector<32x32xf32> to vector<32x32xbf16>
    %c0_18 = arith.constant 0 : index
    %c0_19 = arith.constant 0 : index
    %35 = vector.load %arg8[%c0_18, %c0_19] : memref<32x64xbf16, #tpu.memory_space<vmem>>, vector<32x64xbf16>
    %cst_20 = arith.constant dense<0.000000e+00> : vector<32x64xf32>
    %36 = tpu.matmul %34, %35, %cst_20 {dimension_numbers = #tpu.dot_dimension_numbers<[1], [0], [0], [1], [0, 0, 1, 1], [], []>} : vector<32x32xbf16>, vector<32x64xbf16>, vector<32x64xf32> -> vector<32x64xf32>
    %c0_21 = arith.constant 0 : index
    %c0_22 = arith.constant 0 : index
    %37 = vector.load %arg9[%c0_21, %c0_22] : memref<1x64xf32, #tpu.memory_space<vmem>>, vector<1x64xf32>
    %38 = vector.broadcast %37 : vector<1x64xf32> to vector<32x64xf32>
    %39 = arith.addf %36, %38 : vector<32x64xf32>
    %cst_23 = arith.constant 1.702000e+00 : f32
    %40 = vector.broadcast %cst_23 : f32 to vector<32x64xf32>
    %41 = arith.mulf %40, %39 : vector<32x64xf32>
    %42 = arith.negf %41 : vector<32x64xf32>
    %43 = math.exp %42 : vector<32x64xf32>
    %cst_24 = arith.constant 1.000000e+00 : f32
    %44 = vector.broadcast %cst_24 : f32 to vector<32x64xf32>
    %45 = arith.addf %44, %43 : vector<32x64xf32>
    %46 = arith.divf %44, %45 : vector<32x64xf32>
    %47 = arith.mulf %39, %46 : vector<32x64xf32>
    %48 = arith.truncf %47 : vector<32x64xf32> to vector<32x64xbf16>
    %c0_25 = arith.constant 0 : index
    %c0_26 = arith.constant 0 : index
    %49 = vector.load %arg10[%c0_25, %c0_26] : memref<64x32xbf16, #tpu.memory_space<vmem>>, vector<64x32xbf16>
    %cst_27 = arith.constant dense<0.000000e+00> : vector<32x32xf32>
    %50 = tpu.matmul %48, %49, %cst_27 {dimension_numbers = #tpu.dot_dimension_numbers<[1], [0], [0], [1], [0, 0, 1, 1], [], []>} : vector<32x64xbf16>, vector<64x32xbf16>, vector<32x32xf32> -> vector<32x32xf32>
    %51 = arith.addf %9, %50 : vector<32x32xf32>
    %c0_28 = arith.constant 0 : index
    %c0_29 = arith.constant 0 : index
    %52 = vector.load %arg11[%c0_28, %c0_29] : memref<1x32xf32, #tpu.memory_space<vmem>>, vector<1x32xf32>
    %53 = vector.broadcast %52 : vector<1x32xf32> to vector<32x32xf32>
    %54 = arith.addf %51, %53 : vector<32x32xf32>
    %c0_30 = arith.constant 0 : index
    %c0_31 = arith.constant 0 : index
    %c0_32 = arith.constant 0 : index
    %55 = vector.load %arg12[%c0_30, %c0_31, %c0_32] : memref<1x32x32xf32, #tpu.memory_space<vmem>>, vector<1x32x32xf32>
    %56 = vector.shape_cast %55 : vector<1x32x32xf32> to vector<32x32xf32>
    %57 = vector.shape_cast %54 : vector<32x32xf32> to vector<1x32x32xf32>
    tpu.vector_store %arg12[%c0_30, %c0_31, %c0_32], %57 {strides = array<i32>} : memref<1x32x32xf32, #tpu.memory_space<vmem>>, vector<1x32x32xf32>,
    return
  }
  func.func @transform_0(%arg0: i32, %arg1: i32) -> (i32, i32, i32) {
    %c0_i32 = arith.constant 0 : i32
    %c0_i32_0 = arith.constant 0 : i32
    return %arg0, %arg1, %c0_i32 : i32, i32, i32
  }
  func.func @transform_1(%arg0: i32, %arg1: i32) -> (i32, i32, i32) {
    %c0_i32 = arith.constant 0 : i32
    %c0_i32_0 = arith.constant 0 : i32
    return %arg0, %arg1, %c0_i32 : i32, i32, i32
  }
  func.func @transform_2(%arg0: i32, %arg1: i32) -> (i32, i32) {
    %c0_i32 = arith.constant 0 : i32
    %c0_i32_0 = arith.constant 0 : i32
    %c0_i32_1 = arith.constant 0 : i32
    return %c0_i32, %c0_i32_0 : i32, i32
  }
  func.func @transform_3(%arg0: i32, %arg1: i32) -> (i32, i32) {
    %c0_i32 = arith.constant 0 : i32
    %c0_i32_0 = arith.constant 0 : i32
    %c0_i32_1 = arith.constant 0 : i32
    return %c0_i32, %c0_i32_0 : i32, i32
  }
  func.func @transform_4(%arg0: i32, %arg1: i32) -> (i32, i32) {
    %c0_i32 = arith.constant 0 : i32
    %c0_i32_0 = arith.constant 0 : i32
    %c0_i32_1 = arith.constant 0 : i32
    return %c0_i32, %c0_i32_0 : i32, i32
  }
  func.func @transform_5(%arg0: i32, %arg1: i32) -> (i32, i32) {
    %c0_i32 = arith.constant 0 : i32
    %c0_i32_0 = arith.constant 0 : i32
    %c0_i32_1 = arith.constant 0 : i32
    return %c0_i32, %c0_i32_0 : i32, i32
  }
  func.func @transform_6(%arg0: i32, %arg1: i32) -> (i32, i32) {
    %c0_i32 = arith.constant 0 : i32
    %c0_i32_0 = arith.constant 0 : i32
    %c0_i32_1 = arith.constant 0 : i32
    return %c0_i32, %c0_i32_0 : i32, i32
  }
  func.func @transform_7(%arg0: i32, %arg1: i32) -> (i32, i32) {
    %c0_i32 = arith.constant 0 : i32
    %c0_i32_0 = arith.constant 0 : i32
    %c0_i32_1 = arith.constant 0 : i32
    return %c0_i32, %c0_i32_0 : i32, i32
  }
  func.func @transform_8(%arg0: i32, %arg1: i32) -> (i32, i32) {
    %c0_i32 = arith.constant 0 : i32
    %c0_i32_0 = arith.constant 0 : i32
    %c0_i32_1 = arith.constant 0 : i32
    return %c0_i32, %c0_i32_0 : i32, i32
  }
  func.func @transform_9(%arg0: i32, %arg1: i32) -> (i32, i32) {
    %c0_i32 = arith.constant 0 : i32
    %c0_i32_0 = arith.constant 0 : i32
    %c0_i32_1 = arith.constant 0 : i32
    return %c0_i32, %c0_i32_0 : i32, i32
  }
  func.func @transform_10(%arg0: i32, %arg1: i32) -> (i32, i32, i32) {
    %c0_i32 = arith.constant 0 : i32
    %c0_i32_0 = arith.constant 0 : i32
    return %arg0, %arg1, %c0_i32 : i32, i32, i32
  }
}

module attributes {stable_mosaic.version = 11 : i64} {
  func.func @post_ln_kernel(%arg0: i32, %arg1: memref<2x32xf32, #tpu.memory_space<vmem>>, %arg2: memref<1x32xf32, #tpu.memory_space<vmem>>, %arg3: memref<1x32xf32, #tpu.memory_space<vmem>>, %arg4: memref<2x32xf32, #tpu.memory_space<vmem>>) attributes {dimension_semantics = [#tpu.dimension_semantics<arbitrary>], iteration_bounds = array<i64: 1>, scalar_prefetch = 0 : i64, scratch_operands = 0 : i64, tpu.core_type = #tpu.core_type<tc>, window_params = [{pipeline_mode = #tpu.pipeline_mode<synchronous>, transform_indices = @transform_0, window_bounds = array<i64: 2, 32>}, {pipeline_mode = #tpu.pipeline_mode<synchronous>, transform_indices = @transform_1, window_bounds = array<i64: 1, 32>}, {pipeline_mode = #tpu.pipeline_mode<synchronous>, transform_indices = @transform_2, window_bounds = array<i64: 1, 32>}, {pipeline_mode = #tpu.pipeline_mode<synchronous>, transform_indices = @transform_3, window_bounds = array<i64: 2, 32>}]} {
    %c0 = arith.constant 0 : index
    %c0_0 = arith.constant 0 : index
    %0 = vector.load %arg1[%c0, %c0_0] : memref<2x32xf32, #tpu.memory_space<vmem>>, vector<2x32xf32>
    %c0_1 = arith.constant 0 : index
    %c0_2 = arith.constant 0 : index
    %1 = vector.load %arg2[%c0_1, %c0_2] : memref<1x32xf32, #tpu.memory_space<vmem>>, vector<1x32xf32>
    %c0_3 = arith.constant 0 : index
    %c0_4 = arith.constant 0 : index
    %2 = vector.load %arg3[%c0_3, %c0_4] : memref<1x32xf32, #tpu.memory_space<vmem>>, vector<1x32xf32>
    %cst = arith.constant dense<0.000000e+00> : vector<2xf32>
    %3 = vector.multi_reduction <add>, %0, %cst [1] : vector<2x32xf32> to vector<2xf32>
    %4 = vector.shape_cast %3 : vector<2xf32> to vector<2x1xf32>
    %cst_5 = arith.constant 3.200000e+01 : f32
    %5 = vector.broadcast %cst_5 : f32 to vector<2x1xf32>
    %6 = arith.divf %4, %5 : vector<2x1xf32>
    %7 = vector.broadcast %6 : vector<2x1xf32> to vector<2x32xf32>
    %8 = arith.subf %0, %7 : vector<2x32xf32>
    %9 = arith.mulf %8, %8 : vector<2x32xf32>
    %cst_6 = arith.constant dense<0.000000e+00> : vector<2xf32>
    %10 = vector.multi_reduction <add>, %9, %cst_6 [1] : vector<2x32xf32> to vector<2xf32>
    %11 = vector.shape_cast %10 : vector<2xf32> to vector<2x1xf32>
    %cst_7 = arith.constant 3.200000e+01 : f32
    %12 = vector.broadcast %cst_7 : f32 to vector<2x1xf32>
    %13 = arith.divf %11, %12 : vector<2x1xf32>
    %14 = vector.broadcast %6 : vector<2x1xf32> to vector<2x32xf32>
    %15 = arith.subf %0, %14 : vector<2x32xf32>
    %cst_8 = arith.constant 9.99999974E-6 : f32
    %16 = vector.broadcast %cst_8 : f32 to vector<2x1xf32>
    %17 = arith.addf %13, %16 : vector<2x1xf32>
    %18 = math.rsqrt %17 : vector<2x1xf32>
    %19 = vector.broadcast %18 : vector<2x1xf32> to vector<2x32xf32>
    %20 = arith.mulf %15, %19 : vector<2x32xf32>
    %21 = vector.broadcast %1 : vector<1x32xf32> to vector<2x32xf32>
    %22 = arith.mulf %20, %21 : vector<2x32xf32>
    %23 = vector.broadcast %2 : vector<1x32xf32> to vector<2x32xf32>
    %24 = arith.addf %22, %23 : vector<2x32xf32>
    %c0_9 = arith.constant 0 : index
    %c0_10 = arith.constant 0 : index
    %25 = vector.load %arg4[%c0_9, %c0_10] : memref<2x32xf32, #tpu.memory_space<vmem>>, vector<2x32xf32>
    tpu.vector_store %arg4[%c0_9, %c0_10], %24 {strides = array<i32>} : memref<2x32xf32, #tpu.memory_space<vmem>>, vector<2x32xf32>,
    return
  }
  func.func @transform_0(%arg0: i32) -> (i32, i32) {
    %c0_i32 = arith.constant 0 : i32
    %c0_i32_0 = arith.constant 0 : i32
    %c0_i32_1 = arith.constant 0 : i32
    return %c0_i32, %c0_i32_0 : i32, i32
  }
  func.func @transform_1(%arg0: i32) -> (i32, i32) {
    %c0_i32 = arith.constant 0 : i32
    %c0_i32_0 = arith.constant 0 : i32
    %c0_i32_1 = arith.constant 0 : i32
    return %c0_i32, %c0_i32_0 : i32, i32
  }
  func.func @transform_2(%arg0: i32) -> (i32, i32) {
    %c0_i32 = arith.constant 0 : i32
    %c0_i32_0 = arith.constant 0 : i32
    %c0_i32_1 = arith.constant 0 : i32
    return %c0_i32, %c0_i32_0 : i32, i32
  }
  func.func @transform_3(%arg0: i32) -> (i32, i32) {
    %c0_i32 = arith.constant 0 : i32
    %c0_i32_0 = arith.constant 0 : i32
    %c0_i32_1 = arith.constant 0 : i32
    return %c0_i32, %c0_i32_0 : i32, i32
  }
}

</mosaic_0001>

<llo_original>
// kernel: _lambda_.8
$region0: #{_lambda_.8}
  #allocation0 [shape = 'u32[]', space=smem, size = 0x4, offset = 0x4, fixed_abs, tag = 'smem constant byte address 0x4 - core index']
  #allocation1 [shape = 'u32[144,128]{1,0:T(1,128)}', space=vmem, size = 0x12000, scoped, tag = 'internal scratch']
  %s0 = inlined_call_operand.vmem [shape: bf16[2,32,48], index: 0, kind: input, shape index: {}]
  %s1 = inlined_call_operand.vmem [shape: bf16[48,32], index: 1, kind: input, shape index: {}]
  %s2 = inlined_call_operand.vmem [shape: f32[1,32], index: 2, kind: input, shape index: {}]
  %s3 = inlined_call_operand.vmem [shape: f32[32,32], index: 3, kind: input, shape index: {}]
  %s4 = inlined_call_operand.vmem [shape: f32[1,32], index: 4, kind: input, shape index: {}]
  %s5 = inlined_call_operand.vmem [shape: f32[1,32], index: 5, kind: input, shape index: {}]
  %s6 = inlined_call_operand.vmem [shape: f32[2,32,32], index: 6, kind: output, shape index: {}]
  %s7 = sld [smem:[#allocation0]]
  $region61: #{_lambda_.8} parent=0
    _
  %s9 = ssub.s32 1, %s7
  %s10 = scalar_select 0, %s9, %s7
  loop: start=0, step=1, limit=4
  $region2: #{_lambda_.8} parent=0 // loop_pre_header
    _
  $region3: #{_lambda_.8} parent=0 // loop_header
    %s12 = sphi 0, %s16
    %p13 = scmp.ge.s32.totalorder %s12, 4
    %s19 = sphi 0, %s31
    %s20 = sphi 0, %s27
    %s21 = sphi 0, %s19
    %s22 = sphi 0, %s20
    %s23 = sphi 0, %s21
    %s24 = sphi 0, %s22
    %s36 = sphi 0, %s38
    %s39 = sphi 0, %s36
    %s40 = sphi 0, %s39
    %s56 = sphi 0, %s40
    %s60 = sphi 0, %s60
    %s62 = sphi 0, %s60
    %s63 = sphi 0, %s62
    %s77 = sphi 0, %s63
    %s81 = sphi 0, %s81
    %s83 = sphi 0, %s81
    %s84 = sphi 0, %s83
    %s98 = sphi 0, %s84
    %s104 = sphi 0, %s106
    %s107 = sphi 0, %s104
    %s108 = sphi 0, %s107
    %s124 = sphi 0, %s108
    %s128 = sphi 0, %s128
    %s130 = sphi 0, %s128
    %s131 = sphi 0, %s130
    %s145 = sphi 0, %s131
    %s149 = sphi 0, %s149
    %s151 = sphi 0, %s149
    %s152 = sphi 0, %s151
    %s166 = sphi 0, %s152
    %s174 = sphi 0, %s176
    %s177 = sphi 0, %s174
    %s178 = sphi 0, %s177
    %s194 = sphi 0, %s178
  $region4: #{_lambda_.8} parent=0 // loop_header_branch
    %15 = sbr.rel (%p13) target = $region8
  $region5: #{_lambda_.8} parent=0 // loop_body
    %s17 = ssub.s32 %s12, 1
    %s18 = ssub.s32 %s12, 2
    %s25 = sadd.s32 1, %s20
    %p26 = scmp.ge.s32.totalorder %s25, 1
    %s27 = scalar_select %p26, 0, %s25
    %s28 = sadd.s32 1, %s19
    %s29 = scalar_select %p26, %s28, %s19
    %p30 = scmp.ge.s32.totalorder %s29, 2
    %s31 = scalar_select %p30, 0, %s29
    %s32 = ssub.s32 %s19, %s31
    %s33 = ssub.s32 %s20, %s27
    %s34 = sor.u32 %s32, %s33
    %p35 = scmp.eq.s32.totalorder %s34, 0
    %s37 = sadd.s32 %s36, 1
    %s38 = scalar_select %p35, %s36, %s37
    %p41 = pneg %p35
    %p42 = scmp.eq.s32.totalorder %s12, 1
    %p43 = por %p41, %p42
    %p44 = scmp.ne.s32.totalorder %s36, %s39
    %p45 = scmp.eq.s32.totalorder %s12, 0
    %p46 = por %p44, %p45
    %p47 = scmp.ne.s32.totalorder %s36, %s39
    %p48 = scmp.eq.s32.totalorder %s17, 1
    %p49 = por %p47, %p48
    %p50 = scmp.ne.s32.totalorder %s39, %s40
    %p51 = scmp.eq.s32.totalorder %s17, 0
    %p52 = por %p50, %p51
    %p53 = scmp.ne.s32.totalorder %s39, %s40
    %p54 = scmp.eq.s32.totalorder %s18, 1
    %p55 = por %p53, %p54
    %p57 = scmp.ne.s32.totalorder %s40, %s56
    %p58 = scmp.eq.s32.totalorder %s18, 0
    %p59 = por %p57, %p58
    %s61 = sadd.s32 %s60, 1
    %p64 = scmp.eq.s32.totalorder %s12, 1
    %p65 = scmp.ne.s32.totalorder %s60, %s62
    %p66 = scmp.eq.s32.totalorder %s12, 0
    %p67 = por %p65, %p66
    %p68 = scmp.ne.s32.totalorder %s60, %s62
    %p69 = scmp.eq.s32.totalorder %s17, 1
    %p70 = por %p68, %p69
    %p71 = scmp.ne.s32.totalorder %s62, %s63
    %p72 = scmp.eq.s32.totalorder %s17, 0
    %p73 = por %p71, %p72
    %p74 = scmp.ne.s32.totalorder %s62, %s63
    %p75 = scmp.eq.s32.totalorder %s18, 1
    %p76 = por %p74, %p75
    %p78 = scmp.ne.s32.totalorder %s63, %s77
    %p79 = scmp.eq.s32.totalorder %s18, 0
    %p80 = por %p78, %p79
    %s82 = sadd.s32 %s81, 1
    %p85 = scmp.eq.s32.totalorder %s12, 1
    %p86 = scmp.ne.s32.totalorder %s81, %s83
    %p87 = scmp.eq.s32.totalorder %s12, 0
    %p88 = por %p86, %p87
    %p89 = scmp.ne.s32.totalorder %s81, %s83
    %p90 = scmp.eq.s32.totalorder %s17, 1
    %p91 = por %p89, %p90
    %p92 = scmp.ne.s32.totalorder %s83, %s84
    %p93 = scmp.eq.s32.totalorder %s17, 0
    %p94 = por %p92, %p93
    %p95 = scmp.ne.s32.totalorder %s83, %s84
    %p96 = scmp.eq.s32.totalorder %s18, 1
    %p97 = por %p95, %p96
    %p99 = scmp.ne.s32.totalorder %s84, %s98
    %p100 = scmp.eq.s32.totalorder %s18, 0
    %p101 = por %p99, %p100
    %s102 = ssub.s32 %s20, %s27
    %p103 = scmp.eq.s32.totalorder %s102, 0
    %s105 = sadd.s32 %s104, 1
    %s106 = scalar_select %p103, %s104, %s105
    %p109 = pneg %p103
    %p110 = scmp.eq.s32.totalorder %s12, 1
    %p111 = por %p109, %p110
    %p112 = scmp.ne.s32.totalorder %s104, %s107
    %p113 = scmp.eq.s32.totalorder %s12, 0
    %p114 = por %p112, %p113
    %p115 = scmp.ne.s32.totalorder %s104, %s107
    %p116 = scmp.eq.s32.totalorder %s17, 1
    %p117 = por %p115, %p116
    %p118 = scmp.ne.s32.totalorder %s107, %s108
    %p119 = scmp.eq.s32.totalorder %s17, 0
    %p120 = por %p118, %p119
    %p121 = scmp.ne.s32.totalorder %s107, %s108
    %p122 = scmp.eq.s32.totalorder %s18, 1
    %p123 = por %p121, %p122
    %p125 = scmp.ne.s32.totalorder %s108, %s124
    %p126 = scmp.eq.s32.totalorder %s18, 0
    %p127 = por %p125, %p126
    %s129 = sadd.s32 %s128, 1
    %p132 = scmp.eq.s32.totalorder %s12, 1
    %p133 = scmp.ne.s32.totalorder %s128, %s130
    %p134 = scmp.eq.s32.totalorder %s12, 0
    %p135 = por %p133, %p134
    %p136 = scmp.ne.s32.totalorder %s128, %s130
    %p137 = scmp.eq.s32.totalorder %s17, 1
    %p138 = por %p136, %p137
    %p139 = scmp.ne.s32.totalorder %s130, %s131
    %p140 = scmp.eq.s32.totalorder %s17, 0
    %p141 = por %p139, %p140
    %p142 = scmp.ne.s32.totalorder %s130, %s131
    %p143 = scmp.eq.s32.totalorder %s18, 1
    %p144 = por %p142, %p143
    %p146 = scmp.ne.s32.totalorder %s131, %s145
    %p147 = scmp.eq.s32.totalorder %s18, 0
    %p148 = por %p146, %p147
    %s150 = sadd.s32 %s149, 1
    %p153 = scmp.eq.s32.totalorder %s12, 1
    %p154 = scmp.ne.s32.totalorder %s149, %s151
    %p155 = scmp.eq.s32.totalorder %s12, 0
    %p156 = por %p154, %p155
    %p157 = scmp.ne.s32.totalorder %s149, %s151
    %p158 = scmp.eq.s32.totalorder %s17, 1
    %p159 = por %p157, %p158
    %p160 = scmp.ne.s32.totalorder %s151, %s152
    %p161 = scmp.eq.s32.totalorder %s17, 0
    %p162 = por %p160, %p161
    %p163 = scmp.ne.s32.totalorder %s151, %s152
    %p164 = scmp.eq.s32.totalorder %s18, 1
    %p165 = por %p163, %p164
    %p167 = scmp.ne.s32.totalorder %s152, %s166
    %p168 = scmp.eq.s32.totalorder %s18, 0
    %p169 = por %p167, %p168
    %s170 = ssub.s32 %s19, %s31
    %s171 = ssub.s32 %s20, %s27
    %s172 = sor.u32 %s170, %s171
    %p173 = scmp.eq.s32.totalorder %s172, 0
    %s175 = sadd.s32 %s174, 1
    %s176 = scalar_select %p173, %s174, %s175
    %p179 = pneg %p173
    %p180 = scmp.eq.s32.totalorder %s12, 1
    %p181 = por %p179, %p180
    %p182 = scmp.ne.s32.totalorder %s174, %s177
    %p183 = scmp.eq.s32.totalorder %s12, 0
    %p184 = por %p182, %p183
    %p185 = scmp.ne.s32.totalorder %s174, %s177
    %p186 = scmp.eq.s32.totalorder %s17, 1
    %p187 = por %p185, %p186
    %p188 = scmp.ne.s32.totalorder %s177, %s178
    %p189 = scmp.eq.s32.totalorder %s17, 0
    %p190 = por %p188, %p189
    %p191 = scmp.ne.s32.totalorder %s177, %s178
    %p192 = scmp.eq.s32.totalorder %s18, 1
    %p193 = por %p191, %p192
    %p195 = scmp.ne.s32.totalorder %s178, %s194
    %p196 = scmp.eq.s32.totalorder %s18, 0
    %p197 = por %p195, %p196
    %p198 = scmp.le.s32.totalorder 1, %s12
    %p199 = scmp.lt.s32.totalorder %s12, 3
    %p200 = pnand %p198, %p199
    %p201 = pneg %p200
    // Predicated region
    $region9: #{_lambda_.8} parent=5 // pred_check
      _
    $region10: #{_lambda_.8} parent=5 // pred_check_branch
      %203 = sbr.rel (%p200) target = $region12
    $region11: #{_lambda_.8} parent=5 // pred_region
      %s204 = ssub.s32 %s12, 1
      // Predicated region
      $region13: #{_lambda_.8} parent=11 // pred_check
        %p205 = pneg %p73
      $region14: #{_lambda_.8} parent=11 // pred_check_branch
        %207 = sbr.rel (%p205) target = $region16
      $region15: #{_lambda_.8} parent=11 // pred_region
        _
      $region16: #{_lambda_.8} parent=11 // pred_fallthru
        _
      // Predicated region
      $region17: #{_lambda_.8} parent=11 // pred_check
        %p208 = pneg %p94
      $region18: #{_lambda_.8} parent=11 // pred_check_branch
        %210 = sbr.rel (%p208) target = $region20
      $region19: #{_lambda_.8} parent=11 // pred_region
        _
      $region20: #{_lambda_.8} parent=11 // pred_fallthru
        _
      // Predicated region
      $region21: #{_lambda_.8} parent=11 // pred_check
        %p211 = pneg %p120
      $region22: #{_lambda_.8} parent=11 // pred_check_branch
        %213 = sbr.rel (%p211) target = $region24
      $region23: #{_lambda_.8} parent=11 // pred_region
        %s214 = smul.u32 4, %s22
        %p215 = scmp.lt.s32.totalorder %s214, 3
        %s216 = scalar_select %p215, %s214, 3
        %s217 = smul.addr %s216, 8
        %s218 = scalar_lea.vmem %s3, %s217
        %s219 = smul.u32 4, %s22
      $region24: #{_lambda_.8} parent=11 // pred_fallthru
        _
      // Predicated region
      $region25: #{_lambda_.8} parent=11 // pred_check
        %p220 = pneg %p141
      $region26: #{_lambda_.8} parent=11 // pred_check_branch
        %222 = sbr.rel (%p220) target = $region28
      $region27: #{_lambda_.8} parent=11 // pred_region
        _
      $region28: #{_lambda_.8} parent=11 // pred_fallthru
        _
      // Predicated region
      $region29: #{_lambda_.8} parent=11 // pred_check
        %p223 = pneg %p162
      $region30: #{_lambda_.8} parent=11 // pred_check_branch
        %225 = sbr.rel (%p223) target = $region32
      $region31: #{_lambda_.8} parent=11 // pred_region
        _
      $region32: #{_lambda_.8} parent=11 // pred_fallthru
        _
    $region12: #{_lambda_.8} parent=5 // pred_fallthru
      _
    %p226 = scmp.lt.s32.totalorder %s12, 2
    // Predicated region
    $region33: #{_lambda_.8} parent=5 // pred_check
      %p227 = pneg %p226
    $region34: #{_lambda_.8} parent=5 // pred_check_branch
      %229 = sbr.rel (%p227) target = $region36
    $region35: #{_lambda_.8} parent=5 // pred_region
      // Predicated region
      $region37: #{_lambda_.8} parent=35 // pred_check
        %p230 = pneg %p46
      $region38: #{_lambda_.8} parent=35 // pred_check_branch
        %232 = sbr.rel (%p230) target = $region40
      $region39: #{_lambda_.8} parent=35 // pred_region
        %s233 = smul.u32 4, %s20
        %p234 = scmp.lt.s32.totalorder %s19, 1
        %s235 = scalar_select %p234, %s19, 1
        %p236 = scmp.lt.s32.totalorder %s233, 3
        %s237 = scalar_select %p236, %s233, 3
        %s238 = smul.addr %s235, 4
        %s239 = sadd.s32 %s237, %s238
        %s240 = smul.addr %s239, 4
        %s241 = scalar_lea.vmem %s0, %s240
        %s242 = smul.u32 4, %s20
      $region40: #{_lambda_.8} parent=35 // pred_fallthru
        _
    $region36: #{_lambda_.8} parent=5 // pred_fallthru
      _
    %p243 = scmp.le.s32.totalorder 1, %s12
    %p244 = scmp.lt.s32.totalorder %s12, 3
    %p245 = pnand %p243, %p244
    %p246 = pneg %p245
    // Predicated region
    $region41: #{_lambda_.8} parent=5 // pred_check
      _
    $region42: #{_lambda_.8} parent=5 // pred_check_branch
      %248 = sbr.rel (%p245) target = $region44
    $region43: #{_lambda_.8} parent=5 // pred_region
      %s249 = ssub.s32 %s12, 1
      %s250 = smul.u32 4, %s22
      %p251 = scmp.lt.s32.totalorder %s21, 1
      %s252 = scalar_select %p251, %s21, 1
      %p253 = scmp.lt.s32.totalorder %s250, 3
      %s254 = scalar_select %p253, %s250, 3
      %s255 = smul.addr %s252, 4
      %s256 = sadd.s32 %s254, %s255
      %s257 = smul.addr %s256, 4
      %s258 = scalar_lea.vmem %s0, %s257
      %p259 = pneg %p52
      %p260 = pneg %p49
      %p261 = pneg %p73
      %p262 = pneg %p70
      %p263 = pneg %p94
      %p264 = pneg %p91
      %s265 = smul.u32 4, %s22
      %p266 = scmp.lt.s32.totalorder %s265, 3
      %s267 = scalar_select %p266, %s265, 3
      %s268 = smul.addr %s267, 8
      %s269 = scalar_lea.vmem %s3, %s268
      %p270 = pneg %p120
      %p271 = pneg %p117
      %p272 = pneg %p141
      %p273 = pneg %p138
      %p274 = pneg %p162
      %p275 = pneg %p159
      %p276 = pneg %p190
      %p277 = pneg %p187
      %s278 = smul.u32 4, %s22
      %p279 = scmp.lt.s32.totalorder %s21, 1
      %s280 = scalar_select %p279, %s21, 1
      %p281 = scmp.lt.s32.totalorder %s278, 3
      %s282 = scalar_select %p281, %s278, 3
      %s283 = smul.addr %s280, 4
      %s284 = sadd.s32 %s282, %s283
      %s285 = smul.addr %s284, 8
      %s286 = scalar_lea.vmem %s6, %s285
      %s287 = smul.u32 4, %s22
      %p288 = scmp.lt.s32.totalorder %s21, 1
      %s289 = scalar_select %p288, %s21, 1
      %p290 = scmp.lt.s32.totalorder %s287, 3
      %s291 = scalar_select %p290, %s287, 3
      %s292 = smul.addr %s289, 4
      %s293 = sadd.s32 %s291, %s292
      %s294 = smul.addr %s293, 4
      %s295 = scalar_lea.vmem %s0, %s294
      %s296 = smul.u32 4, %s22
      %s297 = smul.u32 4, %s22
      %p298 = scmp.lt.s32.totalorder %s297, 3
      %s299 = scalar_select %p298, %s297, 3
      %s300 = smul.addr %s299, 8
      %s301 = scalar_lea.vmem %s3, %s300
      %s302 = smul.u32 4, %s22
      %s303 = smul.u32 4, %s22
      %p304 = scmp.lt.s32.totalorder %s21, 1
      %s305 = scalar_select %p304, %s21, 1
      %p306 = scmp.lt.s32.totalorder %s303, 3
      %s307 = scalar_select %p306, %s303, 3
      %s308 = smul.addr %s305, 4
      %s309 = sadd.s32 %s307, %s308
      %s310 = smul.addr %s309, 8
      %s311 = scalar_lea.vmem %s6, %s310
      %s312 = smul.u32 4, %s22
      %v314 = vld [vmem:[%s295] sm:$0xf]
      %v315 = vld [vmem:[%s295 + $0x4] sm:$0xf]
      %v316 = vld [vmem:[%s295 + $0x8] sm:$0xf]
      %v317 = vld [vmem:[%s295 + $0xc] sm:$0xf]
      %v318 = vld [vmem:[%s1] sm:$0xf]
      %v319 = vld [vmem:[%s1 + $0x4] sm:$0xf]
      %v320 = vld [vmem:[%s1 + $0x8] sm:$0xf]
      %v321 = vld [vmem:[%s1 + $0xc] sm:$0xf]
      %v322 = vld [vmem:[%s1 + $0x10] sm:$0xf]
      %v323 = vld [vmem:[%s1 + $0x14] sm:$0xf]
      %v324 = vld [vmem:[%s301] sm:$0xff]
      %v325 = vld [vmem:[%s301 + $0x8] sm:$0xff]
      %v326 = vld [vmem:[%s301 + $0x10] sm:$0xff]
      %v327 = vld [vmem:[%s301 + $0x18] sm:$0xff]
      %v332 = vunpack.c.l.b16 %v314
      %v333 = vunpack.c.l.b16 %v315
      %v334 = vunpack.c.l.b16 %v316
      %v335 = vunpack.c.l.b16 %v317
      %v336 = vpack.c.b16 %v333, %v332
      %v337 = vpack.c.b16 %v335, %v334
      %v344 = vunpack.c.l.b16 %v318
      %v345 = vunpack.c.l.b16 %v319
      %v346 = vunpack.c.l.b16 %v320
      %v347 = vunpack.c.l.b16 %v321
      %v348 = vunpack.c.l.b16 %v322
      %v349 = vunpack.c.l.b16 %v323
      %v350 = vpack.c.b16 %v345, %v344
      %v351 = vpack.c.b16 %v347, %v346
      %v352 = vpack.c.b16 %v349, %v348
      %vm356 = vcmask 392192
      %v358 = vsel %vm356, %v336, 0
      %v361 = vsel %vm356, %v337, 0
      %363 = vmatprep.subr.bf16.mxu0 0
      %364 = vmatpush1.bf16.msra.mxu0 0
      %365 = vmatprep.subr.bf16.mxu0 0
      %366 = vmatpush1.bf16.msra.mxu0 0
      %367 = vmatprep.subr.bf16.mxu0 0
      %368 = vmatpush1.bf16.msra.mxu0 0
      %369 = vmatprep.subr.bf16.mxu0 0
      %370 = vmatpush1.bf16.msra.mxu0 0
      %371 = vmatprep.subr.bf16.mxu0 0
      %372 = vmatpush1.bf16.msra.mxu0 0
      %373 = vmatprep.subr.bf16.mxu0 0
      %374 = vmatpush1.bf16.msra.mxu0 %v352
      %375 = vmatprep.subr.bf16.mxu0 0
      %376 = vmatpush1.bf16.msra.mxu0 %v351
      %377 = vmatprep.subr.bf16.mxu0 0
      %378 = vmatpush1.bf16.msra.mxu0 %v350
      %379 = vmatprep.subr.bf16.mxu0 0
      %380 = vmatpush2.bf16.msra.mxu0 0
      %381 = vmatprep.subr.bf16.mxu0 0
      %382 = vmatpush2.bf16.msra.mxu0 0
      %383 = vmatprep.subr.bf16.mxu0 0
      %384 = vmatpush2.bf16.msra.mxu0 0
      %385 = vmatprep.subr.bf16.mxu0 0
      %386 = vmatpush2.bf16.msra.mxu0 0
      %387 = vmatprep.subr.bf16.mxu0 0
      %388 = vmatpush2.bf16.msra.mxu0 0
      %389 = vmatprep.subr.bf16.mxu0 0
      %390 = vmatpush2.bf16.msra.mxu0 0
      %391 = vmatprep.subr.bf16.mxu0 0
      %392 = vmatpush2.bf16.msra.mxu0 0
      %393 = vmatprep.subr.bf16.mxu0 0
      %394 = vmatpush2.bf16.msra.mxu0 0
      %395 = vmatprep.mubr.bf16.mxu0 0
      %396 = vmatmul.mubr.bf16.gmra.mxu0 %v358
      %v397 = vpop.f32.mrf.mxu0
      %v398 = vadd.f32 %v324, %v397
      %v399 = vpop.f32.mrf.mxu0
      %v400 = vpop.f32.mrf.mxu0
      %v401 = vadd.f32 %v325, %v400
      %v402 = vpop.f32.mrf.mxu0
      %403 = vmatprep.mubr.bf16.mxu0 0
      %404 = vmatmul.mubr.bf16.gmra.mxu0 %v361
      %v405 = vpop.f32.mrf.mxu0
      %v406 = vadd.f32 %v326, %v405
      %v407 = vpop.f32.mrf.mxu0
      %v408 = vpop.f32.mrf.mxu0
      %v409 = vadd.f32 %v327, %v408
      %v410 = vpop.f32.mrf.mxu0
      %411 = vdwg.mxu0
      %v412 = vld [vmem:[%s4] sm:$0x1]
      %v413 = vld [vmem:[%s5] sm:$0x1]
      %vm414 = vcmask 261120
      %v415 = vsel %vm414, %v398, 0.0
      %416 = vadd.xlane.f32.xlu0 %v415
      %v417 = vpop.xlane.xlu0 %416
      %v418 = vsel %vm414, %v401, 0.0
      %419 = vadd.xlane.f32.xlu0 %v418
      %v420 = vpop.xlane.xlu0 %419
      %v421 = vsel %vm414, %v406, 0.0
      %422 = vadd.xlane.f32.xlu0 %v421
      %v423 = vpop.xlane.xlu0 %422
      %v424 = vsel %vm414, %v409, 0.0
      %425 = vadd.xlane.f32.xlu0 %v424
      %v426 = vpop.xlane.xlu0 %425
      %v427 = vrcp.pop 32.0
      %v428 = vmul.f32 %v417, %v427
      %v429 = vmul.f32 %v420, %v427
      %v430 = vmul.f32 %v423, %v427
      %v431 = vmul.f32 %v426, %v427
      %v432 = vsub.f32 %v398, %v428
      %v433 = vsub.f32 %v401, %v429
      %v434 = vsub.f32 %v406, %v430
      %v435 = vsub.f32 %v409, %v431
      %v436 = vmul.f32 %v432, %v432
      %v437 = vmul.f32 %v433, %v433
      %v438 = vmul.f32 %v434, %v434
      %v439 = vmul.f32 %v435, %v435
      %v440 = vsel %vm414, %v436, 0.0
      %441 = vadd.xlane.f32.xlu0 %v440
      %v442 = vpop.xlane.xlu0 %441
      %v443 = vsel %vm414, %v437, 0.0
      %444 = vadd.xlane.f32.xlu0 %v443
      %v445 = vpop.xlane.xlu0 %444
      %v446 = vsel %vm414, %v438, 0.0
      %447 = vadd.xlane.f32.xlu0 %v446
      %v448 = vpop.xlane.xlu0 %447
      %v449 = vsel %vm414, %v439, 0.0
      %450 = vadd.xlane.f32.xlu0 %v449
      %v451 = vpop.xlane.xlu0 %450
      %v452 = vmul.f32 %v442, %v427
      %v453 = vmul.f32 %v445, %v427
      %v454 = vmul.f32 %v448, %v427
      %v455 = vmul.f32 %v451, %v427
      %v456 = vadd.f32 %v452, 1e-05
      %v457 = vadd.f32 %v453, 1e-05
      %v458 = vadd.f32 %v454, 1e-05
      %v459 = vadd.f32 %v455, 1e-05
      %v460 = vrsqrt.pop %v456
      %v461 = vrsqrt.pop %v457
      %v462 = vrsqrt.pop %v458
      %v463 = vrsqrt.pop %v459
      %v464 = vmul.f32 %v432, %v460
      %v465 = vmul.f32 %v433, %v461
      %v466 = vmul.f32 %v434, %v462
      %v467 = vmul.f32 %v435, %v463
      %v469 = vlaneseq
      %v470 = vshrl.u32 %v469, 7
      %v471 = vsub.s32 0, %v470
      %v472 = vrot.slane %v412, %v471
      %v474 = vmul.f32 %v464, %v472
      %v475 = vmul.f32 %v465, %v472
      %v476 = vmul.f32 %v466, %v472
      %v477 = vmul.f32 %v467, %v472
      %v479 = vlaneseq
      %v480 = vshrl.u32 %v479, 7
      %v481 = vsub.s32 0, %v480
      %v482 = vrot.slane %v413, %v481
      %v484 = vadd.f32 %v474, %v482
      %v485 = vadd.f32 %v475, %v482
      %v486 = vadd.f32 %v476, %v482
      %v487 = vadd.f32 %v477, %v482
      %488 = vst.msk [vmem:[%s311] sm:$0xff] %vm414, %v484
      %489 = vst.msk [vmem:[%s311 + $0x8] sm:$0xff] %vm414, %v485
      %490 = vst.msk [vmem:[%s311 + $0x10] sm:$0xff] %vm414, %v486
      %491 = vst.msk [vmem:[%s311 + $0x18] sm:$0xff] %vm414, %v487
      %p492 = scmp.eq.s32.totalorder %s22, 0
      // Predicated region
      $region45: #{_lambda_.8} parent=43 // pred_check
        %p493 = pneg %p492
      $region46: #{_lambda_.8} parent=43 // pred_check_branch
        %495 = sbr.rel (%p493) target = $region48
      $region47: #{_lambda_.8} parent=43 // pred_region
        %v496 = vld [vmem:[%s2] sm:$0x1]
        %v497 = vld [vmem:[%s301] sm:$0x1]
        %v498 = vadd.f32 %v496, %v497
        %v499 = vld [vmem:[%s4] sm:$0x1]
        %v500 = vld [vmem:[%s5] sm:$0x1]
        %vm501 = vcmask 253952
        %v502 = vsel %vm501, %v498, 0.0
        %503 = vadd.xlane.f32.xlu0 %v502
        %v504 = vpop.xlane.xlu0 %503
        %v505 = vmul.f32 %v504, %v427
        %v506 = vsub.f32 %v498, %v505
        %v507 = vmul.f32 %v506, %v506
        %v508 = vsel %vm501, %v507, 0.0
        %509 = vadd.xlane.f32.xlu0 %v508
        %v510 = vpop.xlane.xlu0 %509
        %v511 = vmul.f32 %v510, %v427
        %v512 = vadd.f32 %v511, 1e-05
        %v513 = vrsqrt.pop %v512
        %v514 = vmul.f32 %v506, %v513
        %v515 = vmul.f32 %v514, %v499
        %v516 = vadd.f32 %v515, %v500
        %517 = vst.msk [vmem:[%s311] sm:$0x1] %vm501, %v516
      $region48: #{_lambda_.8} parent=43 // pred_fallthru
        _
      %s518 = smul.u32 4, %s22
      %p519 = scmp.lt.s32.totalorder %s21, 1
      %s520 = scalar_select %p519, %s21, 1
      %p521 = scmp.lt.s32.totalorder %s518, 3
      %s522 = scalar_select %p521, %s518, 3
      %s523 = smul.addr %s520, 4
      %s524 = sadd.s32 %s522, %s523
      %s525 = smul.addr %s524, 8
      %s526 = scalar_lea.vmem %s6, %s525
      // Predicated region
      $region49: #{_lambda_.8} parent=43 // pred_check
        %p527 = pneg %p187
      $region50: #{_lambda_.8} parent=43 // pred_check_branch
        %529 = sbr.rel (%p527) target = $region52
      $region51: #{_lambda_.8} parent=43 // pred_region
        %s530 = smul.u32 4, %s22
      $region52: #{_lambda_.8} parent=43 // pred_fallthru
        _
    $region44: #{_lambda_.8} parent=5 // pred_fallthru
      _
    %p531 = scmp.le.s32.totalorder 2, %s12
    // Predicated region
    $region53: #{_lambda_.8} parent=5 // pred_check
      %p532 = pneg %p531
    $region54: #{_lambda_.8} parent=5 // pred_check_branch
      %534 = sbr.rel (%p532) target = $region56
    $region55: #{_lambda_.8} parent=5 // pred_region
      %s535 = ssub.s32 %s12, 2
      // Predicated region
      $region57: #{_lambda_.8} parent=55 // pred_check
        %p536 = pneg %p193
      $region58: #{_lambda_.8} parent=55 // pred_check_branch
        %538 = sbr.rel (%p536) target = $region60
      $region59: #{_lambda_.8} parent=55 // pred_region
        %s539 = smul.u32 4, %s24
        %p540 = scmp.lt.s32.totalorder %s23, 1
        %s541 = scalar_select %p540, %s23, 1
        %p542 = scmp.lt.s32.totalorder %s539, 3
        %s543 = scalar_select %p542, %s539, 3
        %s544 = smul.addr %s541, 4
        %s545 = sadd.s32 %s543, %s544
        %s546 = smul.addr %s545, 8
        %s547 = scalar_lea.vmem %s6, %s546
      $region60: #{_lambda_.8} parent=55 // pred_fallthru
        _
    $region56: #{_lambda_.8} parent=5 // pred_fallthru
      _
  $region6: #{_lambda_.8} parent=0 // loop_footer
    %s16 = sadd.s32 1, %s12
  $region7: #{_lambda_.8} parent=0 // loop_footer_branch
    %11 = sbr.rel target = $region3
  $region8: #{_lambda_.8} parent=0 // loop_exit
    _

// kernel: _lambda_.9
$region0: #{_lambda_.9}
  #allocation0 [shape = 'u32[]', space=smem, size = 0x4, offset = 0x4, fixed_abs, tag = 'smem constant byte address 0x4 - core index']
  #allocation1 [shape = 'u32[144,128]{1,0:T(1,128)}', space=vmem, size = 0x12000, scoped, tag = 'internal scratch']
  %s0 = inlined_call_operand.vmem [shape: f32[2,32,32], index: 0, kind: input, shape index: {}]
  %s1 = inlined_call_operand.vmem [shape: f32[1,32], index: 1, kind: input, shape index: {}]
  %s2 = inlined_call_operand.vmem [shape: f32[1,32], index: 2, kind: input, shape index: {}]
  %s3 = inlined_call_operand.vmem [shape: bf16[32,96], index: 3, kind: input, shape index: {}]
  %s4 = inlined_call_operand.vmem [shape: f32[1,96], index: 4, kind: input, shape index: {}]
  %s5 = inlined_call_operand.vmem [shape: bf16[2,32,32], index: 5, kind: output, shape index: {0}]
  %s6 = inlined_call_operand.vmem [shape: bf16[2,32,32], index: 6, kind: output, shape index: {1}]
  %s7 = inlined_call_operand.vmem [shape: bf16[2,32,32], index: 7, kind: output, shape index: {2}]
  %8 = xla_tuple %s5, %s6, %s7
  %s9 = sld [smem:[#allocation0]]
  $region69: #{_lambda_.9} parent=0
    _
  %s11 = ssub.s32 1, %s9
  %s12 = scalar_select 0, %s11, %s9
  loop: start=0, step=1, limit=4
  $region2: #{_lambda_.9} parent=0 // loop_pre_header
    _
  $region3: #{_lambda_.9} parent=0 // loop_header
    %s14 = sphi 0, %s18
    %p15 = scmp.ge.s32.totalorder %s14, 4
    %s21 = sphi 0, %s33
    %s22 = sphi 0, %s29
    %s23 = sphi 0, %s21
    %s24 = sphi 0, %s22
    %s25 = sphi 0, %s23
    %s26 = sphi 0, %s24
    %s38 = sphi 0, %s40
    %s41 = sphi 0, %s38
    %s42 = sphi 0, %s41
    %s58 = sphi 0, %s42
    %s62 = sphi 0, %s62
    %s64 = sphi 0, %s62
    %s65 = sphi 0, %s64
    %s79 = sphi 0, %s65
    %s83 = sphi 0, %s83
    %s85 = sphi 0, %s83
    %s86 = sphi 0, %s85
    %s100 = sphi 0, %s86
    %s104 = sphi 0, %s104
    %s106 = sphi 0, %s104
    %s107 = sphi 0, %s106
    %s121 = sphi 0, %s107
    %s125 = sphi 0, %s125
    %s127 = sphi 0, %s125
    %s128 = sphi 0, %s127
    %s142 = sphi 0, %s128
    %s150 = sphi 0, %s152
    %s153 = sphi 0, %s150
    %s154 = sphi 0, %s153
    %s170 = sphi 0, %s154
    %s178 = sphi 0, %s180
    %s181 = sphi 0, %s178
    %s182 = sphi 0, %s181
    %s198 = sphi 0, %s182
    %s206 = sphi 0, %s208
    %s209 = sphi 0, %s206
    %s210 = sphi 0, %s209
    %s226 = sphi 0, %s210
  $region4: #{_lambda_.9} parent=0 // loop_header_branch
    %17 = sbr.rel (%p15) target = $region8
  $region5: #{_lambda_.9} parent=0 // loop_body
    %s19 = ssub.s32 %s14, 1
    %s20 = ssub.s32 %s14, 2
    %s27 = sadd.s32 1, %s22
    %p28 = scmp.ge.s32.totalorder %s27, 1
    %s29 = scalar_select %p28, 0, %s27
    %s30 = sadd.s32 1, %s21
    %s31 = scalar_select %p28, %s30, %s21
    %p32 = scmp.ge.s32.totalorder %s31, 2
    %s33 = scalar_select %p32, 0, %s31
    %s34 = ssub.s32 %s21, %s33
    %s35 = ssub.s32 %s22, %s29
    %s36 = sor.u32 %s34, %s35
    %p37 = scmp.eq.s32.totalorder %s36, 0
    %s39 = sadd.s32 %s38, 1
    %s40 = scalar_select %p37, %s38, %s39
    %p43 = pneg %p37
    %p44 = scmp.eq.s32.totalorder %s14, 1
    %p45 = por %p43, %p44
    %p46 = scmp.ne.s32.totalorder %s38, %s41
    %p47 = scmp.eq.s32.totalorder %s14, 0
    %p48 = por %p46, %p47
    %p49 = scmp.ne.s32.totalorder %s38, %s41
    %p50 = scmp.eq.s32.totalorder %s19, 1
    %p51 = por %p49, %p50
    %p52 = scmp.ne.s32.totalorder %s41, %s42
    %p53 = scmp.eq.s32.totalorder %s19, 0
    %p54 = por %p52, %p53
    %p55 = scmp.ne.s32.totalorder %s41, %s42
    %p56 = scmp.eq.s32.totalorder %s20, 1
    %p57 = por %p55, %p56
    %p59 = scmp.ne.s32.totalorder %s42, %s58
    %p60 = scmp.eq.s32.totalorder %s20, 0
    %p61 = por %p59, %p60
    %s63 = sadd.s32 %s62, 1
    %p66 = scmp.eq.s32.totalorder %s14, 1
    %p67 = scmp.ne.s32.totalorder %s62, %s64
    %p68 = scmp.eq.s32.totalorder %s14, 0
    %p69 = por %p67, %p68
    %p70 = scmp.ne.s32.totalorder %s62, %s64
    %p71 = scmp.eq.s32.totalorder %s19, 1
    %p72 = por %p70, %p71
    %p73 = scmp.ne.s32.totalorder %s64, %s65
    %p74 = scmp.eq.s32.totalorder %s19, 0
    %p75 = por %p73, %p74
    %p76 = scmp.ne.s32.totalorder %s64, %s65
    %p77 = scmp.eq.s32.totalorder %s20, 1
    %p78 = por %p76, %p77
    %p80 = scmp.ne.s32.totalorder %s65, %s79
    %p81 = scmp.eq.s32.totalorder %s20, 0
    %p82 = por %p80, %p81
    %s84 = sadd.s32 %s83, 1
    %p87 = scmp.eq.s32.totalorder %s14, 1
    %p88 = scmp.ne.s32.totalorder %s83, %s85
    %p89 = scmp.eq.s32.totalorder %s14, 0
    %p90 = por %p88, %p89
    %p91 = scmp.ne.s32.totalorder %s83, %s85
    %p92 = scmp.eq.s32.totalorder %s19, 1
    %p93 = por %p91, %p92
    %p94 = scmp.ne.s32.totalorder %s85, %s86
    %p95 = scmp.eq.s32.totalorder %s19, 0
    %p96 = por %p94, %p95
    %p97 = scmp.ne.s32.totalorder %s85, %s86
    %p98 = scmp.eq.s32.totalorder %s20, 1
    %p99 = por %p97, %p98
    %p101 = scmp.ne.s32.totalorder %s86, %s100
    %p102 = scmp.eq.s32.totalorder %s20, 0
    %p103 = por %p101, %p102
    %s105 = sadd.s32 %s104, 1
    %p108 = scmp.eq.s32.totalorder %s14, 1
    %p109 = scmp.ne.s32.totalorder %s104, %s106
    %p110 = scmp.eq.s32.totalorder %s14, 0
    %p111 = por %p109, %p110
    %p112 = scmp.ne.s32.totalorder %s104, %s106
    %p113 = scmp.eq.s32.totalorder %s19, 1
    %p114 = por %p112, %p113
    %p115 = scmp.ne.s32.totalorder %s106, %s107
    %p116 = scmp.eq.s32.totalorder %s19, 0
    %p117 = por %p115, %p116
    %p118 = scmp.ne.s32.totalorder %s106, %s107
    %p119 = scmp.eq.s32.totalorder %s20, 1
    %p120 = por %p118, %p119
    %p122 = scmp.ne.s32.totalorder %s107, %s121
    %p123 = scmp.eq.s32.totalorder %s20, 0
    %p124 = por %p122, %p123
    %s126 = sadd.s32 %s125, 1
    %p129 = scmp.eq.s32.totalorder %s14, 1
    %p130 = scmp.ne.s32.totalorder %s125, %s127
    %p131 = scmp.eq.s32.totalorder %s14, 0
    %p132 = por %p130, %p131
    %p133 = scmp.ne.s32.totalorder %s125, %s127
    %p134 = scmp.eq.s32.totalorder %s19, 1
    %p135 = por %p133, %p134
    %p136 = scmp.ne.s32.totalorder %s127, %s128
    %p137 = scmp.eq.s32.totalorder %s19, 0
    %p138 = por %p136, %p137
    %p139 = scmp.ne.s32.totalorder %s127, %s128
    %p140 = scmp.eq.s32.totalorder %s20, 1
    %p141 = por %p139, %p140
    %p143 = scmp.ne.s32.totalorder %s128, %s142
    %p144 = scmp.eq.s32.totalorder %s20, 0
    %p145 = por %p143, %p144
    %s146 = ssub.s32 %s21, %s33
    %s147 = ssub.s32 %s22, %s29
    %s148 = sor.u32 %s146, %s147
    %p149 = scmp.eq.s32.totalorder %s148, 0
    %s151 = sadd.s32 %s150, 1
    %s152 = scalar_select %p149, %s150, %s151
    %p155 = pneg %p149
    %p156 = scmp.eq.s32.totalorder %s14, 1
    %p157 = por %p155, %p156
    %p158 = scmp.ne.s32.totalorder %s150, %s153
    %p159 = scmp.eq.s32.totalorder %s14, 0
    %p160 = por %p158, %p159
    %p161 = scmp.ne.s32.totalorder %s150, %s153
    %p162 = scmp.eq.s32.totalorder %s19, 1
    %p163 = por %p161, %p162
    %p164 = scmp.ne.s32.totalorder %s153, %s154
    %p165 = scmp.eq.s32.totalorder %s19, 0
    %p166 = por %p164, %p165
    %p167 = scmp.ne.s32.totalorder %s153, %s154
    %p168 = scmp.eq.s32.totalorder %s20, 1
    %p169 = por %p167, %p168
    %p171 = scmp.ne.s32.totalorder %s154, %s170
    %p172 = scmp.eq.s32.totalorder %s20, 0
    %p173 = por %p171, %p172
    %s174 = ssub.s32 %s21, %s33
    %s175 = ssub.s32 %s22, %s29
    %s176 = sor.u32 %s174, %s175
    %p177 = scmp.eq.s32.totalorder %s176, 0
    %s179 = sadd.s32 %s178, 1
    %s180 = scalar_select %p177, %s178, %s179
    %p183 = pneg %p177
    %p184 = scmp.eq.s32.totalorder %s14, 1
    %p185 = por %p183, %p184
    %p186 = scmp.ne.s32.totalorder %s178, %s181
    %p187 = scmp.eq.s32.totalorder %s14, 0
    %p188 = por %p186, %p187
    %p189 = scmp.ne.s32.totalorder %s178, %s181
    %p190 = scmp.eq.s32.totalorder %s19, 1
    %p191 = por %p189, %p190
    %p192 = scmp.ne.s32.totalorder %s181, %s182
    %p193 = scmp.eq.s32.totalorder %s19, 0
    %p194 = por %p192, %p193
    %p195 = scmp.ne.s32.totalorder %s181, %s182
    %p196 = scmp.eq.s32.totalorder %s20, 1
    %p197 = por %p195, %p196
    %p199 = scmp.ne.s32.totalorder %s182, %s198
    %p200 = scmp.eq.s32.totalorder %s20, 0
    %p201 = por %p199, %p200
    %s202 = ssub.s32 %s21, %s33
    %s203 = ssub.s32 %s22, %s29
    %s204 = sor.u32 %s202, %s203
    %p205 = scmp.eq.s32.totalorder %s204, 0
    %s207 = sadd.s32 %s206, 1
    %s208 = scalar_select %p205, %s206, %s207
    %p211 = pneg %p205
    %p212 = scmp.eq.s32.totalorder %s14, 1
    %p213 = por %p211, %p212
    %p214 = scmp.ne.s32.totalorder %s206, %s209
    %p215 = scmp.eq.s32.totalorder %s14, 0
    %p216 = por %p214, %p215
    %p217 = scmp.ne.s32.totalorder %s206, %s209
    %p218 = scmp.eq.s32.totalorder %s19, 1
    %p219 = por %p217, %p218
    %p220 = scmp.ne.s32.totalorder %s209, %s210
    %p221 = scmp.eq.s32.totalorder %s19, 0
    %p222 = por %p220, %p221
    %p223 = scmp.ne.s32.totalorder %s209, %s210
    %p224 = scmp.eq.s32.totalorder %s20, 1
    %p225 = por %p223, %p224
    %p227 = scmp.ne.s32.totalorder %s210, %s226
    %p228 = scmp.eq.s32.totalorder %s20, 0
    %p229 = por %p227, %p228
    %p230 = scmp.le.s32.totalorder 1, %s14
    %p231 = scmp.lt.s32.totalorder %s14, 3
    %p232 = pnand %p230, %p231
    %p233 = pneg %p232
    // Predicated region
    $region9: #{_lambda_.9} parent=5 // pred_check
      _
    $region10: #{_lambda_.9} parent=5 // pred_check_branch
      %235 = sbr.rel (%p232) target = $region12
    $region11: #{_lambda_.9} parent=5 // pred_region
      %s236 = ssub.s32 %s14, 1
      // Predicated region
      $region13: #{_lambda_.9} parent=11 // pred_check
        %p237 = pneg %p75
      $region14: #{_lambda_.9} parent=11 // pred_check_branch
        %239 = sbr.rel (%p237) target = $region16
      $region15: #{_lambda_.9} parent=11 // pred_region
        _
      $region16: #{_lambda_.9} parent=11 // pred_fallthru
        _
      // Predicated region
      $region17: #{_lambda_.9} parent=11 // pred_check
        %p240 = pneg %p96
      $region18: #{_lambda_.9} parent=11 // pred_check_branch
        %242 = sbr.rel (%p240) target = $region20
      $region19: #{_lambda_.9} parent=11 // pred_region
        _
      $region20: #{_lambda_.9} parent=11 // pred_fallthru
        _
      // Predicated region
      $region21: #{_lambda_.9} parent=11 // pred_check
        %p243 = pneg %p117
      $region22: #{_lambda_.9} parent=11 // pred_check_branch
        %245 = sbr.rel (%p243) target = $region24
      $region23: #{_lambda_.9} parent=11 // pred_region
        _
      $region24: #{_lambda_.9} parent=11 // pred_fallthru
        _
      // Predicated region
      $region25: #{_lambda_.9} parent=11 // pred_check
        %p246 = pneg %p138
      $region26: #{_lambda_.9} parent=11 // pred_check_branch
        %248 = sbr.rel (%p246) target = $region28
      $region27: #{_lambda_.9} parent=11 // pred_region
        _
      $region28: #{_lambda_.9} parent=11 // pred_fallthru
        _
    $region12: #{_lambda_.9} parent=5 // pred_fallthru
      _
    %p249 = scmp.lt.s32.totalorder %s14, 2
    // Predicated region
    $region29: #{_lambda_.9} parent=5 // pred_check
      %p250 = pneg %p249
    $region30: #{_lambda_.9} parent=5 // pred_check_branch
      %252 = sbr.rel (%p250) target = $region32
    $region31: #{_lambda_.9} parent=5 // pred_region
      // Predicated region
      $region33: #{_lambda_.9} parent=31 // pred_check
        %p253 = pneg %p48
      $region34: #{_lambda_.9} parent=31 // pred_check_branch
        %255 = sbr.rel (%p253) target = $region36
      $region35: #{_lambda_.9} parent=31 // pred_region
        %s256 = smul.u32 4, %s22
        %p257 = scmp.lt.s32.totalorder %s21, 1
        %s258 = scalar_select %p257, %s21, 1
        %p259 = scmp.lt.s32.totalorder %s256, 3
        %s260 = scalar_select %p259, %s256, 3
        %s261 = smul.addr %s258, 4
        %s262 = sadd.s32 %s260, %s261
        %s263 = smul.addr %s262, 8
        %s264 = scalar_lea.vmem %s0, %s263
        %s265 = smul.u32 4, %s22
      $region36: #{_lambda_.9} parent=31 // pred_fallthru
        _
    $region32: #{_lambda_.9} parent=5 // pred_fallthru
      _
    %p266 = scmp.le.s32.totalorder 1, %s14
    %p267 = scmp.lt.s32.totalorder %s14, 3
    %p268 = pnand %p266, %p267
    %p269 = pneg %p268
    // Predicated region
    $region37: #{_lambda_.9} parent=5 // pred_check
      _
    $region38: #{_lambda_.9} parent=5 // pred_check_branch
      %271 = sbr.rel (%p268) target = $region40
    $region39: #{_lambda_.9} parent=5 // pred_region
      %s272 = ssub.s32 %s14, 1
      %s273 = smul.u32 4, %s24
      %p274 = scmp.lt.s32.totalorder %s23, 1
      %s275 = scalar_select %p274, %s23, 1
      %p276 = scmp.lt.s32.totalorder %s273, 3
      %s277 = scalar_select %p276, %s273, 3
      %s278 = smul.addr %s275, 4
      %s279 = sadd.s32 %s277, %s278
      %s280 = smul.addr %s279, 8
      %s281 = scalar_lea.vmem %s0, %s280
      %p282 = pneg %p54
      %p283 = pneg %p51
      %p284 = pneg %p75
      %p285 = pneg %p72
      %p286 = pneg %p96
      %p287 = pneg %p93
      %p288 = pneg %p117
      %p289 = pneg %p114
      %p290 = pneg %p138
      %p291 = pneg %p135
      %p292 = pneg %p166
      %p293 = pneg %p163
      %s294 = smul.u32 4, %s24
      %p295 = scmp.lt.s32.totalorder %s23, 1
      %s296 = scalar_select %p295, %s23, 1
      %p297 = scmp.lt.s32.totalorder %s294, 3
      %s298 = scalar_select %p297, %s294, 3
      %s299 = smul.addr %s296, 4
      %s300 = sadd.s32 %s298, %s299
      %s301 = smul.addr %s300, 4
      %s302 = scalar_lea.vmem %s5, %s301
      %p303 = pneg %p194
      %p304 = pneg %p191
      %s305 = smul.u32 4, %s24
      %p306 = scmp.lt.s32.totalorder %s23, 1
      %s307 = scalar_select %p306, %s23, 1
      %p308 = scmp.lt.s32.totalorder %s305, 3
      %s309 = scalar_select %p308, %s305, 3
      %s310 = smul.addr %s307, 4
      %s311 = sadd.s32 %s309, %s310
      %s312 = smul.addr %s311, 4
      %s313 = scalar_lea.vmem %s6, %s312
      %p314 = pneg %p222
      %p315 = pneg %p219
      %s316 = smul.u32 4, %s24
      %p317 = scmp.lt.s32.totalorder %s23, 1
      %s318 = scalar_select %p317, %s23, 1
      %p319 = scmp.lt.s32.totalorder %s316, 3
      %s320 = scalar_select %p319, %s316, 3
      %s321 = smul.addr %s318, 4
      %s322 = sadd.s32 %s320, %s321
      %s323 = smul.addr %s322, 4
      %s324 = scalar_lea.vmem %s7, %s323
      %s325 = smul.u32 4, %s24
      %p326 = scmp.lt.s32.totalorder %s23, 1
      %s327 = scalar_select %p326, %s23, 1
      %p328 = scmp.lt.s32.totalorder %s325, 3
      %s329 = scalar_select %p328, %s325, 3
      %s330 = smul.addr %s327, 4
      %s331 = sadd.s32 %s329, %s330
      %s332 = smul.addr %s331, 8
      %s333 = scalar_lea.vmem %s0, %s332
      %s334 = smul.u32 4, %s24
      %s335 = smul.u32 4, %s24
      %p336 = scmp.lt.s32.totalorder %s23, 1
      %s337 = scalar_select %p336, %s23, 1
      %p338 = scmp.lt.s32.totalorder %s335, 3
      %s339 = scalar_select %p338, %s335, 3
      %s340 = smul.addr %s337, 4
      %s341 = sadd.s32 %s339, %s340
      %s342 = smul.addr %s341, 4
      %s343 = scalar_lea.vmem %s5, %s342
      %s344 = smul.u32 4, %s24
      %s345 = smul.u32 4, %s24
      %p346 = scmp.lt.s32.totalorder %s23, 1
      %s347 = scalar_select %p346, %s23, 1
      %p348 = scmp.lt.s32.totalorder %s345, 3
      %s349 = scalar_select %p348, %s345, 3
      %s350 = smul.addr %s347, 4
      %s351 = sadd.s32 %s349, %s350
      %s352 = smul.addr %s351, 4
      %s353 = scalar_lea.vmem %s6, %s352
      %s354 = smul.u32 4, %s24
      %s355 = smul.u32 4, %s24
      %p356 = scmp.lt.s32.totalorder %s23, 1
      %s357 = scalar_select %p356, %s23, 1
      %p358 = scmp.lt.s32.totalorder %s355, 3
      %s359 = scalar_select %p358, %s355, 3
      %s360 = smul.addr %s357, 4
      %s361 = sadd.s32 %s359, %s360
      %s362 = smul.addr %s361, 4
      %s363 = scalar_lea.vmem %s7, %s362
      %s364 = smul.u32 4, %s24
      %v366 = vld [vmem:[%s333] sm:$0xff]
      %v367 = vld [vmem:[%s333 + $0x8] sm:$0xff]
      %v368 = vld [vmem:[%s333 + $0x10] sm:$0xff]
      %v369 = vld [vmem:[%s333 + $0x18] sm:$0xff]
      %v370 = vld [vmem:[%s1] sm:$0x1]
      %v371 = vld [vmem:[%s2] sm:$0x1]
      %vm372 = vcmask 261120
      %v373 = vsel %vm372, %v366, 0.0
      %374 = vadd.xlane.f32.xlu0 %v373
      %v375 = vpop.xlane.xlu0 %374
      %v376 = vsel %vm372, %v367, 0.0
      %377 = vadd.xlane.f32.xlu0 %v376
      %v378 = vpop.xlane.xlu0 %377
      %v379 = vsel %vm372, %v368, 0.0
      %380 = vadd.xlane.f32.xlu0 %v379
      %v381 = vpop.xlane.xlu0 %380
      %v382 = vsel %vm372, %v369, 0.0
      %383 = vadd.xlane.f32.xlu0 %v382
      %v384 = vpop.xlane.xlu0 %383
      %v385 = vrcp.pop 32.0
      %v386 = vmul.f32 %v375, %v385
      %v387 = vmul.f32 %v378, %v385
      %v388 = vmul.f32 %v381, %v385
      %v389 = vmul.f32 %v384, %v385
      %v390 = vsub.f32 %v366, %v386
      %v391 = vsub.f32 %v367, %v387
      %v392 = vsub.f32 %v368, %v388
      %v393 = vsub.f32 %v369, %v389
      %v394 = vmul.f32 %v390, %v390
      %v395 = vmul.f32 %v391, %v391
      %v396 = vmul.f32 %v392, %v392
      %v397 = vmul.f32 %v393, %v393
      %v398 = vsel %vm372, %v394, 0.0
      %399 = vadd.xlane.f32.xlu0 %v398
      %v400 = vpop.xlane.xlu0 %399
      %v401 = vsel %vm372, %v395, 0.0
      %402 = vadd.xlane.f32.xlu0 %v401
      %v403 = vpop.xlane.xlu0 %402
      %v404 = vsel %vm372, %v396, 0.0
      %405 = vadd.xlane.f32.xlu0 %v404
      %v406 = vpop.xlane.xlu0 %405
      %v407 = vsel %vm372, %v397, 0.0
      %408 = vadd.xlane.f32.xlu0 %v407
      %v409 = vpop.xlane.xlu0 %408
      %v410 = vmul.f32 %v400, %v385
      %v411 = vmul.f32 %v403, %v385
      %v412 = vmul.f32 %v406, %v385
      %v413 = vmul.f32 %v409, %v385
      %v414 = vadd.f32 %v410, 1e-05
      %v415 = vadd.f32 %v411, 1e-05
      %v416 = vadd.f32 %v412, 1e-05
      %v417 = vadd.f32 %v413, 1e-05
      %v418 = vrsqrt.pop %v414
      %v419 = vrsqrt.pop %v415
      %v420 = vrsqrt.pop %v416
      %v421 = vrsqrt.pop %v417
      %v422 = vmul.f32 %v390, %v418
      %v423 = vmul.f32 %v391, %v419
      %v424 = vmul.f32 %v392, %v420
      %v425 = vmul.f32 %v393, %v421
      %v427 = vlaneseq
      %v428 = vshrl.u32 %v427, 7
      %v429 = vsub.s32 0, %v428
      %v430 = vrot.slane %v370, %v429
      %v432 = vmul.f32 %v422, %v430
      %v433 = vmul.f32 %v423, %v430
      %v434 = vmul.f32 %v424, %v430
      %v435 = vmul.f32 %v425, %v430
      %v437 = vlaneseq
      %v438 = vshrl.u32 %v437, 7
      %v439 = vsub.s32 0, %v438
      %v440 = vrot.slane %v371, %v439
      %v442 = vadd.f32 %v432, %v440
      %v443 = vadd.f32 %v433, %v440
      %v444 = vadd.f32 %v434, %v440
      %v445 = vadd.f32 %v435, %v440
      %v446 = vpack.c.bf16 %v443, %v442
      %v447 = vpack.c.bf16 %v445, %v444
      %v448 = vld [vmem:[%s3] sm:$0xf]
      %v449 = vld [vmem:[%s3 + $0x4] sm:$0xf]
      %v450 = vld [vmem:[%s3 + $0x8] sm:$0xf]
      %v451 = vld [vmem:[%s3 + $0xc] sm:$0xf]
      %v452 = vld [vmem:[%s4] sm:$0x1]
      %v454 = vlaneseq
      %v455 = vshrl.u32 %v454, 7
      %v456 = vsub.s32 0, %v455
      %v457 = vrot.slane %v452, %v456
      %v463 = vunpack.c.l.b16 %v448
      %v464 = vunpack.c.l.b16 %v449
      %v465 = vunpack.c.l.b16 %v450
      %v466 = vunpack.c.l.b16 %v451
      %v467 = vpack.c.b16 %v464, %v463
      %v468 = vpack.c.b16 %v466, %v465
      %v472 = vsel %vm372, %v446, 0
      %v475 = vsel %vm372, %v447, 0
      %477 = vmatprep.subr.bf16.mxu0 0
      %478 = vmatpush1.bf16.msra.mxu0 0
      %479 = vmatprep.subr.bf16.mxu0 0
      %480 = vmatpush1.bf16.msra.mxu0 0
      %481 = vmatprep.subr.bf16.mxu0 0
      %482 = vmatpush1.bf16.msra.mxu0 0
      %483 = vmatprep.subr.bf16.mxu0 0
      %484 = vmatpush1.bf16.msra.mxu0 0
      %485 = vmatprep.subr.bf16.mxu0 0
      %486 = vmatpush1.bf16.msra.mxu0 0
      %487 = vmatprep.subr.bf16.mxu0 0
      %488 = vmatpush1.bf16.msra.mxu0 0
      %489 = vmatprep.subr.bf16.mxu0 0
      %490 = vmatpush1.bf16.msra.mxu0 %v468
      %491 = vmatprep.subr.bf16.mxu0 0
      %492 = vmatpush1.bf16.msra.mxu0 %v467
      %493 = vmatprep.subr.bf16.mxu0 0
      %494 = vmatpush2.bf16.msra.mxu0 0
      %495 = vmatprep.subr.bf16.mxu0 0
      %496 = vmatpush2.bf16.msra.mxu0 0
      %497 = vmatprep.subr.bf16.mxu0 0
      %498 = vmatpush2.bf16.msra.mxu0 0
      %499 = vmatprep.subr.bf16.mxu0 0
      %500 = vmatpush2.bf16.msra.mxu0 0
      %501 = vmatprep.subr.bf16.mxu0 0
      %502 = vmatpush2.bf16.msra.mxu0 0
      %503 = vmatprep.subr.bf16.mxu0 0
      %504 = vmatpush2.bf16.msra.mxu0 0
      %505 = vmatprep.subr.bf16.mxu0 0
      %506 = vmatpush2.bf16.msra.mxu0 0
      %507 = vmatprep.subr.bf16.mxu0 0
      %508 = vmatpush2.bf16.msra.mxu0 0
      %509 = vmatprep.mubr.bf16.mxu0 0
      %510 = vmatmul.mubr.bf16.gmra.mxu0 %v472
      %v511 = vpop.f32.mrf.mxu0
      %v512 = vadd.f32 %v457, %v511
      %v513 = vpop.f32.mrf.mxu0
      %v514 = vpop.f32.mrf.mxu0
      %v515 = vadd.f32 %v457, %v514
      %v516 = vpop.f32.mrf.mxu0
      %517 = vmatprep.mubr.bf16.mxu0 0
      %518 = vmatmul.mubr.bf16.gmra.mxu0 %v475
      %v519 = vpop.f32.mrf.mxu0
      %v520 = vadd.f32 %v457, %v519
      %v521 = vpop.f32.mrf.mxu0
      %v522 = vpop.f32.mrf.mxu0
      %v523 = vadd.f32 %v457, %v522
      %v524 = vpop.f32.mrf.mxu0
      %525 = vdwg.mxu0
      %v526 = vpack.c.bf16 %v515, %v512
      %v527 = vpack.c.bf16 %v523, %v520
      %v530 = vunpack.c.l.b16 %v526
      %v531 = vunpack.c.h.b16 %v526
      %v532 = vunpack.c.l.b16 %v527
      %v533 = vunpack.c.h.b16 %v527
      %v534 = vpack.c.b16 %v530, %v530
      %v535 = vpack.c.b16 %v531, %v531
      %v536 = vpack.c.b16 %v532, %v532
      %v537 = vpack.c.b16 %v533, %v533
      %vm542 = vcmask 257024
      %543 = vst.msk [vmem:[%s343] sm:$0xf] %vm542, %v534
      %544 = vst.msk [vmem:[%s343 + $0x4] sm:$0xf] %vm542, %v535
      %545 = vst.msk [vmem:[%s343 + $0x8] sm:$0xf] %vm542, %v536
      %546 = vst.msk [vmem:[%s343 + $0xc] sm:$0xf] %vm542, %v537
      %547 = vrot.lane.b32.xlu0 %v534, 96
      %v548 = vpop.permute.xlu0 %547
      %549 = vrot.lane.b32.xlu0 %v535, 96
      %v550 = vpop.permute.xlu0 %549
      %551 = vrot.lane.b32.xlu0 %v536, 96
      %v552 = vpop.permute.xlu0 %551
      %553 = vrot.lane.b32.xlu0 %v537, 96
      %v554 = vpop.permute.xlu0 %553
      %559 = vst.msk [vmem:[%s353] sm:$0xf] %vm542, %v548
      %560 = vst.msk [vmem:[%s353 + $0x4] sm:$0xf] %vm542, %v550
      %561 = vst.msk [vmem:[%s353 + $0x8] sm:$0xf] %vm542, %v552
      %562 = vst.msk [vmem:[%s353 + $0xc] sm:$0xf] %vm542, %v554
      %563 = vrot.lane.b32.xlu0 %v534, 64
      %v564 = vpop.permute.xlu0 %563
      %565 = vrot.lane.b32.xlu0 %v535, 64
      %v566 = vpop.permute.xlu0 %565
      %567 = vrot.lane.b32.xlu0 %v536, 64
      %v568 = vpop.permute.xlu0 %567
      %569 = vrot.lane.b32.xlu0 %v537, 64
      %v570 = vpop.permute.xlu0 %569
      %575 = vst.msk [vmem:[%s363] sm:$0xf] %vm542, %v564
      %576 = vst.msk [vmem:[%s363 + $0x4] sm:$0xf] %vm542, %v566
      %577 = vst.msk [vmem:[%s363 + $0x8] sm:$0xf] %vm542, %v568
      %578 = vst.msk [vmem:[%s363 + $0xc] sm:$0xf] %vm542, %v570
      %s579 = smul.u32 4, %s24
      %p580 = scmp.lt.s32.totalorder %s23, 1
      %s581 = scalar_select %p580, %s23, 1
      %p582 = scmp.lt.s32.totalorder %s579, 3
      %s583 = scalar_select %p582, %s579, 3
      %s584 = smul.addr %s581, 4
      %s585 = sadd.s32 %s583, %s584
      %s586 = smul.addr %s585, 4
      %s587 = scalar_lea.vmem %s5, %s586
      %s588 = smul.u32 4, %s24
      %p589 = scmp.lt.s32.totalorder %s23, 1
      %s590 = scalar_select %p589, %s23, 1
      %p591 = scmp.lt.s32.totalorder %s588, 3
      %s592 = scalar_select %p591, %s588, 3
      %s593 = smul.addr %s590, 4
      %s594 = sadd.s32 %s592, %s593
      %s595 = smul.addr %s594, 4
      %s596 = scalar_lea.vmem %s6, %s595
      %s597 = smul.u32 4, %s24
      %p598 = scmp.lt.s32.totalorder %s23, 1
      %s599 = scalar_select %p598, %s23, 1
      %p600 = scmp.lt.s32.totalorder %s597, 3
      %s601 = scalar_select %p600, %s597, 3
      %s602 = smul.addr %s599, 4
      %s603 = sadd.s32 %s601, %s602
      %s604 = smul.addr %s603, 4
      %s605 = scalar_lea.vmem %s7, %s604
      // Predicated region
      $region41: #{_lambda_.9} parent=39 // pred_check
        %p606 = pneg %p163
      $region42: #{_lambda_.9} parent=39 // pred_check_branch
        %608 = sbr.rel (%p606) target = $region44
      $region43: #{_lambda_.9} parent=39 // pred_region
        %s609 = smul.u32 4, %s24
      $region44: #{_lambda_.9} parent=39 // pred_fallthru
        _
      // Predicated region
      $region45: #{_lambda_.9} parent=39 // pred_check
        %p610 = pneg %p191
      $region46: #{_lambda_.9} parent=39 // pred_check_branch
        %612 = sbr.rel (%p610) target = $region48
      $region47: #{_lambda_.9} parent=39 // pred_region
        %s613 = smul.u32 4, %s24
      $region48: #{_lambda_.9} parent=39 // pred_fallthru
        _
      // Predicated region
      $region49: #{_lambda_.9} parent=39 // pred_check
        %p614 = pneg %p219
      $region50: #{_lambda_.9} parent=39 // pred_check_branch
        %616 = sbr.rel (%p614) target = $region52
      $region51: #{_lambda_.9} parent=39 // pred_region
        %s617 = smul.u32 4, %s24
      $region52: #{_lambda_.9} parent=39 // pred_fallthru
        _
    $region40: #{_lambda_.9} parent=5 // pred_fallthru
      _
    %p618 = scmp.le.s32.totalorder 2, %s14
    // Predicated region
    $region53: #{_lambda_.9} parent=5 // pred_check
      %p619 = pneg %p618
    $region54: #{_lambda_.9} parent=5 // pred_check_branch
      %621 = sbr.rel (%p619) target = $region56
    $region55: #{_lambda_.9} parent=5 // pred_region
      %s622 = ssub.s32 %s14, 2
      // Predicated region
      $region57: #{_lambda_.9} parent=55 // pred_check
        %p623 = pneg %p169
      $region58: #{_lambda_.9} parent=55 // pred_check_branch
        %625 = sbr.rel (%p623) target = $region60
      $region59: #{_lambda_.9} parent=55 // pred_region
        %s626 = smul.u32 4, %s26
        %p627 = scmp.lt.s32.totalorder %s25, 1
        %s628 = scalar_select %p627, %s25, 1
        %p629 = scmp.lt.s32.totalorder %s626, 3
        %s630 = scalar_select %p629, %s626, 3
        %s631 = smul.addr %s628, 4
        %s632 = sadd.s32 %s630, %s631
        %s633 = smul.addr %s632, 4
        %s634 = scalar_lea.vmem %s5, %s633
      $region60: #{_lambda_.9} parent=55 // pred_fallthru
        _
      // Predicated region
      $region61: #{_lambda_.9} parent=55 // pred_check
        %p635 = pneg %p197
      $region62: #{_lambda_.9} parent=55 // pred_check_branch
        %637 = sbr.rel (%p635) target = $region64
      $region63: #{_lambda_.9} parent=55 // pred_region
        %s638 = smul.u32 4, %s26
        %p639 = scmp.lt.s32.totalorder %s25, 1
        %s640 = scalar_select %p639, %s25, 1
        %p641 = scmp.lt.s32.totalorder %s638, 3
        %s642 = scalar_select %p641, %s638, 3
        %s643 = smul.addr %s640, 4
        %s644 = sadd.s32 %s642, %s643
        %s645 = smul.addr %s644, 4
        %s646 = scalar_lea.vmem %s6, %s645
      $region64: #{_lambda_.9} parent=55 // pred_fallthru
        _
      // Predicated region
      $region65: #{_lambda_.9} parent=55 // pred_check
        %p647 = pneg %p225
      $region66: #{_lambda_.9} parent=55 // pred_check_branch
        %649 = sbr.rel (%p647) target = $region68
      $region67: #{_lambda_.9} parent=55 // pred_region
        %s650 = smul.u32 4, %s26
        %p651 = scmp.lt.s32.totalorder %s25, 1
        %s652 = scalar_select %p651, %s25, 1
        %p653 = scmp.lt.s32.totalorder %s650, 3
        %s654 = scalar_select %p653, %s650, 3
        %s655 = smul.addr %s652, 4
        %s656 = sadd.s32 %s654, %s655
        %s657 = smul.addr %s656, 4
        %s658 = scalar_lea.vmem %s7, %s657
      $region68: #{_lambda_.9} parent=55 // pred_fallthru
        _
    $region56: #{_lambda_.9} parent=5 // pred_fallthru
      _
  $region6: #{_lambda_.9} parent=0 // loop_footer
    %s18 = sadd.s32 1, %s14
  $region7: #{_lambda_.9} parent=0 // loop_footer_branch
    %13 = sbr.rel target = $region3
  $region8: #{_lambda_.9} parent=0 // loop_exit
    _

// kernel: _lambda_.11
$region0: #{_lambda_.11}
  #allocation0 [shape = 'u32[]', space=smem, size = 0x4, offset = 0x4, fixed_abs, tag = 'smem constant byte address 0x4 - core index']
  #allocation1 [shape = 'u32[144,128]{1,0:T(1,128)}', space=vmem, size = 0x12000, scoped, tag = 'internal scratch']
  %s0 = inlined_call_operand.vmem [shape: f32[2,32,32], index: 0, kind: input, shape index: {}, may-alias: {0,10}]
  %s1 = inlined_call_operand.vmem [shape: bf16[2,32,32], index: 1, kind: input, shape index: {}]
  %s2 = inlined_call_operand.vmem [shape: bf16[32,32], index: 2, kind: input, shape index: {}]
  %s3 = inlined_call_operand.vmem [shape: f32[1,32], index: 3, kind: input, shape index: {}]
  %s4 = inlined_call_operand.vmem [shape: f32[1,32], index: 4, kind: input, shape index: {}]
  %s5 = inlined_call_operand.vmem [shape: f32[1,32], index: 5, kind: input, shape index: {}]
  %s6 = inlined_call_operand.vmem [shape: bf16[32,64], index: 6, kind: input, shape index: {}]
  %s7 = inlined_call_operand.vmem [shape: f32[1,64], index: 7, kind: input, shape index: {}]
  %s8 = inlined_call_operand.vmem [shape: bf16[64,32], index: 8, kind: input, shape index: {}]
  %s9 = inlined_call_operand.vmem [shape: f32[1,32], index: 9, kind: input, shape index: {}]
  %s10 = inlined_call_operand.vmem [shape: f32[2,32,32], index: 10, kind: output, shape index: {}, may-alias: {0,10}]
  %s11 = sld [smem:[#allocation0]]
  $region73: #{_lambda_.11} parent=0
    _
  %s13 = ssub.s32 1, %s11
  %s14 = scalar_select 0, %s13, %s11
  loop: start=0, step=1, limit=4
  $region2: #{_lambda_.11} parent=0 // loop_pre_header
    _
  $region3: #{_lambda_.11} parent=0 // loop_header
    %s16 = sphi 0, %s20
    %p17 = scmp.ge.s32.totalorder %s16, 4
    %s23 = sphi 0, %s35
    %s24 = sphi 0, %s31
    %s25 = sphi 0, %s23
    %s26 = sphi 0, %s24
    %s27 = sphi 0, %s25
    %s28 = sphi 0, %s26
    %s40 = sphi 0, %s42
    %s43 = sphi 0, %s40
    %s44 = sphi 0, %s43
    %s60 = sphi 0, %s44
    %s68 = sphi 0, %s70
    %s71 = sphi 0, %s68
    %s72 = sphi 0, %s71
    %s88 = sphi 0, %s72
    %s92 = sphi 0, %s92
    %s94 = sphi 0, %s92
    %s95 = sphi 0, %s94
    %s109 = sphi 0, %s95
    %s113 = sphi 0, %s113
    %s115 = sphi 0, %s113
    %s116 = sphi 0, %s115
    %s130 = sphi 0, %s116
    %s134 = sphi 0, %s134
    %s136 = sphi 0, %s134
    %s137 = sphi 0, %s136
    %s151 = sphi 0, %s137
    %s155 = sphi 0, %s155
    %s157 = sphi 0, %s155
    %s158 = sphi 0, %s157
    %s172 = sphi 0, %s158
    %s176 = sphi 0, %s176
    %s178 = sphi 0, %s176
    %s179 = sphi 0, %s178
    %s193 = sphi 0, %s179
    %s197 = sphi 0, %s197
    %s199 = sphi 0, %s197
    %s200 = sphi 0, %s199
    %s214 = sphi 0, %s200
    %s218 = sphi 0, %s218
    %s220 = sphi 0, %s218
    %s221 = sphi 0, %s220
    %s235 = sphi 0, %s221
    %s239 = sphi 0, %s239
    %s241 = sphi 0, %s239
    %s242 = sphi 0, %s241
    %s256 = sphi 0, %s242
    %s264 = sphi 0, %s266
    %s267 = sphi 0, %s264
    %s268 = sphi 0, %s267
    %s284 = sphi 0, %s268
  $region4: #{_lambda_.11} parent=0 // loop_header_branch
    %19 = sbr.rel (%p17) target = $region8
  $region5: #{_lambda_.11} parent=0 // loop_body
    %s21 = ssub.s32 %s16, 1
    %s22 = ssub.s32 %s16, 2
    %s29 = sadd.s32 1, %s24
    %p30 = scmp.ge.s32.totalorder %s29, 1
    %s31 = scalar_select %p30, 0, %s29
    %s32 = sadd.s32 1, %s23
    %s33 = scalar_select %p30, %s32, %s23
    %p34 = scmp.ge.s32.totalorder %s33, 2
    %s35 = scalar_select %p34, 0, %s33
    %s36 = ssub.s32 %s23, %s35
    %s37 = ssub.s32 %s24, %s31
    %s38 = sor.u32 %s36, %s37
    %p39 = scmp.eq.s32.totalorder %s38, 0
    %s41 = sadd.s32 %s40, 1
    %s42 = scalar_select %p39, %s40, %s41
    %p45 = pneg %p39
    %p46 = scmp.eq.s32.totalorder %s16, 1
    %p47 = por %p45, %p46
    %p48 = scmp.ne.s32.totalorder %s40, %s43
    %p49 = scmp.eq.s32.totalorder %s16, 0
    %p50 = por %p48, %p49
    %p51 = scmp.ne.s32.totalorder %s40, %s43
    %p52 = scmp.eq.s32.totalorder %s21, 1
    %p53 = por %p51, %p52
    %p54 = scmp.ne.s32.totalorder %s43, %s44
    %p55 = scmp.eq.s32.totalorder %s21, 0
    %p56 = por %p54, %p55
    %p57 = scmp.ne.s32.totalorder %s43, %s44
    %p58 = scmp.eq.s32.totalorder %s22, 1
    %p59 = por %p57, %p58
    %p61 = scmp.ne.s32.totalorder %s44, %s60
    %p62 = scmp.eq.s32.totalorder %s22, 0
    %p63 = por %p61, %p62
    %s64 = ssub.s32 %s23, %s35
    %s65 = ssub.s32 %s24, %s31
    %s66 = sor.u32 %s64, %s65
    %p67 = scmp.eq.s32.totalorder %s66, 0
    %s69 = sadd.s32 %s68, 1
    %s70 = scalar_select %p67, %s68, %s69
    %p73 = pneg %p67
    %p74 = scmp.eq.s32.totalorder %s16, 1
    %p75 = por %p73, %p74
    %p76 = scmp.ne.s32.totalorder %s68, %s71
    %p77 = scmp.eq.s32.totalorder %s16, 0
    %p78 = por %p76, %p77
    %p79 = scmp.ne.s32.totalorder %s68, %s71
    %p80 = scmp.eq.s32.totalorder %s21, 1
    %p81 = por %p79, %p80
    %p82 = scmp.ne.s32.totalorder %s71, %s72
    %p83 = scmp.eq.s32.totalorder %s21, 0
    %p84 = por %p82, %p83
    %p85 = scmp.ne.s32.totalorder %s71, %s72
    %p86 = scmp.eq.s32.totalorder %s22, 1
    %p87 = por %p85, %p86
    %p89 = scmp.ne.s32.totalorder %s72, %s88
    %p90 = scmp.eq.s32.totalorder %s22, 0
    %p91 = por %p89, %p90
    %s93 = sadd.s32 %s92, 1
    %p96 = scmp.eq.s32.totalorder %s16, 1
    %p97 = scmp.ne.s32.totalorder %s92, %s94
    %p98 = scmp.eq.s32.totalorder %s16, 0
    %p99 = por %p97, %p98
    %p100 = scmp.ne.s32.totalorder %s92, %s94
    %p101 = scmp.eq.s32.totalorder %s21, 1
    %p102 = por %p100, %p101
    %p103 = scmp.ne.s32.totalorder %s94, %s95
    %p104 = scmp.eq.s32.totalorder %s21, 0
    %p105 = por %p103, %p104
    %p106 = scmp.ne.s32.totalorder %s94, %s95
    %p107 = scmp.eq.s32.totalorder %s22, 1
    %p108 = por %p106, %p107
    %p110 = scmp.ne.s32.totalorder %s95, %s109
    %p111 = scmp.eq.s32.totalorder %s22, 0
    %p112 = por %p110, %p111
    %s114 = sadd.s32 %s113, 1
    %p117 = scmp.eq.s32.totalorder %s16, 1
    %p118 = scmp.ne.s32.totalorder %s113, %s115
    %p119 = scmp.eq.s32.totalorder %s16, 0
    %p120 = por %p118, %p119
    %p121 = scmp.ne.s32.totalorder %s113, %s115
    %p122 = scmp.eq.s32.totalorder %s21, 1
    %p123 = por %p121, %p122
    %p124 = scmp.ne.s32.totalorder %s115, %s116
    %p125 = scmp.eq.s32.totalorder %s21, 0
    %p126 = por %p124, %p125
    %p127 = scmp.ne.s32.totalorder %s115, %s116
    %p128 = scmp.eq.s32.totalorder %s22, 1
    %p129 = por %p127, %p128
    %p131 = scmp.ne.s32.totalorder %s116, %s130
    %p132 = scmp.eq.s32.totalorder %s22, 0
    %p133 = por %p131, %p132
    %s135 = sadd.s32 %s134, 1
    %p138 = scmp.eq.s32.totalorder %s16, 1
    %p139 = scmp.ne.s32.totalorder %s134, %s136
    %p140 = scmp.eq.s32.totalorder %s16, 0
    %p141 = por %p139, %p140
    %p142 = scmp.ne.s32.totalorder %s134, %s136
    %p143 = scmp.eq.s32.totalorder %s21, 1
    %p144 = por %p142, %p143
    %p145 = scmp.ne.s32.totalorder %s136, %s137
    %p146 = scmp.eq.s32.totalorder %s21, 0
    %p147 = por %p145, %p146
    %p148 = scmp.ne.s32.totalorder %s136, %s137
    %p149 = scmp.eq.s32.totalorder %s22, 1
    %p150 = por %p148, %p149
    %p152 = scmp.ne.s32.totalorder %s137, %s151
    %p153 = scmp.eq.s32.totalorder %s22, 0
    %p154 = por %p152, %p153
    %s156 = sadd.s32 %s155, 1
    %p159 = scmp.eq.s32.totalorder %s16, 1
    %p160 = scmp.ne.s32.totalorder %s155, %s157
    %p161 = scmp.eq.s32.totalorder %s16, 0
    %p162 = por %p160, %p161
    %p163 = scmp.ne.s32.totalorder %s155, %s157
    %p164 = scmp.eq.s32.totalorder %s21, 1
    %p165 = por %p163, %p164
    %p166 = scmp.ne.s32.totalorder %s157, %s158
    %p167 = scmp.eq.s32.totalorder %s21, 0
    %p168 = por %p166, %p167
    %p169 = scmp.ne.s32.totalorder %s157, %s158
    %p170 = scmp.eq.s32.totalorder %s22, 1
    %p171 = por %p169, %p170
    %p173 = scmp.ne.s32.totalorder %s158, %s172
    %p174 = scmp.eq.s32.totalorder %s22, 0
    %p175 = por %p173, %p174
    %s177 = sadd.s32 %s176, 1
    %p180 = scmp.eq.s32.totalorder %s16, 1
    %p181 = scmp.ne.s32.totalorder %s176, %s178
    %p182 = scmp.eq.s32.totalorder %s16, 0
    %p183 = por %p181, %p182
    %p184 = scmp.ne.s32.totalorder %s176, %s178
    %p185 = scmp.eq.s32.totalorder %s21, 1
    %p186 = por %p184, %p185
    %p187 = scmp.ne.s32.totalorder %s178, %s179
    %p188 = scmp.eq.s32.totalorder %s21, 0
    %p189 = por %p187, %p188
    %p190 = scmp.ne.s32.totalorder %s178, %s179
    %p191 = scmp.eq.s32.totalorder %s22, 1
    %p192 = por %p190, %p191
    %p194 = scmp.ne.s32.totalorder %s179, %s193
    %p195 = scmp.eq.s32.totalorder %s22, 0
    %p196 = por %p194, %p195
    %s198 = sadd.s32 %s197, 1
    %p201 = scmp.eq.s32.totalorder %s16, 1
    %p202 = scmp.ne.s32.totalorder %s197, %s199
    %p203 = scmp.eq.s32.totalorder %s16, 0
    %p204 = por %p202, %p203
    %p205 = scmp.ne.s32.totalorder %s197, %s199
    %p206 = scmp.eq.s32.totalorder %s21, 1
    %p207 = por %p205, %p206
    %p208 = scmp.ne.s32.totalorder %s199, %s200
    %p209 = scmp.eq.s32.totalorder %s21, 0
    %p210 = por %p208, %p209
    %p211 = scmp.ne.s32.totalorder %s199, %s200
    %p212 = scmp.eq.s32.totalorder %s22, 1
    %p213 = por %p211, %p212
    %p215 = scmp.ne.s32.totalorder %s200, %s214
    %p216 = scmp.eq.s32.totalorder %s22, 0
    %p217 = por %p215, %p216
    %s219 = sadd.s32 %s218, 1
    %p222 = scmp.eq.s32.totalorder %s16, 1
    %p223 = scmp.ne.s32.totalorder %s218, %s220
    %p224 = scmp.eq.s32.totalorder %s16, 0
    %p225 = por %p223, %p224
    %p226 = scmp.ne.s32.totalorder %s218, %s220
    %p227 = scmp.eq.s32.totalorder %s21, 1
    %p228 = por %p226, %p227
    %p229 = scmp.ne.s32.totalorder %s220, %s221
    %p230 = scmp.eq.s32.totalorder %s21, 0
    %p231 = por %p229, %p230
    %p232 = scmp.ne.s32.totalorder %s220, %s221
    %p233 = scmp.eq.s32.totalorder %s22, 1
    %p234 = por %p232, %p233
    %p236 = scmp.ne.s32.totalorder %s221, %s235
    %p237 = scmp.eq.s32.totalorder %s22, 0
    %p238 = por %p236, %p237
    %s240 = sadd.s32 %s239, 1
    %p243 = scmp.eq.s32.totalorder %s16, 1
    %p244 = scmp.ne.s32.totalorder %s239, %s241
    %p245 = scmp.eq.s32.totalorder %s16, 0
    %p246 = por %p244, %p245
    %p247 = scmp.ne.s32.totalorder %s239, %s241
    %p248 = scmp.eq.s32.totalorder %s21, 1
    %p249 = por %p247, %p248
    %p250 = scmp.ne.s32.totalorder %s241, %s242
    %p251 = scmp.eq.s32.totalorder %s21, 0
    %p252 = por %p250, %p251
    %p253 = scmp.ne.s32.totalorder %s241, %s242
    %p254 = scmp.eq.s32.totalorder %s22, 1
    %p255 = por %p253, %p254
    %p257 = scmp.ne.s32.totalorder %s242, %s256
    %p258 = scmp.eq.s32.totalorder %s22, 0
    %p259 = por %p257, %p258
    %s260 = ssub.s32 %s23, %s35
    %s261 = ssub.s32 %s24, %s31
    %s262 = sor.u32 %s260, %s261
    %p263 = scmp.eq.s32.totalorder %s262, 0
    %s265 = sadd.s32 %s264, 1
    %s266 = scalar_select %p263, %s264, %s265
    %p269 = pneg %p263
    %p270 = scmp.eq.s32.totalorder %s16, 1
    %p271 = por %p269, %p270
    %p272 = scmp.ne.s32.totalorder %s264, %s267
    %p273 = scmp.eq.s32.totalorder %s16, 0
    %p274 = por %p272, %p273
    %p275 = scmp.ne.s32.totalorder %s264, %s267
    %p276 = scmp.eq.s32.totalorder %s21, 1
    %p277 = por %p275, %p276
    %p278 = scmp.ne.s32.totalorder %s267, %s268
    %p279 = scmp.eq.s32.totalorder %s21, 0
    %p280 = por %p278, %p279
    %p281 = scmp.ne.s32.totalorder %s267, %s268
    %p282 = scmp.eq.s32.totalorder %s22, 1
    %p283 = por %p281, %p282
    %p285 = scmp.ne.s32.totalorder %s268, %s284
    %p286 = scmp.eq.s32.totalorder %s22, 0
    %p287 = por %p285, %p286
    %p288 = scmp.le.s32.totalorder 1, %s16
    %p289 = scmp.lt.s32.totalorder %s16, 3
    %p290 = pnand %p288, %p289
    %p291 = pneg %p290
    // Predicated region
    $region9: #{_lambda_.11} parent=5 // pred_check
      _
    $region10: #{_lambda_.11} parent=5 // pred_check_branch
      %293 = sbr.rel (%p290) target = $region12
    $region11: #{_lambda_.11} parent=5 // pred_region
      %s294 = ssub.s32 %s16, 1
      // Predicated region
      $region13: #{_lambda_.11} parent=11 // pred_check
        %p295 = pneg %p105
      $region14: #{_lambda_.11} parent=11 // pred_check_branch
        %297 = sbr.rel (%p295) target = $region16
      $region15: #{_lambda_.11} parent=11 // pred_region
        _
      $region16: #{_lambda_.11} parent=11 // pred_fallthru
        _
      // Predicated region
      $region17: #{_lambda_.11} parent=11 // pred_check
        %p298 = pneg %p126
      $region18: #{_lambda_.11} parent=11 // pred_check_branch
        %300 = sbr.rel (%p298) target = $region20
      $region19: #{_lambda_.11} parent=11 // pred_region
        _
      $region20: #{_lambda_.11} parent=11 // pred_fallthru
        _
      // Predicated region
      $region21: #{_lambda_.11} parent=11 // pred_check
        %p301 = pneg %p147
      $region22: #{_lambda_.11} parent=11 // pred_check_branch
        %303 = sbr.rel (%p301) target = $region24
      $region23: #{_lambda_.11} parent=11 // pred_region
        _
      $region24: #{_lambda_.11} parent=11 // pred_fallthru
        _
      // Predicated region
      $region25: #{_lambda_.11} parent=11 // pred_check
        %p304 = pneg %p168
      $region26: #{_lambda_.11} parent=11 // pred_check_branch
        %306 = sbr.rel (%p304) target = $region28
      $region27: #{_lambda_.11} parent=11 // pred_region
        _
      $region28: #{_lambda_.11} parent=11 // pred_fallthru
        _
      // Predicated region
      $region29: #{_lambda_.11} parent=11 // pred_check
        %p307 = pneg %p189
      $region30: #{_lambda_.11} parent=11 // pred_check_branch
        %309 = sbr.rel (%p307) target = $region32
      $region31: #{_lambda_.11} parent=11 // pred_region
        _
      $region32: #{_lambda_.11} parent=11 // pred_fallthru
        _
      // Predicated region
      $region33: #{_lambda_.11} parent=11 // pred_check
        %p310 = pneg %p210
      $region34: #{_lambda_.11} parent=11 // pred_check_branch
        %312 = sbr.rel (%p310) target = $region36
      $region35: #{_lambda_.11} parent=11 // pred_region
        _
      $region36: #{_lambda_.11} parent=11 // pred_fallthru
        _
      // Predicated region
      $region37: #{_lambda_.11} parent=11 // pred_check
        %p313 = pneg %p231
      $region38: #{_lambda_.11} parent=11 // pred_check_branch
        %315 = sbr.rel (%p313) target = $region40
      $region39: #{_lambda_.11} parent=11 // pred_region
        _
      $region40: #{_lambda_.11} parent=11 // pred_fallthru
        _
      // Predicated region
      $region41: #{_lambda_.11} parent=11 // pred_check
        %p316 = pneg %p252
      $region42: #{_lambda_.11} parent=11 // pred_check_branch
        %318 = sbr.rel (%p316) target = $region44
      $region43: #{_lambda_.11} parent=11 // pred_region
        _
      $region44: #{_lambda_.11} parent=11 // pred_fallthru
        _
    $region12: #{_lambda_.11} parent=5 // pred_fallthru
      _
    %p319 = scmp.lt.s32.totalorder %s16, 2
    // Predicated region
    $region45: #{_lambda_.11} parent=5 // pred_check
      %p320 = pneg %p319
    $region46: #{_lambda_.11} parent=5 // pred_check_branch
      %322 = sbr.rel (%p320) target = $region48
    $region47: #{_lambda_.11} parent=5 // pred_region
      // Predicated region
      $region49: #{_lambda_.11} parent=47 // pred_check
        %p323 = pneg %p50
      $region50: #{_lambda_.11} parent=47 // pred_check_branch
        %325 = sbr.rel (%p323) target = $region52
      $region51: #{_lambda_.11} parent=47 // pred_region
        %s326 = smul.u32 4, %s24
        %p327 = scmp.lt.s32.totalorder %s23, 1
        %s328 = scalar_select %p327, %s23, 1
        %p329 = scmp.lt.s32.totalorder %s326, 3
        %s330 = scalar_select %p329, %s326, 3
        %s331 = smul.addr %s328, 4
        %s332 = sadd.s32 %s330, %s331
        %s333 = smul.addr %s332, 8
        %s334 = scalar_lea.vmem %s0, %s333
        %s335 = smul.u32 4, %s24
      $region52: #{_lambda_.11} parent=47 // pred_fallthru
        _
      // Predicated region
      $region53: #{_lambda_.11} parent=47 // pred_check
        %p336 = pneg %p78
      $region54: #{_lambda_.11} parent=47 // pred_check_branch
        %338 = sbr.rel (%p336) target = $region56
      $region55: #{_lambda_.11} parent=47 // pred_region
        %s339 = smul.u32 4, %s24
        %p340 = scmp.lt.s32.totalorder %s23, 1
        %s341 = scalar_select %p340, %s23, 1
        %p342 = scmp.lt.s32.totalorder %s339, 3
        %s343 = scalar_select %p342, %s339, 3
        %s344 = smul.addr %s341, 4
        %s345 = sadd.s32 %s343, %s344
        %s346 = smul.addr %s345, 4
        %s347 = scalar_lea.vmem %s1, %s346
        %s348 = smul.u32 4, %s24
      $region56: #{_lambda_.11} parent=47 // pred_fallthru
        _
    $region48: #{_lambda_.11} parent=5 // pred_fallthru
      _
    %p349 = scmp.le.s32.totalorder 1, %s16
    %p350 = scmp.lt.s32.totalorder %s16, 3
    %p351 = pnand %p349, %p350
    %p352 = pneg %p351
    // Predicated region
    $region57: #{_lambda_.11} parent=5 // pred_check
      _
    $region58: #{_lambda_.11} parent=5 // pred_check_branch
      %354 = sbr.rel (%p351) target = $region60
    $region59: #{_lambda_.11} parent=5 // pred_region
      %s355 = ssub.s32 %s16, 1
      %s356 = smul.u32 4, %s26
      %p357 = scmp.lt.s32.totalorder %s25, 1
      %s358 = scalar_select %p357, %s25, 1
      %p359 = scmp.lt.s32.totalorder %s356, 3
      %s360 = scalar_select %p359, %s356, 3
      %s361 = smul.addr %s358, 4
      %s362 = sadd.s32 %s360, %s361
      %s363 = smul.addr %s362, 8
      %s364 = scalar_lea.vmem %s0, %s363
      %p365 = pneg %p56
      %p366 = pneg %p53
      %s367 = smul.u32 4, %s26
      %p368 = scmp.lt.s32.totalorder %s25, 1
      %s369 = scalar_select %p368, %s25, 1
      %p370 = scmp.lt.s32.totalorder %s367, 3
      %s371 = scalar_select %p370, %s367, 3
      %s372 = smul.addr %s369, 4
      %s373 = sadd.s32 %s371, %s372
      %s374 = smul.addr %s373, 4
      %s375 = scalar_lea.vmem %s1, %s374
      %p376 = pneg %p84
      %p377 = pneg %p81
      %p378 = pneg %p105
      %p379 = pneg %p102
      %p380 = pneg %p126
      %p381 = pneg %p123
      %p382 = pneg %p147
      %p383 = pneg %p144
      %p384 = pneg %p168
      %p385 = pneg %p165
      %p386 = pneg %p189
      %p387 = pneg %p186
      %p388 = pneg %p210
      %p389 = pneg %p207
      %p390 = pneg %p231
      %p391 = pneg %p228
      %p392 = pneg %p252
      %p393 = pneg %p249
      %p394 = pneg %p280
      %p395 = pneg %p277
      %s396 = smul.u32 4, %s26
      %p397 = scmp.lt.s32.totalorder %s25, 1
      %s398 = scalar_select %p397, %s25, 1
      %p399 = scmp.lt.s32.totalorder %s396, 3
      %s400 = scalar_select %p399, %s396, 3
      %s401 = smul.addr %s398, 4
      %s402 = sadd.s32 %s400, %s401
      %s403 = smul.addr %s402, 8
      %s404 = scalar_lea.vmem %s10, %s403
      %s405 = smul.u32 4, %s26
      %p406 = scmp.lt.s32.totalorder %s25, 1
      %s407 = scalar_select %p406, %s25, 1
      %p408 = scmp.lt.s32.totalorder %s405, 3
      %s409 = scalar_select %p408, %s405, 3
      %s410 = smul.addr %s407, 4
      %s411 = sadd.s32 %s409, %s410
      %s412 = smul.addr %s411, 8
      %s413 = scalar_lea.vmem %s0, %s412
      %s414 = smul.u32 4, %s26
      %s415 = smul.u32 4, %s26
      %p416 = scmp.lt.s32.totalorder %s25, 1
      %s417 = scalar_select %p416, %s25, 1
      %p418 = scmp.lt.s32.totalorder %s415, 3
      %s419 = scalar_select %p418, %s415, 3
      %s420 = smul.addr %s417, 4
      %s421 = sadd.s32 %s419, %s420
      %s422 = smul.addr %s421, 4
      %s423 = scalar_lea.vmem %s1, %s422
      %s424 = smul.u32 4, %s26
      %s425 = smul.u32 4, %s26
      %p426 = scmp.lt.s32.totalorder %s25, 1
      %s427 = scalar_select %p426, %s25, 1
      %p428 = scmp.lt.s32.totalorder %s425, 3
      %s429 = scalar_select %p428, %s425, 3
      %s430 = smul.addr %s427, 4
      %s431 = sadd.s32 %s429, %s430
      %s432 = smul.addr %s431, 8
      %s433 = scalar_lea.vmem %s10, %s432
      %s434 = smul.u32 4, %s26
      %v436 = vld [vmem:[%s413] sm:$0xff]
      %v437 = vld [vmem:[%s413 + $0x8] sm:$0xff]
      %v438 = vld [vmem:[%s413 + $0x10] sm:$0xff]
      %v439 = vld [vmem:[%s413 + $0x18] sm:$0xff]
      %v440 = vld [vmem:[%s423] sm:$0xf]
      %v441 = vld [vmem:[%s423 + $0x4] sm:$0xf]
      %v442 = vld [vmem:[%s423 + $0x8] sm:$0xf]
      %v443 = vld [vmem:[%s423 + $0xc] sm:$0xf]
      %v444 = vld [vmem:[%s2] sm:$0xf]
      %v445 = vld [vmem:[%s2 + $0x4] sm:$0xf]
      %v446 = vld [vmem:[%s2 + $0x8] sm:$0xf]
      %v447 = vld [vmem:[%s2 + $0xc] sm:$0xf]
      %v452 = vunpack.c.l.b16 %v440
      %v453 = vunpack.c.l.b16 %v441
      %v454 = vunpack.c.l.b16 %v442
      %v455 = vunpack.c.l.b16 %v443
      %v456 = vpack.c.b16 %v453, %v452
      %v457 = vpack.c.b16 %v455, %v454
      %v462 = vunpack.c.l.b16 %v444
      %v463 = vunpack.c.l.b16 %v445
      %v464 = vunpack.c.l.b16 %v446
      %v465 = vunpack.c.l.b16 %v447
      %v466 = vpack.c.b16 %v463, %v462
      %v467 = vpack.c.b16 %v465, %v464
      %vm470 = vcmask 261120
      %v472 = vsel %vm470, %v456, 0
      %v475 = vsel %vm470, %v457, 0
      %477 = vmatprep.subr.bf16.mxu0 0
      %478 = vmatpush1.bf16.msra.mxu0 0
      %479 = vmatprep.subr.bf16.mxu0 0
      %480 = vmatpush1.bf16.msra.mxu0 0
      %481 = vmatprep.subr.bf16.mxu0 0
      %482 = vmatpush1.bf16.msra.mxu0 0
      %483 = vmatprep.subr.bf16.mxu0 0
      %484 = vmatpush1.bf16.msra.mxu0 0
      %485 = vmatprep.subr.bf16.mxu0 0
      %486 = vmatpush1.bf16.msra.mxu0 0
      %487 = vmatprep.subr.bf16.mxu0 0
      %488 = vmatpush1.bf16.msra.mxu0 0
      %489 = vmatprep.subr.bf16.mxu0 0
      %490 = vmatpush1.bf16.msra.mxu0 %v467
      %491 = vmatprep.subr.bf16.mxu0 0
      %492 = vmatpush1.bf16.msra.mxu0 %v466
      %493 = vmatprep.subr.bf16.mxu0 0
      %494 = vmatpush2.bf16.msra.mxu0 0
      %495 = vmatprep.subr.bf16.mxu0 0
      %496 = vmatpush2.bf16.msra.mxu0 0
      %497 = vmatprep.subr.bf16.mxu0 0
      %498 = vmatpush2.bf16.msra.mxu0 0
      %499 = vmatprep.subr.bf16.mxu0 0
      %500 = vmatpush2.bf16.msra.mxu0 0
      %501 = vmatprep.subr.bf16.mxu0 0
      %502 = vmatpush2.bf16.msra.mxu0 0
      %503 = vmatprep.subr.bf16.mxu0 0
      %504 = vmatpush2.bf16.msra.mxu0 0
      %505 = vmatprep.subr.bf16.mxu0 0
      %506 = vmatpush2.bf16.msra.mxu0 0
      %507 = vmatprep.subr.bf16.mxu0 0
      %508 = vmatpush2.bf16.msra.mxu0 0
      %509 = vmatprep.mubr.bf16.mxu0 0
      %510 = vmatmul.mubr.bf16.gmra.mxu0 %v472
      %v511 = vpop.f32.mrf.mxu0
      %v512 = vadd.f32 0.0, %v511
      %v513 = vpop.f32.mrf.mxu0
      %v514 = vpop.f32.mrf.mxu0
      %v515 = vadd.f32 0.0, %v514
      %v516 = vpop.f32.mrf.mxu0
      %517 = vmatprep.mubr.bf16.mxu0 0
      %518 = vmatmul.mubr.bf16.gmra.mxu0 %v475
      %v519 = vpop.f32.mrf.mxu0
      %v520 = vadd.f32 0.0, %v519
      %v521 = vpop.f32.mrf.mxu0
      %v522 = vpop.f32.mrf.mxu0
      %v523 = vadd.f32 0.0, %v522
      %v524 = vpop.f32.mrf.mxu0
      %525 = vdwg.mxu0
      %v526 = vadd.f32 %v436, %v512
      %v527 = vadd.f32 %v437, %v515
      %v528 = vadd.f32 %v438, %v520
      %v529 = vadd.f32 %v439, %v523
      %v530 = vld [vmem:[%s3] sm:$0x1]
      %v532 = vlaneseq
      %v533 = vshrl.u32 %v532, 7
      %v534 = vsub.s32 0, %v533
      %v535 = vrot.slane %v530, %v534
      %v537 = vadd.f32 %v526, %v535
      %v538 = vadd.f32 %v527, %v535
      %v539 = vadd.f32 %v528, %v535
      %v540 = vadd.f32 %v529, %v535
      %v541 = vld [vmem:[%s4] sm:$0x1]
      %v542 = vld [vmem:[%s5] sm:$0x1]
      %v543 = vsel %vm470, %v537, 0.0
      %544 = vadd.xlane.f32.xlu0 %v543
      %v545 = vpop.xlane.xlu0 %544
      %v546 = vsel %vm470, %v538, 0.0
      %547 = vadd.xlane.f32.xlu0 %v546
      %v548 = vpop.xlane.xlu0 %547
      %v549 = vsel %vm470, %v539, 0.0
      %550 = vadd.xlane.f32.xlu0 %v549
      %v551 = vpop.xlane.xlu0 %550
      %v552 = vsel %vm470, %v540, 0.0
      %553 = vadd.xlane.f32.xlu0 %v552
      %v554 = vpop.xlane.xlu0 %553
      %v555 = vrcp.pop 32.0
      %v556 = vmul.f32 %v545, %v555
      %v557 = vmul.f32 %v548, %v555
      %v558 = vmul.f32 %v551, %v555
      %v559 = vmul.f32 %v554, %v555
      %v560 = vsub.f32 %v537, %v556
      %v561 = vsub.f32 %v538, %v557
      %v562 = vsub.f32 %v539, %v558
      %v563 = vsub.f32 %v540, %v559
      %v564 = vmul.f32 %v560, %v560
      %v565 = vmul.f32 %v561, %v561
      %v566 = vmul.f32 %v562, %v562
      %v567 = vmul.f32 %v563, %v563
      %v568 = vsel %vm470, %v564, 0.0
      %569 = vadd.xlane.f32.xlu0 %v568
      %v570 = vpop.xlane.xlu0 %569
      %v571 = vsel %vm470, %v565, 0.0
      %572 = vadd.xlane.f32.xlu0 %v571
      %v573 = vpop.xlane.xlu0 %572
      %v574 = vsel %vm470, %v566, 0.0
      %575 = vadd.xlane.f32.xlu0 %v574
      %v576 = vpop.xlane.xlu0 %575
      %v577 = vsel %vm470, %v567, 0.0
      %578 = vadd.xlane.f32.xlu0 %v577
      %v579 = vpop.xlane.xlu0 %578
      %v580 = vmul.f32 %v570, %v555
      %v581 = vmul.f32 %v573, %v555
      %v582 = vmul.f32 %v576, %v555
      %v583 = vmul.f32 %v579, %v555
      %v584 = vadd.f32 %v580, 1e-05
      %v585 = vadd.f32 %v581, 1e-05
      %v586 = vadd.f32 %v582, 1e-05
      %v587 = vadd.f32 %v583, 1e-05
      %v588 = vrsqrt.pop %v584
      %v589 = vrsqrt.pop %v585
      %v590 = vrsqrt.pop %v586
      %v591 = vrsqrt.pop %v587
      %v592 = vmul.f32 %v560, %v588
      %v593 = vmul.f32 %v561, %v589
      %v594 = vmul.f32 %v562, %v590
      %v595 = vmul.f32 %v563, %v591
      %v597 = vlaneseq
      %v598 = vshrl.u32 %v597, 7
      %v599 = vsub.s32 0, %v598
      %v600 = vrot.slane %v541, %v599
      %v602 = vmul.f32 %v592, %v600
      %v603 = vmul.f32 %v593, %v600
      %v604 = vmul.f32 %v594, %v600
      %v605 = vmul.f32 %v595, %v600
      %v607 = vlaneseq
      %v608 = vshrl.u32 %v607, 7
      %v609 = vsub.s32 0, %v608
      %v610 = vrot.slane %v542, %v609
      %v612 = vadd.f32 %v602, %v610
      %v613 = vadd.f32 %v603, %v610
      %v614 = vadd.f32 %v604, %v610
      %v615 = vadd.f32 %v605, %v610
      %v616 = vpack.c.bf16 %v613, %v612
      %v617 = vpack.c.bf16 %v615, %v614
      %v618 = vld [vmem:[%s6] sm:$0xf]
      %v619 = vld [vmem:[%s6 + $0x4] sm:$0xf]
      %v620 = vld [vmem:[%s6 + $0x8] sm:$0xf]
      %v621 = vld [vmem:[%s6 + $0xc] sm:$0xf]
      %v622 = vld [vmem:[%s7] sm:$0x1]
      %v624 = vlaneseq
      %v625 = vshrl.u32 %v624, 7
      %v626 = vsub.s32 0, %v625
      %v627 = vrot.slane %v622, %v626
      %v633 = vunpack.c.l.b16 %v618
      %v634 = vunpack.c.l.b16 %v619
      %v635 = vunpack.c.l.b16 %v620
      %v636 = vunpack.c.l.b16 %v621
      %v637 = vpack.c.b16 %v634, %v633
      %v638 = vpack.c.b16 %v636, %v635
      %v642 = vsel %vm470, %v616, 0
      %v645 = vsel %vm470, %v617, 0
      %647 = vmatprep.subr.bf16.mxu0 0
      %648 = vmatpush1.bf16.msra.mxu0 0
      %649 = vmatprep.subr.bf16.mxu0 0
      %650 = vmatpush1.bf16.msra.mxu0 0
      %651 = vmatprep.subr.bf16.mxu0 0
      %652 = vmatpush1.bf16.msra.mxu0 0
      %653 = vmatprep.subr.bf16.mxu0 0
      %654 = vmatpush1.bf16.msra.mxu0 0
      %655 = vmatprep.subr.bf16.mxu0 0
      %656 = vmatpush1.bf16.msra.mxu0 0
      %657 = vmatprep.subr.bf16.mxu0 0
      %658 = vmatpush1.bf16.msra.mxu0 0
      %659 = vmatprep.subr.bf16.mxu0 0
      %660 = vmatpush1.bf16.msra.mxu0 %v638
      %661 = vmatprep.subr.bf16.mxu0 0
      %662 = vmatpush1.bf16.msra.mxu0 %v637
      %663 = vmatprep.subr.bf16.mxu0 0
      %664 = vmatpush2.bf16.msra.mxu0 0
      %665 = vmatprep.subr.bf16.mxu0 0
      %666 = vmatpush2.bf16.msra.mxu0 0
      %667 = vmatprep.subr.bf16.mxu0 0
      %668 = vmatpush2.bf16.msra.mxu0 0
      %669 = vmatprep.subr.bf16.mxu0 0
      %670 = vmatpush2.bf16.msra.mxu0 0
      %671 = vmatprep.subr.bf16.mxu0 0
      %672 = vmatpush2.bf16.msra.mxu0 0
      %673 = vmatprep.subr.bf16.mxu0 0
      %674 = vmatpush2.bf16.msra.mxu0 0
      %675 = vmatprep.subr.bf16.mxu0 0
      %676 = vmatpush2.bf16.msra.mxu0 0
      %677 = vmatprep.subr.bf16.mxu0 0
      %678 = vmatpush2.bf16.msra.mxu0 0
      %679 = vmatprep.mubr.bf16.mxu0 0
      %680 = vmatmul.mubr.bf16.gmra.mxu0 %v642
      %v681 = vpop.f32.mrf.mxu0
      %v682 = vadd.f32 %v627, %v681
      %v683 = vpop.f32.mrf.mxu0
      %v684 = vpop.f32.mrf.mxu0
      %v685 = vadd.f32 %v627, %v684
      %v686 = vpop.f32.mrf.mxu0
      %687 = vmatprep.mubr.bf16.mxu0 0
      %688 = vmatmul.mubr.bf16.gmra.mxu0 %v645
      %v689 = vpop.f32.mrf.mxu0
      %v690 = vadd.f32 %v627, %v689
      %v691 = vpop.f32.mrf.mxu0
      %v692 = vpop.f32.mrf.mxu0
      %v693 = vadd.f32 %v627, %v692
      %v694 = vpop.f32.mrf.mxu0
      %695 = vdwg.mxu0
      %v696 = vmul.f32 %v682, 1.702
      %v697 = vmul.f32 %v685, 1.702
      %v698 = vmul.f32 %v690, 1.702
      %v699 = vmul.f32 %v693, 1.702
      %v700 = vxor.u32 %v696, 2147483648
      %v701 = vxor.u32 %v697, 2147483648
      %v702 = vxor.u32 %v698, 2147483648
      %v703 = vxor.u32 %v699, 2147483648
      %v704 = vmul.f32 %v700, 1.442695
      %v705 = vpow.pop %v704
      %v706 = vmul.f32 %v701, 1.442695
      %v707 = vpow.pop %v706
      %v708 = vmul.f32 %v702, 1.442695
      %v709 = vpow.pop %v708
      %v710 = vmul.f32 %v703, 1.442695
      %v711 = vpow.pop %v710
      %v712 = vadd.f32 %v705, 1.0
      %v713 = vadd.f32 %v707, 1.0
      %v714 = vadd.f32 %v709, 1.0
      %v715 = vadd.f32 %v711, 1.0
      %v716 = vrcp.pop %v712
      %v717 = vmul.f32 1.0, %v716
      %v718 = vrcp.pop %v713
      %v719 = vmul.f32 1.0, %v718
      %v720 = vrcp.pop %v714
      %v721 = vmul.f32 1.0, %v720
      %v722 = vrcp.pop %v715
      %v723 = vmul.f32 1.0, %v722
      %v724 = vmul.f32 %v682, %v717
      %v725 = vmul.f32 %v685, %v719
      %v726 = vmul.f32 %v690, %v721
      %v727 = vmul.f32 %v693, %v723
      %v728 = vpack.c.bf16 %v725, %v724
      %v729 = vpack.c.bf16 %v727, %v726
      %v730 = vld [vmem:[%s8] sm:$0xf]
      %v731 = vld [vmem:[%s8 + $0x4] sm:$0xf]
      %v732 = vld [vmem:[%s8 + $0x8] sm:$0xf]
      %v733 = vld [vmem:[%s8 + $0xc] sm:$0xf]
      %v734 = vld [vmem:[%s8 + $0x10] sm:$0xf]
      %v735 = vld [vmem:[%s8 + $0x14] sm:$0xf]
      %v736 = vld [vmem:[%s8 + $0x18] sm:$0xf]
      %v737 = vld [vmem:[%s8 + $0x1c] sm:$0xf]
      %v746 = vunpack.c.l.b16 %v730
      %v747 = vunpack.c.l.b16 %v731
      %v748 = vunpack.c.l.b16 %v732
      %v749 = vunpack.c.l.b16 %v733
      %v750 = vunpack.c.l.b16 %v734
      %v751 = vunpack.c.l.b16 %v735
      %v752 = vunpack.c.l.b16 %v736
      %v753 = vunpack.c.l.b16 %v737
      %v754 = vpack.c.b16 %v747, %v746
      %v755 = vpack.c.b16 %v749, %v748
      %v756 = vpack.c.b16 %v751, %v750
      %v757 = vpack.c.b16 %v753, %v752
      %vm762 = vcmask 523264
      %v764 = vsel %vm762, %v728, 0
      %v767 = vsel %vm762, %v729, 0
      %769 = vmatprep.subr.bf16.mxu0 0
      %770 = vmatpush1.bf16.msra.mxu0 0
      %771 = vmatprep.subr.bf16.mxu0 0
      %772 = vmatpush1.bf16.msra.mxu0 0
      %773 = vmatprep.subr.bf16.mxu0 0
      %774 = vmatpush1.bf16.msra.mxu0 0
      %775 = vmatprep.subr.bf16.mxu0 0
      %776 = vmatpush1.bf16.msra.mxu0 0
      %777 = vmatprep.subr.bf16.mxu0 0
      %778 = vmatpush1.bf16.msra.mxu0 %v757
      %779 = vmatprep.subr.bf16.mxu0 0
      %780 = vmatpush1.bf16.msra.mxu0 %v756
      %781 = vmatprep.subr.bf16.mxu0 0
      %782 = vmatpush1.bf16.msra.mxu0 %v755
      %783 = vmatprep.subr.bf16.mxu0 0
      %784 = vmatpush1.bf16.msra.mxu0 %v754
      %785 = vmatprep.subr.bf16.mxu0 0
      %786 = vmatpush2.bf16.msra.mxu0 0
      %787 = vmatprep.subr.bf16.mxu0 0
      %788 = vmatpush2.bf16.msra.mxu0 0
      %789 = vmatprep.subr.bf16.mxu0 0
      %790 = vmatpush2.bf16.msra.mxu0 0
      %791 = vmatprep.subr.bf16.mxu0 0
      %792 = vmatpush2.bf16.msra.mxu0 0
      %793 = vmatprep.subr.bf16.mxu0 0
      %794 = vmatpush2.bf16.msra.mxu0 0
      %795 = vmatprep.subr.bf16.mxu0 0
      %796 = vmatpush2.bf16.msra.mxu0 0
      %797 = vmatprep.subr.bf16.mxu0 0
      %798 = vmatpush2.bf16.msra.mxu0 0
      %799 = vmatprep.subr.bf16.mxu0 0
      %800 = vmatpush2.bf16.msra.mxu0 0
      %801 = vmatprep.mubr.bf16.mxu0 0
      %802 = vmatmul.mubr.bf16.gmra.mxu0 %v764
      %v803 = vpop.f32.mrf.mxu0
      %v804 = vadd.f32 0.0, %v803
      %v805 = vpop.f32.mrf.mxu0
      %v806 = vpop.f32.mrf.mxu0
      %v807 = vadd.f32 0.0, %v806
      %v808 = vpop.f32.mrf.mxu0
      %809 = vmatprep.mubr.bf16.mxu0 0
      %810 = vmatmul.mubr.bf16.gmra.mxu0 %v767
      %v811 = vpop.f32.mrf.mxu0
      %v812 = vadd.f32 0.0, %v811
      %v813 = vpop.f32.mrf.mxu0
      %v814 = vpop.f32.mrf.mxu0
      %v815 = vadd.f32 0.0, %v814
      %v816 = vpop.f32.mrf.mxu0
      %817 = vdwg.mxu0
      %v818 = vadd.f32 %v537, %v804
      %v819 = vadd.f32 %v538, %v807
      %v820 = vadd.f32 %v539, %v812
      %v821 = vadd.f32 %v540, %v815
      %v822 = vld [vmem:[%s9] sm:$0x1]
      %v824 = vlaneseq
      %v825 = vshrl.u32 %v824, 7
      %v826 = vsub.s32 0, %v825
      %v827 = vrot.slane %v822, %v826
      %v829 = vadd.f32 %v818, %v827
      %v830 = vadd.f32 %v819, %v827
      %v831 = vadd.f32 %v820, %v827
      %v832 = vadd.f32 %v821, %v827
      %833 = vst.msk [vmem:[%s433] sm:$0xff] %vm470, %v829
      %834 = vst.msk [vmem:[%s433 + $0x8] sm:$0xff] %vm470, %v830
      %835 = vst.msk [vmem:[%s433 + $0x10] sm:$0xff] %vm470, %v831
      %836 = vst.msk [vmem:[%s433 + $0x18] sm:$0xff] %vm470, %v832
      %s837 = smul.u32 4, %s26
      %p838 = scmp.lt.s32.totalorder %s25, 1
      %s839 = scalar_select %p838, %s25, 1
      %p840 = scmp.lt.s32.totalorder %s837, 3
      %s841 = scalar_select %p840, %s837, 3
      %s842 = smul.addr %s839, 4
      %s843 = sadd.s32 %s841, %s842
      %s844 = smul.addr %s843, 8
      %s845 = scalar_lea.vmem %s10, %s844
      // Predicated region
      $region61: #{_lambda_.11} parent=59 // pred_check
        %p846 = pneg %p277
      $region62: #{_lambda_.11} parent=59 // pred_check_branch
        %848 = sbr.rel (%p846) target = $region64
      $region63: #{_lambda_.11} parent=59 // pred_region
        %s849 = smul.u32 4, %s26
      $region64: #{_lambda_.11} parent=59 // pred_fallthru
        _
    $region60: #{_lambda_.11} parent=5 // pred_fallthru
      _
    %p850 = scmp.le.s32.totalorder 2, %s16
    // Predicated region
    $region65: #{_lambda_.11} parent=5 // pred_check
      %p851 = pneg %p850
    $region66: #{_lambda_.11} parent=5 // pred_check_branch
      %853 = sbr.rel (%p851) target = $region68
    $region67: #{_lambda_.11} parent=5 // pred_region
      %s854 = ssub.s32 %s16, 2
      // Predicated region
      $region69: #{_lambda_.11} parent=67 // pred_check
        %p855 = pneg %p283
      $region70: #{_lambda_.11} parent=67 // pred_check_branch
        %857 = sbr.rel (%p855) target = $region72
      $region71: #{_lambda_.11} parent=67 // pred_region
        %s858 = smul.u32 4, %s28
        %p859 = scmp.lt.s32.totalorder %s27, 1
        %s860 = scalar_select %p859, %s27, 1
        %p861 = scmp.lt.s32.totalorder %s858, 3
        %s862 = scalar_select %p861, %s858, 3
        %s863 = smul.addr %s860, 4
        %s864 = sadd.s32 %s862, %s863
        %s865 = smul.addr %s864, 8
        %s866 = scalar_lea.vmem %s10, %s865
      $region72: #{_lambda_.11} parent=67 // pred_fallthru
        _
    $region68: #{_lambda_.11} parent=5 // pred_fallthru
      _
  $region6: #{_lambda_.11} parent=0 // loop_footer
    %s20 = sadd.s32 1, %s16
  $region7: #{_lambda_.11} parent=0 // loop_footer_branch
    %15 = sbr.rel target = $region3
  $region8: #{_lambda_.11} parent=0 // loop_exit
    _

// kernel: _lambda_.10
$region0: #{_lambda_.10}
  #allocation0 [shape = 'u32[]', space=smem, size = 0x4, offset = 0x4, fixed_abs, tag = 'smem constant byte address 0x4 - core index']
  #allocation1 [shape = 'u32[144,128]{1,0:T(1,128)}', space=vmem, size = 0x12000, scoped, tag = 'internal scratch']
  %s0 = inlined_call_operand.vmem [shape: bf16[2,32,32], index: 0, kind: input, shape index: {}]
  %s1 = inlined_call_operand.vmem [shape: bf16[2,32,32], index: 1, kind: input, shape index: {}]
  %s2 = inlined_call_operand.vmem [shape: bf16[2,32,32], index: 2, kind: input, shape index: {}]
  %s3 = inlined_call_operand.vmem [shape: bf16[2,32,32], index: 3, kind: output, shape index: {}]
  %s4 = sld [smem:[#allocation0]]
  $region45: #{_lambda_.10} parent=0
    _
  %s6 = ssub.s32 1, %s4
  %s7 = scalar_select 0, %s6, %s4
  loop: start=0, step=1, limit=4
  $region2: #{_lambda_.10} parent=0 // loop_pre_header
    _
  $region3: #{_lambda_.10} parent=0 // loop_header
    %s9 = sphi 0, %s13
    %p10 = scmp.ge.s32.totalorder %s9, 4
    %s16 = sphi 0, %s35
    %s17 = sphi 0, %s31
    %s18 = sphi 0, %s27
    %s19 = sphi 0, %s16
    %s20 = sphi 0, %s17
    %s21 = sphi 0, %s18
    %s22 = sphi 0, %s19
    %s23 = sphi 0, %s20
    %s24 = sphi 0, %s21
    %s42 = sphi 0, %s44
    %s45 = sphi 0, %s42
    %s46 = sphi 0, %s45
    %s62 = sphi 0, %s46
    %s70 = sphi 0, %s72
    %s73 = sphi 0, %s70
    %s74 = sphi 0, %s73
    %s90 = sphi 0, %s74
    %s98 = sphi 0, %s100
    %s101 = sphi 0, %s98
    %s102 = sphi 0, %s101
    %s118 = sphi 0, %s102
    %s128 = sphi 0, %s130
    %s131 = sphi 0, %s128
    %s132 = sphi 0, %s131
    %s148 = sphi 0, %s132
  $region4: #{_lambda_.10} parent=0 // loop_header_branch
    %12 = sbr.rel (%p10) target = $region8
  $region5: #{_lambda_.10} parent=0 // loop_body
    %s14 = ssub.s32 %s9, 1
    %s15 = ssub.s32 %s9, 2
    %s25 = sadd.s32 1, %s18
    %p26 = scmp.ge.s32.totalorder %s25, 1
    %s27 = scalar_select %p26, 0, %s25
    %s28 = sadd.s32 1, %s17
    %s29 = scalar_select %p26, %s28, %s17
    %p30 = scmp.ge.s32.totalorder %s29, 1
    %s31 = scalar_select %p30, 0, %s29
    %s32 = sadd.s32 1, %s16
    %s33 = scalar_select %p30, %s32, %s16
    %p34 = scmp.ge.s32.totalorder %s33, 2
    %s35 = scalar_select %p34, 0, %s33
    %s36 = ssub.s32 %s16, %s35
    %s37 = ssub.s32 %s18, %s27
    %s38 = sor.u32 %s36, %s37
    %s39 = ssub.s32 %s17, %s31
    %s40 = sor.u32 %s38, %s39
    %p41 = scmp.eq.s32.totalorder %s40, 0
    %s43 = sadd.s32 %s42, 1
    %s44 = scalar_select %p41, %s42, %s43
    %p47 = pneg %p41
    %p48 = scmp.eq.s32.totalorder %s9, 1
    %p49 = por %p47, %p48
    %p50 = scmp.ne.s32.totalorder %s42, %s45
    %p51 = scmp.eq.s32.totalorder %s9, 0
    %p52 = por %p50, %p51
    %p53 = scmp.ne.s32.totalorder %s42, %s45
    %p54 = scmp.eq.s32.totalorder %s14, 1
    %p55 = por %p53, %p54
    %p56 = scmp.ne.s32.totalorder %s45, %s46
    %p57 = scmp.eq.s32.totalorder %s14, 0
    %p58 = por %p56, %p57
    %p59 = scmp.ne.s32.totalorder %s45, %s46
    %p60 = scmp.eq.s32.totalorder %s15, 1
    %p61 = por %p59, %p60
    %p63 = scmp.ne.s32.totalorder %s46, %s62
    %p64 = scmp.eq.s32.totalorder %s15, 0
    %p65 = por %p63, %p64
    %s66 = ssub.s32 %s16, %s35
    %s67 = ssub.s32 %s17, %s31
    %s68 = sor.u32 %s66, %s67
    %p69 = scmp.eq.s32.totalorder %s68, 0
    %s71 = sadd.s32 %s70, 1
    %s72 = scalar_select %p69, %s70, %s71
    %p75 = pneg %p69
    %p76 = scmp.eq.s32.totalorder %s9, 1
    %p77 = por %p75, %p76
    %p78 = scmp.ne.s32.totalorder %s70, %s73
    %p79 = scmp.eq.s32.totalorder %s9, 0
    %p80 = por %p78, %p79
    %p81 = scmp.ne.s32.totalorder %s70, %s73
    %p82 = scmp.eq.s32.totalorder %s14, 1
    %p83 = por %p81, %p82
    %p84 = scmp.ne.s32.totalorder %s73, %s74
    %p85 = scmp.eq.s32.totalorder %s14, 0
    %p86 = por %p84, %p85
    %p87 = scmp.ne.s32.totalorder %s73, %s74
    %p88 = scmp.eq.s32.totalorder %s15, 1
    %p89 = por %p87, %p88
    %p91 = scmp.ne.s32.totalorder %s74, %s90
    %p92 = scmp.eq.s32.totalorder %s15, 0
    %p93 = por %p91, %p92
    %s94 = ssub.s32 %s16, %s35
    %s95 = ssub.s32 %s17, %s31
    %s96 = sor.u32 %s94, %s95
    %p97 = scmp.eq.s32.totalorder %s96, 0
    %s99 = sadd.s32 %s98, 1
    %s100 = scalar_select %p97, %s98, %s99
    %p103 = pneg %p97
    %p104 = scmp.eq.s32.totalorder %s9, 1
    %p105 = por %p103, %p104
    %p106 = scmp.ne.s32.totalorder %s98, %s101
    %p107 = scmp.eq.s32.totalorder %s9, 0
    %p108 = por %p106, %p107
    %p109 = scmp.ne.s32.totalorder %s98, %s101
    %p110 = scmp.eq.s32.totalorder %s14, 1
    %p111 = por %p109, %p110
    %p112 = scmp.ne.s32.totalorder %s101, %s102
    %p113 = scmp.eq.s32.totalorder %s14, 0
    %p114 = por %p112, %p113
    %p115 = scmp.ne.s32.totalorder %s101, %s102
    %p116 = scmp.eq.s32.totalorder %s15, 1
    %p117 = por %p115, %p116
    %p119 = scmp.ne.s32.totalorder %s102, %s118
    %p120 = scmp.eq.s32.totalorder %s15, 0
    %p121 = por %p119, %p120
    %s122 = ssub.s32 %s16, %s35
    %s123 = ssub.s32 %s18, %s27
    %s124 = sor.u32 %s122, %s123
    %s125 = ssub.s32 %s17, %s31
    %s126 = sor.u32 %s124, %s125
    %p127 = scmp.eq.s32.totalorder %s126, 0
    %s129 = sadd.s32 %s128, 1
    %s130 = scalar_select %p127, %s128, %s129
    %p133 = pneg %p127
    %p134 = scmp.eq.s32.totalorder %s9, 1
    %p135 = por %p133, %p134
    %p136 = scmp.ne.s32.totalorder %s128, %s131
    %p137 = scmp.eq.s32.totalorder %s9, 0
    %p138 = por %p136, %p137
    %p139 = scmp.ne.s32.totalorder %s128, %s131
    %p140 = scmp.eq.s32.totalorder %s14, 1
    %p141 = por %p139, %p140
    %p142 = scmp.ne.s32.totalorder %s131, %s132
    %p143 = scmp.eq.s32.totalorder %s14, 0
    %p144 = por %p142, %p143
    %p145 = scmp.ne.s32.totalorder %s131, %s132
    %p146 = scmp.eq.s32.totalorder %s15, 1
    %p147 = por %p145, %p146
    %p149 = scmp.ne.s32.totalorder %s132, %s148
    %p150 = scmp.eq.s32.totalorder %s15, 0
    %p151 = por %p149, %p150
    %p152 = scmp.le.s32.totalorder 1, %s9
    %p153 = scmp.lt.s32.totalorder %s9, 3
    %p154 = pnand %p152, %p153
    %p155 = pneg %p154
    // Predicated region
    $region9: #{_lambda_.10} parent=5 // pred_check
      _
    $region10: #{_lambda_.10} parent=5 // pred_check_branch
      %157 = sbr.rel (%p154) target = $region12
    $region11: #{_lambda_.10} parent=5 // pred_region
      %s158 = ssub.s32 %s9, 1
    $region12: #{_lambda_.10} parent=5 // pred_fallthru
      _
    %p159 = scmp.lt.s32.totalorder %s9, 2
    // Predicated region
    $region13: #{_lambda_.10} parent=5 // pred_check
      %p160 = pneg %p159
    $region14: #{_lambda_.10} parent=5 // pred_check_branch
      %162 = sbr.rel (%p160) target = $region16
    $region15: #{_lambda_.10} parent=5 // pred_region
      // Predicated region
      $region17: #{_lambda_.10} parent=15 // pred_check
        %p163 = pneg %p52
      $region18: #{_lambda_.10} parent=15 // pred_check_branch
        %165 = sbr.rel (%p163) target = $region20
      $region19: #{_lambda_.10} parent=15 // pred_region
        %s166 = smul.u32 4, %s18
        %p167 = scmp.lt.s32.totalorder %s16, 1
        %s168 = scalar_select %p167, %s16, 1
        %p169 = scmp.lt.s32.totalorder %s166, 3
        %s170 = scalar_select %p169, %s166, 3
        %p171 = scmp.lt.s32.totalorder %s17, 0
        %s172 = scalar_select %p171, %s17, 0
        %s173 = sadd.s32 %s172, %s170
        %s174 = smul.addr %s168, 4
        %s175 = sadd.s32 %s173, %s174
        %s176 = smul.addr %s175, 4
        %s177 = scalar_lea.vmem %s0, %s176
        %s178 = smul.u32 4, %s18
      $region20: #{_lambda_.10} parent=15 // pred_fallthru
        _
      // Predicated region
      $region21: #{_lambda_.10} parent=15 // pred_check
        %p179 = pneg %p80
      $region22: #{_lambda_.10} parent=15 // pred_check_branch
        %181 = sbr.rel (%p179) target = $region24
      $region23: #{_lambda_.10} parent=15 // pred_region
        %p182 = scmp.lt.s32.totalorder %s16, 1
        %s183 = scalar_select %p182, %s16, 1
        %p184 = scmp.lt.s32.totalorder %s17, 0
        %s185 = scalar_select %p184, %s17, 0
        %s186 = smul.addr %s183, 4
        %s187 = sadd.s32 %s185, %s186
        %s188 = smul.addr %s187, 4
        %s189 = scalar_lea.vmem %s1, %s188
      $region24: #{_lambda_.10} parent=15 // pred_fallthru
        _
      // Predicated region
      $region25: #{_lambda_.10} parent=15 // pred_check
        %p190 = pneg %p108
      $region26: #{_lambda_.10} parent=15 // pred_check_branch
        %192 = sbr.rel (%p190) target = $region28
      $region27: #{_lambda_.10} parent=15 // pred_region
        %p193 = scmp.lt.s32.totalorder %s16, 1
        %s194 = scalar_select %p193, %s16, 1
        %p195 = scmp.lt.s32.totalorder %s17, 0
        %s196 = scalar_select %p195, %s17, 0
        %s197 = smul.addr %s194, 4
        %s198 = sadd.s32 %s196, %s197
        %s199 = smul.addr %s198, 4
        %s200 = scalar_lea.vmem %s2, %s199
      $region28: #{_lambda_.10} parent=15 // pred_fallthru
        _
    $region16: #{_lambda_.10} parent=5 // pred_fallthru
      _
    %p201 = scmp.le.s32.totalorder 1, %s9
    %p202 = scmp.lt.s32.totalorder %s9, 3
    %p203 = pnand %p201, %p202
    %p204 = pneg %p203
    // Predicated region
    $region29: #{_lambda_.10} parent=5 // pred_check
      _
    $region30: #{_lambda_.10} parent=5 // pred_check_branch
      %206 = sbr.rel (%p203) target = $region32
    $region31: #{_lambda_.10} parent=5 // pred_region
      %s207 = ssub.s32 %s9, 1
      %s208 = smul.u32 4, %s21
      %p209 = scmp.lt.s32.totalorder %s19, 1
      %s210 = scalar_select %p209, %s19, 1
      %p211 = scmp.lt.s32.totalorder %s208, 3
      %s212 = scalar_select %p211, %s208, 3
      %p213 = scmp.lt.s32.totalorder %s20, 0
      %s214 = scalar_select %p213, %s20, 0
      %s215 = sadd.s32 %s214, %s212
      %s216 = smul.addr %s210, 4
      %s217 = sadd.s32 %s215, %s216
      %s218 = smul.addr %s217, 4
      %s219 = scalar_lea.vmem %s0, %s218
      %p220 = pneg %p58
      %p221 = pneg %p55
      %p222 = scmp.lt.s32.totalorder %s19, 1
      %s223 = scalar_select %p222, %s19, 1
      %p224 = scmp.lt.s32.totalorder %s20, 0
      %s225 = scalar_select %p224, %s20, 0
      %s226 = smul.addr %s223, 4
      %s227 = sadd.s32 %s225, %s226
      %s228 = smul.addr %s227, 4
      %s229 = scalar_lea.vmem %s1, %s228
      %p230 = pneg %p86
      %p231 = pneg %p83
      %p232 = scmp.lt.s32.totalorder %s19, 1
      %s233 = scalar_select %p232, %s19, 1
      %p234 = scmp.lt.s32.totalorder %s20, 0
      %s235 = scalar_select %p234, %s20, 0
      %s236 = smul.addr %s233, 4
      %s237 = sadd.s32 %s235, %s236
      %s238 = smul.addr %s237, 4
      %s239 = scalar_lea.vmem %s2, %s238
      %p240 = pneg %p114
      %p241 = pneg %p111
      %p242 = pneg %p144
      %p243 = pneg %p141
      %s244 = smul.u32 4, %s21
      %p245 = scmp.lt.s32.totalorder %s19, 1
      %s246 = scalar_select %p245, %s19, 1
      %p247 = scmp.lt.s32.totalorder %s244, 3
      %s248 = scalar_select %p247, %s244, 3
      %p249 = scmp.lt.s32.totalorder %s20, 0
      %s250 = scalar_select %p249, %s20, 0
      %s251 = sadd.s32 %s250, %s248
      %s252 = smul.addr %s246, 4
      %s253 = sadd.s32 %s251, %s252
      %s254 = smul.addr %s253, 4
      %s255 = scalar_lea.vmem %s3, %s254
      %s256 = smul.u32 4, %s21
      %p257 = scmp.lt.s32.totalorder %s19, 1
      %s258 = scalar_select %p257, %s19, 1
      %p259 = scmp.lt.s32.totalorder %s256, 3
      %s260 = scalar_select %p259, %s256, 3
      %p261 = scmp.lt.s32.totalorder %s20, 0
      %s262 = scalar_select %p261, %s20, 0
      %s263 = sadd.s32 %s262, %s260
      %s264 = smul.addr %s258, 4
      %s265 = sadd.s32 %s263, %s264
      %s266 = smul.addr %s265, 4
      %s267 = scalar_lea.vmem %s0, %s266
      %s268 = smul.u32 4, %s21
      %p269 = scmp.lt.s32.totalorder %s19, 1
      %s270 = scalar_select %p269, %s19, 1
      %p271 = scmp.lt.s32.totalorder %s20, 0
      %s272 = scalar_select %p271, %s20, 0
      %s273 = smul.addr %s270, 4
      %s274 = sadd.s32 %s272, %s273
      %s275 = smul.addr %s274, 4
      %s276 = scalar_lea.vmem %s1, %s275
      %p277 = scmp.lt.s32.totalorder %s19, 1
      %s278 = scalar_select %p277, %s19, 1
      %p279 = scmp.lt.s32.totalorder %s20, 0
      %s280 = scalar_select %p279, %s20, 0
      %s281 = smul.addr %s278, 4
      %s282 = sadd.s32 %s280, %s281
      %s283 = smul.addr %s282, 4
      %s284 = scalar_lea.vmem %s2, %s283
      %s285 = smul.u32 4, %s21
      %p286 = scmp.lt.s32.totalorder %s19, 1
      %s287 = scalar_select %p286, %s19, 1
      %p288 = scmp.lt.s32.totalorder %s285, 3
      %s289 = scalar_select %p288, %s285, 3
      %p290 = scmp.lt.s32.totalorder %s20, 0
      %s291 = scalar_select %p290, %s20, 0
      %s292 = sadd.s32 %s291, %s289
      %s293 = smul.addr %s287, 4
      %s294 = sadd.s32 %s292, %s293
      %s295 = smul.addr %s294, 4
      %s296 = scalar_lea.vmem %s3, %s295
      %s297 = smul.u32 4, %s21
      %v299 = vld [vmem:[%s267] sm:$0xf]
      %v300 = vld [vmem:[%s267 + $0x4] sm:$0xf]
      %v301 = vld [vmem:[%s267 + $0x8] sm:$0xf]
      %v302 = vld [vmem:[%s267 + $0xc] sm:$0xf]
      %v303 = vld [vmem:[%s276] sm:$0xf]
      %v304 = vld [vmem:[%s276 + $0x4] sm:$0xf]
      %v305 = vld [vmem:[%s276 + $0x8] sm:$0xf]
      %v306 = vld [vmem:[%s276 + $0xc] sm:$0xf]
      %v307 = vld [vmem:[%s284] sm:$0xf]
      %v308 = vld [vmem:[%s284 + $0x4] sm:$0xf]
      %v309 = vld [vmem:[%s284 + $0x8] sm:$0xf]
      %v310 = vld [vmem:[%s284 + $0xc] sm:$0xf]
      %v311 = vlaneseq
      %v312 = vand.u32 %v311, 127
      %vm313 = vcmp.lt.s32.totalorder %v312, 17
      %v318 = vunpack.c.l.b16 %v299
      %v319 = vunpack.c.l.b16 %v300
      %v320 = vunpack.c.l.b16 %v301
      %v321 = vunpack.c.l.b16 %v302
      %v322 = vpack.c.b16 %v319, %v318
      %v323 = vpack.c.b16 %v321, %v320
      %v328 = vunpack.c.l.b16 %v303
      %v329 = vunpack.c.l.b16 %v304
      %v330 = vunpack.c.l.b16 %v305
      %v331 = vunpack.c.l.b16 %v306
      %v332 = vpack.c.b16 %v329, %v328
      %v333 = vpack.c.b16 %v331, %v330
      %vm334 = vcmask 64512
      %v336 = vsel %vm334, %v322, 0
      %v339 = vsel %vm334, %v323, 0
      %v342 = vsel %vm334, %v332, 0
      %v345 = vsel %vm334, %v333, 0
      %347 = vmatprep.subr.bf16.mxu0 0
      %348 = vmatpush1.bf16.xpose.msra.mxu0 0
      %349 = vmatprep.subr.bf16.mxu0 0
      %350 = vmatpush1.bf16.xpose.msra.mxu0 0
      %351 = vmatprep.subr.bf16.mxu0 0
      %352 = vmatpush1.bf16.xpose.msra.mxu0 0
      %353 = vmatprep.subr.bf16.mxu0 0
      %354 = vmatpush1.bf16.xpose.msra.mxu0 0
      %355 = vmatprep.subr.bf16.mxu0 0
      %356 = vmatpush1.bf16.xpose.msra.mxu0 0
      %357 = vmatprep.subr.bf16.mxu0 0
      %358 = vmatpush1.bf16.xpose.msra.mxu0 0
      %359 = vmatprep.subr.bf16.mxu0 0
      %360 = vmatpush1.bf16.xpose.msra.mxu0 %v345
      %361 = vmatprep.subr.bf16.mxu0 0
      %362 = vmatpush1.bf16.xpose.msra.mxu0 %v342
      %363 = vmatprep.subr.bf16.mxu0 0
      %364 = vmatpush2.bf16.xpose.msra.mxu0 0
      %365 = vmatprep.subr.bf16.mxu0 0
      %366 = vmatpush2.bf16.xpose.msra.mxu0 0
      %367 = vmatprep.subr.bf16.mxu0 0
      %368 = vmatpush2.bf16.xpose.msra.mxu0 0
      %369 = vmatprep.subr.bf16.mxu0 0
      %370 = vmatpush2.bf16.xpose.msra.mxu0 0
      %371 = vmatprep.subr.bf16.mxu0 0
      %372 = vmatpush2.bf16.xpose.msra.mxu0 0
      %373 = vmatprep.subr.bf16.mxu0 0
      %374 = vmatpush2.bf16.xpose.msra.mxu0 0
      %375 = vmatprep.subr.bf16.mxu0 0
      %376 = vmatpush2.bf16.xpose.msra.mxu0 0
      %377 = vmatprep.subr.bf16.mxu0 0
      %378 = vmatpush2.bf16.xpose.msra.mxu0 0
      %379 = vmatprep.mubr.bf16.mxu0 0
      %380 = vmatmul.mubr.bf16.gmra.mxu0 %v336
      %v381 = vpop.f32.mrf.mxu0
      %v382 = vadd.f32 0.0, %v381
      %v383 = vpop.f32.mrf.mxu0
      %v384 = vpop.f32.mrf.mxu0
      %v385 = vadd.f32 0.0, %v384
      %v386 = vpop.f32.mrf.mxu0
      %387 = vmatprep.mubr.bf16.mxu0 0
      %388 = vmatmul.mubr.bf16.gmra.mxu0 %v339
      %v389 = vpop.f32.mrf.mxu0
      %v390 = vadd.f32 0.0, %v389
      %v391 = vpop.f32.mrf.mxu0
      %v392 = vpop.f32.mrf.mxu0
      %v393 = vadd.f32 0.0, %v392
      %v394 = vpop.f32.mrf.mxu0
      %395 = vdwg.mxu0
      %v396 = vmul.f32 %v382, 0.35355338
      %v397 = vmul.f32 %v385, 0.35355338
      %v398 = vmul.f32 %v390, 0.35355338
      %v399 = vmul.f32 %v393, 0.35355338
      %v400 = vsel %vm313, 1, 0
      %vm401 = vcmp.eq.s32.totalorder %v400, 1
      %v402 = vsel %vm401, %v396, -1e+30
      %v403 = vsel %vm401, %v397, -1e+30
      %v404 = vsel %vm401, %v398, -1e+30
      %v405 = vsel %vm401, %v399, -1e+30
      %vm406 = vcmask 261120
      %v407 = vsel %vm406, %v402, -inf
      %408 = vmax.xlane.f32.xlu0 %v407
      %v409 = vpop.xlane.xlu0 %408
      %v410 = vsel %vm406, %v403, -inf
      %411 = vmax.xlane.f32.xlu0 %v410
      %v412 = vpop.xlane.xlu0 %411
      %v413 = vsel %vm406, %v404, -inf
      %414 = vmax.xlane.f32.xlu0 %v413
      %v415 = vpop.xlane.xlu0 %414
      %v416 = vsel %vm406, %v405, -inf
      %417 = vmax.xlane.f32.xlu0 %v416
      %v418 = vpop.xlane.xlu0 %417
      %v419 = vmax.f32 %v409, -1e+30
      %v420 = vmax.f32 %v412, -1e+30
      %v421 = vmax.f32 %v415, -1e+30
      %v422 = vmax.f32 %v418, -1e+30
      %v423 = vsub.f32 -1e+30, %v419
      %v424 = vsub.f32 -1e+30, %v420
      %v425 = vsub.f32 -1e+30, %v421
      %v426 = vsub.f32 -1e+30, %v422
      %v427 = vmul.f32 %v423, 1.442695
      %v428 = vpow.pop %v427
      %v429 = vmul.f32 %v424, 1.442695
      %v430 = vpow.pop %v429
      %v431 = vmul.f32 %v425, 1.442695
      %v432 = vpow.pop %v431
      %v433 = vmul.f32 %v426, 1.442695
      %v434 = vpow.pop %v433
      %v435 = vsub.f32 %v402, %v419
      %v436 = vsub.f32 %v403, %v420
      %v437 = vsub.f32 %v404, %v421
      %v438 = vsub.f32 %v405, %v422
      %v439 = vmul.f32 %v435, 1.442695
      %v440 = vpow.pop %v439
      %v441 = vmul.f32 %v436, 1.442695
      %v442 = vpow.pop %v441
      %v443 = vmul.f32 %v437, 1.442695
      %v444 = vpow.pop %v443
      %v445 = vmul.f32 %v438, 1.442695
      %v446 = vpow.pop %v445
      %v447 = vmul.f32 %v428, 0.0
      %v448 = vmul.f32 %v430, 0.0
      %v449 = vmul.f32 %v432, 0.0
      %v450 = vmul.f32 %v434, 0.0
      %v451 = vsel %vm406, %v440, 0.0
      %452 = vadd.xlane.f32.xlu0 %v451
      %v453 = vpop.xlane.xlu0 %452
      %v454 = vsel %vm406, %v442, 0.0
      %455 = vadd.xlane.f32.xlu0 %v454
      %v456 = vpop.xlane.xlu0 %455
      %v457 = vsel %vm406, %v444, 0.0
      %458 = vadd.xlane.f32.xlu0 %v457
      %v459 = vpop.xlane.xlu0 %458
      %v460 = vsel %vm406, %v446, 0.0
      %461 = vadd.xlane.f32.xlu0 %v460
      %v462 = vpop.xlane.xlu0 %461
      %v463 = vadd.f32 %v447, %v453
      %v464 = vadd.f32 %v448, %v456
      %v465 = vadd.f32 %v449, %v459
      %v466 = vadd.f32 %v450, %v462
      %v467 = vpack.c.bf16 %v442, %v440
      %v468 = vpack.c.bf16 %v446, %v444
      %v473 = vunpack.c.l.b16 %v307
      %v474 = vunpack.c.l.b16 %v308
      %v475 = vunpack.c.l.b16 %v309
      %v476 = vunpack.c.l.b16 %v310
      %v477 = vpack.c.b16 %v474, %v473
      %v478 = vpack.c.b16 %v476, %v475
      %v482 = vsel %vm406, %v467, 0
      %v485 = vsel %vm406, %v468, 0
      %487 = vmatprep.subr.bf16.mxu0 0
      %488 = vmatpush1.bf16.msra.mxu0 0
      %489 = vmatprep.subr.bf16.mxu0 0
      %490 = vmatpush1.bf16.msra.mxu0 0
      %491 = vmatprep.subr.bf16.mxu0 0
      %492 = vmatpush1.bf16.msra.mxu0 0
      %493 = vmatprep.subr.bf16.mxu0 0
      %494 = vmatpush1.bf16.msra.mxu0 0
      %495 = vmatprep.subr.bf16.mxu0 0
      %496 = vmatpush1.bf16.msra.mxu0 0
      %497 = vmatprep.subr.bf16.mxu0 0
      %498 = vmatpush1.bf16.msra.mxu0 0
      %499 = vmatprep.subr.bf16.mxu0 0
      %500 = vmatpush1.bf16.msra.mxu0 %v478
      %501 = vmatprep.subr.bf16.mxu0 0
      %502 = vmatpush1.bf16.msra.mxu0 %v477
      %503 = vmatprep.subr.bf16.mxu0 0
      %504 = vmatpush2.bf16.msra.mxu0 0
      %505 = vmatprep.subr.bf16.mxu0 0
      %506 = vmatpush2.bf16.msra.mxu0 0
      %507 = vmatprep.subr.bf16.mxu0 0
      %508 = vmatpush2.bf16.msra.mxu0 0
      %509 = vmatprep.subr.bf16.mxu0 0
      %510 = vmatpush2.bf16.msra.mxu0 0
      %511 = vmatprep.subr.bf16.mxu0 0
      %512 = vmatpush2.bf16.msra.mxu0 0
      %513 = vmatprep.subr.bf16.mxu0 0
      %514 = vmatpush2.bf16.msra.mxu0 0
      %515 = vmatprep.subr.bf16.mxu0 0
      %516 = vmatpush2.bf16.msra.mxu0 0
      %517 = vmatprep.subr.bf16.mxu0 0
      %518 = vmatpush2.bf16.msra.mxu0 0
      %519 = vmatprep.mubr.bf16.mxu0 0
      %520 = vmatmul.mubr.bf16.gmra.mxu0 %v482
      %v521 = vpop.f32.mrf.mxu0
      %v522 = vadd.f32 0.0, %v521
      %v523 = vpop.f32.mrf.mxu0
      %v524 = vpop.f32.mrf.mxu0
      %v525 = vadd.f32 0.0, %v524
      %v526 = vpop.f32.mrf.mxu0
      %527 = vmatprep.mubr.bf16.mxu0 0
      %528 = vmatmul.mubr.bf16.gmra.mxu0 %v485
      %v529 = vpop.f32.mrf.mxu0
      %v530 = vadd.f32 0.0, %v529
      %v531 = vpop.f32.mrf.mxu0
      %v532 = vpop.f32.mrf.mxu0
      %v533 = vadd.f32 0.0, %v532
      %v534 = vpop.f32.mrf.mxu0
      %535 = vdwg.mxu0
      %v536 = vadd.f32 %v447, %v522
      %v537 = vadd.f32 %v448, %v525
      %v538 = vadd.f32 %v449, %v530
      %v539 = vadd.f32 %v450, %v533
      %540 = vrot.lane.b32.xlu0 %v322, 120
      %v541 = vpop.permute.xlu0 %540
      %542 = vrot.lane.b32.xlu0 %v323, 120
      %v543 = vpop.permute.xlu0 %542
      %544 = vrot.lane.b32.xlu0 %v332, 120
      %v545 = vpop.permute.xlu0 %544
      %546 = vrot.lane.b32.xlu0 %v333, 120
      %v547 = vpop.permute.xlu0 %546
      %v549 = vsel %vm334, %v541, 0
      %v552 = vsel %vm334, %v543, 0
      %v555 = vsel %vm334, %v545, 0
      %v558 = vsel %vm334, %v547, 0
      %560 = vmatprep.subr.bf16.mxu0 0
      %561 = vmatpush1.bf16.xpose.msra.mxu0 0
      %562 = vmatprep.subr.bf16.mxu0 0
      %563 = vmatpush1.bf16.xpose.msra.mxu0 0
      %564 = vmatprep.subr.bf16.mxu0 0
      %565 = vmatpush1.bf16.xpose.msra.mxu0 0
      %566 = vmatprep.subr.bf16.mxu0 0
      %567 = vmatpush1.bf16.xpose.msra.mxu0 0
      %568 = vmatprep.subr.bf16.mxu0 0
      %569 = vmatpush1.bf16.xpose.msra.mxu0 0
      %570 = vmatprep.subr.bf16.mxu0 0
      %571 = vmatpush1.bf16.xpose.msra.mxu0 0
      %572 = vmatprep.subr.bf16.mxu0 0
      %573 = vmatpush1.bf16.xpose.msra.mxu0 %v558
      %574 = vmatprep.subr.bf16.mxu0 0
      %575 = vmatpush1.bf16.xpose.msra.mxu0 %v555
      %576 = vmatprep.subr.bf16.mxu0 0
      %577 = vmatpush2.bf16.xpose.msra.mxu0 0
      %578 = vmatprep.subr.bf16.mxu0 0
      %579 = vmatpush2.bf16.xpose.msra.mxu0 0
      %580 = vmatprep.subr.bf16.mxu0 0
      %581 = vmatpush2.bf16.xpose.msra.mxu0 0
      %582 = vmatprep.subr.bf16.mxu0 0
      %583 = vmatpush2.bf16.xpose.msra.mxu0 0
      %584 = vmatprep.subr.bf16.mxu0 0
      %585 = vmatpush2.bf16.xpose.msra.mxu0 0
      %586 = vmatprep.subr.bf16.mxu0 0
      %587 = vmatpush2.bf16.xpose.msra.mxu0 0
      %588 = vmatprep.subr.bf16.mxu0 0
      %589 = vmatpush2.bf16.xpose.msra.mxu0 0
      %590 = vmatprep.subr.bf16.mxu0 0
      %591 = vmatpush2.bf16.xpose.msra.mxu0 0
      %592 = vmatprep.mubr.bf16.mxu0 0
      %593 = vmatmul.mubr.bf16.gmra.mxu0 %v549
      %v594 = vpop.f32.mrf.mxu0
      %v595 = vadd.f32 0.0, %v594
      %v596 = vpop.f32.mrf.mxu0
      %v597 = vpop.f32.mrf.mxu0
      %v598 = vadd.f32 0.0, %v597
      %v599 = vpop.f32.mrf.mxu0
      %600 = vmatprep.mubr.bf16.mxu0 0
      %601 = vmatmul.mubr.bf16.gmra.mxu0 %v552
      %v602 = vpop.f32.mrf.mxu0
      %v603 = vadd.f32 0.0, %v602
      %v604 = vpop.f32.mrf.mxu0
      %v605 = vpop.f32.mrf.mxu0
      %v606 = vadd.f32 0.0, %v605
      %v607 = vpop.f32.mrf.mxu0
      %608 = vdwg.mxu0
      %v609 = vmul.f32 %v595, 0.35355338
      %v610 = vmul.f32 %v598, 0.35355338
      %v611 = vmul.f32 %v603, 0.35355338
      %v612 = vmul.f32 %v606, 0.35355338
      %v613 = vsel %vm401, %v609, -1e+30
      %v614 = vsel %vm401, %v610, -1e+30
      %v615 = vsel %vm401, %v611, -1e+30
      %v616 = vsel %vm401, %v612, -1e+30
      %v617 = vsel %vm406, %v613, -inf
      %618 = vmax.xlane.f32.xlu0 %v617
      %v619 = vpop.xlane.xlu0 %618
      %v620 = vsel %vm406, %v614, -inf
      %621 = vmax.xlane.f32.xlu0 %v620
      %v622 = vpop.xlane.xlu0 %621
      %v623 = vsel %vm406, %v615, -inf
      %624 = vmax.xlane.f32.xlu0 %v623
      %v625 = vpop.xlane.xlu0 %624
      %v626 = vsel %vm406, %v616, -inf
      %627 = vmax.xlane.f32.xlu0 %v626
      %v628 = vpop.xlane.xlu0 %627
      %v629 = vmax.f32 %v619, -1e+30
      %v630 = vmax.f32 %v622, -1e+30
      %v631 = vmax.f32 %v625, -1e+30
      %v632 = vmax.f32 %v628, -1e+30
      %v633 = vsub.f32 -1e+30, %v629
      %v634 = vsub.f32 -1e+30, %v630
      %v635 = vsub.f32 -1e+30, %v631
      %v636 = vsub.f32 -1e+30, %v632
      %v637 = vmul.f32 %v633, 1.442695
      %v638 = vpow.pop %v637
      %v639 = vmul.f32 %v634, 1.442695
      %v640 = vpow.pop %v639
      %v641 = vmul.f32 %v635, 1.442695
      %v642 = vpow.pop %v641
      %v643 = vmul.f32 %v636, 1.442695
      %v644 = vpow.pop %v643
      %v645 = vsub.f32 %v613, %v629
      %v646 = vsub.f32 %v614, %v630
      %v647 = vsub.f32 %v615, %v631
      %v648 = vsub.f32 %v616, %v632
      %v649 = vmul.f32 %v645, 1.442695
      %v650 = vpow.pop %v649
      %v651 = vmul.f32 %v646, 1.442695
      %v652 = vpow.pop %v651
      %v653 = vmul.f32 %v647, 1.442695
      %v654 = vpow.pop %v653
      %v655 = vmul.f32 %v648, 1.442695
      %v656 = vpow.pop %v655
      %v657 = vmul.f32 %v638, 0.0
      %v658 = vmul.f32 %v640, 0.0
      %v659 = vmul.f32 %v642, 0.0
      %v660 = vmul.f32 %v644, 0.0
      %v661 = vsel %vm406, %v650, 0.0
      %662 = vadd.xlane.f32.xlu0 %v661
      %v663 = vpop.xlane.xlu0 %662
      %v664 = vsel %vm406, %v652, 0.0
      %665 = vadd.xlane.f32.xlu0 %v664
      %v666 = vpop.xlane.xlu0 %665
      %v667 = vsel %vm406, %v654, 0.0
      %668 = vadd.xlane.f32.xlu0 %v667
      %v669 = vpop.xlane.xlu0 %668
      %v670 = vsel %vm406, %v656, 0.0
      %671 = vadd.xlane.f32.xlu0 %v670
      %v672 = vpop.xlane.xlu0 %671
      %v673 = vadd.f32 %v657, %v663
      %v674 = vadd.f32 %v658, %v666
      %v675 = vadd.f32 %v659, %v669
      %v676 = vadd.f32 %v660, %v672
      %v677 = vpack.c.bf16 %v652, %v650
      %v678 = vpack.c.bf16 %v656, %v654
      %679 = vrot.lane.b32.xlu0 %v477, 120
      %v680 = vpop.permute.xlu0 %679
      %681 = vrot.lane.b32.xlu0 %v478, 120
      %v682 = vpop.permute.xlu0 %681
      %v686 = vsel %vm406, %v677, 0
      %v689 = vsel %vm406, %v678, 0
      %691 = vmatprep.subr.bf16.mxu0 0
      %692 = vmatpush1.bf16.msra.mxu0 0
      %693 = vmatprep.subr.bf16.mxu0 0
      %694 = vmatpush1.bf16.msra.mxu0 0
      %695 = vmatprep.subr.bf16.mxu0 0
      %696 = vmatpush1.bf16.msra.mxu0 0
      %697 = vmatprep.subr.bf16.mxu0 0
      %698 = vmatpush1.bf16.msra.mxu0 0
      %699 = vmatprep.subr.bf16.mxu0 0
      %700 = vmatpush1.bf16.msra.mxu0 0
      %701 = vmatprep.subr.bf16.mxu0 0
      %702 = vmatpush1.bf16.msra.mxu0 0
      %703 = vmatprep.subr.bf16.mxu0 0
      %704 = vmatpush1.bf16.msra.mxu0 %v682
      %705 = vmatprep.subr.bf16.mxu0 0
      %706 = vmatpush1.bf16.msra.mxu0 %v680
      %707 = vmatprep.subr.bf16.mxu0 0
      %708 = vmatpush2.bf16.msra.mxu0 0
      %709 = vmatprep.subr.bf16.mxu0 0
      %710 = vmatpush2.bf16.msra.mxu0 0
      %711 = vmatprep.subr.bf16.mxu0 0
      %712 = vmatpush2.bf16.msra.mxu0 0
      %713 = vmatprep.subr.bf16.mxu0 0
      %714 = vmatpush2.bf16.msra.mxu0 0
      %715 = vmatprep.subr.bf16.mxu0 0
      %716 = vmatpush2.bf16.msra.mxu0 0
      %717 = vmatprep.subr.bf16.mxu0 0
      %718 = vmatpush2.bf16.msra.mxu0 0
      %719 = vmatprep.subr.bf16.mxu0 0
      %720 = vmatpush2.bf16.msra.mxu0 0
      %721 = vmatprep.subr.bf16.mxu0 0
      %722 = vmatpush2.bf16.msra.mxu0 0
      %723 = vmatprep.mubr.bf16.mxu0 0
      %724 = vmatmul.mubr.bf16.gmra.mxu0 %v686
      %v725 = vpop.f32.mrf.mxu0
      %v726 = vadd.f32 0.0, %v725
      %v727 = vpop.f32.mrf.mxu0
      %v728 = vpop.f32.mrf.mxu0
      %v729 = vadd.f32 0.0, %v728
      %v730 = vpop.f32.mrf.mxu0
      %731 = vmatprep.mubr.bf16.mxu0 0
      %732 = vmatmul.mubr.bf16.gmra.mxu0 %v689
      %v733 = vpop.f32.mrf.mxu0
      %v734 = vadd.f32 0.0, %v733
      %v735 = vpop.f32.mrf.mxu0
      %v736 = vpop.f32.mrf.mxu0
      %v737 = vadd.f32 0.0, %v736
      %v738 = vpop.f32.mrf.mxu0
      %739 = vdwg.mxu0
      %v740 = vadd.f32 %v657, %v726
      %v741 = vadd.f32 %v658, %v729
      %v742 = vadd.f32 %v659, %v734
      %v743 = vadd.f32 %v660, %v737
      %744 = vrot.lane.b32.xlu0 %v322, 112
      %v745 = vpop.permute.xlu0 %744
      %746 = vrot.lane.b32.xlu0 %v323, 112
      %v747 = vpop.permute.xlu0 %746
      %748 = vrot.lane.b32.xlu0 %v332, 112
      %v749 = vpop.permute.xlu0 %748
      %750 = vrot.lane.b32.xlu0 %v333, 112
      %v751 = vpop.permute.xlu0 %750
      %v753 = vsel %vm334, %v745, 0
      %v756 = vsel %vm334, %v747, 0
      %v759 = vsel %vm334, %v749, 0
      %v762 = vsel %vm334, %v751, 0
      %764 = vmatprep.subr.bf16.mxu0 0
      %765 = vmatpush1.bf16.xpose.msra.mxu0 0
      %766 = vmatprep.subr.bf16.mxu0 0
      %767 = vmatpush1.bf16.xpose.msra.mxu0 0
      %768 = vmatprep.subr.bf16.mxu0 0
      %769 = vmatpush1.bf16.xpose.msra.mxu0 0
      %770 = vmatprep.subr.bf16.mxu0 0
      %771 = vmatpush1.bf16.xpose.msra.mxu0 0
      %772 = vmatprep.subr.bf16.mxu0 0
      %773 = vmatpush1.bf16.xpose.msra.mxu0 0
      %774 = vmatprep.subr.bf16.mxu0 0
      %775 = vmatpush1.bf16.xpose.msra.mxu0 0
      %776 = vmatprep.subr.bf16.mxu0 0
      %777 = vmatpush1.bf16.xpose.msra.mxu0 %v762
      %778 = vmatprep.subr.bf16.mxu0 0
      %779 = vmatpush1.bf16.xpose.msra.mxu0 %v759
      %780 = vmatprep.subr.bf16.mxu0 0
      %781 = vmatpush2.bf16.xpose.msra.mxu0 0
      %782 = vmatprep.subr.bf16.mxu0 0
      %783 = vmatpush2.bf16.xpose.msra.mxu0 0
      %784 = vmatprep.subr.bf16.mxu0 0
      %785 = vmatpush2.bf16.xpose.msra.mxu0 0
      %786 = vmatprep.subr.bf16.mxu0 0
      %787 = vmatpush2.bf16.xpose.msra.mxu0 0
      %788 = vmatprep.subr.bf16.mxu0 0
      %789 = vmatpush2.bf16.xpose.msra.mxu0 0
      %790 = vmatprep.subr.bf16.mxu0 0
      %791 = vmatpush2.bf16.xpose.msra.mxu0 0
      %792 = vmatprep.subr.bf16.mxu0 0
      %793 = vmatpush2.bf16.xpose.msra.mxu0 0
      %794 = vmatprep.subr.bf16.mxu0 0
      %795 = vmatpush2.bf16.xpose.msra.mxu0 0
      %796 = vmatprep.mubr.bf16.mxu0 0
      %797 = vmatmul.mubr.bf16.gmra.mxu0 %v753
      %v798 = vpop.f32.mrf.mxu0
      %v799 = vadd.f32 0.0, %v798
      %v800 = vpop.f32.mrf.mxu0
      %v801 = vpop.f32.mrf.mxu0
      %v802 = vadd.f32 0.0, %v801
      %v803 = vpop.f32.mrf.mxu0
      %804 = vmatprep.mubr.bf16.mxu0 0
      %805 = vmatmul.mubr.bf16.gmra.mxu0 %v756
      %v806 = vpop.f32.mrf.mxu0
      %v807 = vadd.f32 0.0, %v806
      %v808 = vpop.f32.mrf.mxu0
      %v809 = vpop.f32.mrf.mxu0
      %v810 = vadd.f32 0.0, %v809
      %v811 = vpop.f32.mrf.mxu0
      %812 = vdwg.mxu0
      %v813 = vmul.f32 %v799, 0.35355338
      %v814 = vmul.f32 %v802, 0.35355338
      %v815 = vmul.f32 %v807, 0.35355338
      %v816 = vmul.f32 %v810, 0.35355338
      %v817 = vsel %vm401, %v813, -1e+30
      %v818 = vsel %vm401, %v814, -1e+30
      %v819 = vsel %vm401, %v815, -1e+30
      %v820 = vsel %vm401, %v816, -1e+30
      %v821 = vsel %vm406, %v817, -inf
      %822 = vmax.xlane.f32.xlu0 %v821
      %v823 = vpop.xlane.xlu0 %822
      %v824 = vsel %vm406, %v818, -inf
      %825 = vmax.xlane.f32.xlu0 %v824
      %v826 = vpop.xlane.xlu0 %825
      %v827 = vsel %vm406, %v819, -inf
      %828 = vmax.xlane.f32.xlu0 %v827
      %v829 = vpop.xlane.xlu0 %828
      %v830 = vsel %vm406, %v820, -inf
      %831 = vmax.xlane.f32.xlu0 %v830
      %v832 = vpop.xlane.xlu0 %831
      %v833 = vmax.f32 %v823, -1e+30
      %v834 = vmax.f32 %v826, -1e+30
      %v835 = vmax.f32 %v829, -1e+30
      %v836 = vmax.f32 %v832, -1e+30
      %v837 = vsub.f32 -1e+30, %v833
      %v838 = vsub.f32 -1e+30, %v834
      %v839 = vsub.f32 -1e+30, %v835
      %v840 = vsub.f32 -1e+30, %v836
      %v841 = vmul.f32 %v837, 1.442695
      %v842 = vpow.pop %v841
      %v843 = vmul.f32 %v838, 1.442695
      %v844 = vpow.pop %v843
      %v845 = vmul.f32 %v839, 1.442695
      %v846 = vpow.pop %v845
      %v847 = vmul.f32 %v840, 1.442695
      %v848 = vpow.pop %v847
      %v849 = vsub.f32 %v817, %v833
      %v850 = vsub.f32 %v818, %v834
      %v851 = vsub.f32 %v819, %v835
      %v852 = vsub.f32 %v820, %v836
      %v853 = vmul.f32 %v849, 1.442695
      %v854 = vpow.pop %v853
      %v855 = vmul.f32 %v850, 1.442695
      %v856 = vpow.pop %v855
      %v857 = vmul.f32 %v851, 1.442695
      %v858 = vpow.pop %v857
      %v859 = vmul.f32 %v852, 1.442695
      %v860 = vpow.pop %v859
      %v861 = vmul.f32 %v842, 0.0
      %v862 = vmul.f32 %v844, 0.0
      %v863 = vmul.f32 %v846, 0.0
      %v864 = vmul.f32 %v848, 0.0
      %v865 = vsel %vm406, %v854, 0.0
      %866 = vadd.xlane.f32.xlu0 %v865
      %v867 = vpop.xlane.xlu0 %866
      %v868 = vsel %vm406, %v856, 0.0
      %869 = vadd.xlane.f32.xlu0 %v868
      %v870 = vpop.xlane.xlu0 %869
      %v871 = vsel %vm406, %v858, 0.0
      %872 = vadd.xlane.f32.xlu0 %v871
      %v873 = vpop.xlane.xlu0 %872
      %v874 = vsel %vm406, %v860, 0.0
      %875 = vadd.xlane.f32.xlu0 %v874
      %v876 = vpop.xlane.xlu0 %875
      %v877 = vadd.f32 %v861, %v867
      %v878 = vadd.f32 %v862, %v870
      %v879 = vadd.f32 %v863, %v873
      %v880 = vadd.f32 %v864, %v876
      %v881 = vpack.c.bf16 %v856, %v854
      %v882 = vpack.c.bf16 %v860, %v858
      %883 = vrot.lane.b32.xlu0 %v477, 112
      %v884 = vpop.permute.xlu0 %883
      %885 = vrot.lane.b32.xlu0 %v478, 112
      %v886 = vpop.permute.xlu0 %885
      %v890 = vsel %vm406, %v881, 0
      %v893 = vsel %vm406, %v882, 0
      %895 = vmatprep.subr.bf16.mxu0 0
      %896 = vmatpush1.bf16.msra.mxu0 0
      %897 = vmatprep.subr.bf16.mxu0 0
      %898 = vmatpush1.bf16.msra.mxu0 0
      %899 = vmatprep.subr.bf16.mxu0 0
      %900 = vmatpush1.bf16.msra.mxu0 0
      %901 = vmatprep.subr.bf16.mxu0 0
      %902 = vmatpush1.bf16.msra.mxu0 0
      %903 = vmatprep.subr.bf16.mxu0 0
      %904 = vmatpush1.bf16.msra.mxu0 0
      %905 = vmatprep.subr.bf16.mxu0 0
      %906 = vmatpush1.bf16.msra.mxu0 0
      %907 = vmatprep.subr.bf16.mxu0 0
      %908 = vmatpush1.bf16.msra.mxu0 %v886
      %909 = vmatprep.subr.bf16.mxu0 0
      %910 = vmatpush1.bf16.msra.mxu0 %v884
      %911 = vmatprep.subr.bf16.mxu0 0
      %912 = vmatpush2.bf16.msra.mxu0 0
      %913 = vmatprep.subr.bf16.mxu0 0
      %914 = vmatpush2.bf16.msra.mxu0 0
      %915 = vmatprep.subr.bf16.mxu0 0
      %916 = vmatpush2.bf16.msra.mxu0 0
      %917 = vmatprep.subr.bf16.mxu0 0
      %918 = vmatpush2.bf16.msra.mxu0 0
      %919 = vmatprep.subr.bf16.mxu0 0
      %920 = vmatpush2.bf16.msra.mxu0 0
      %921 = vmatprep.subr.bf16.mxu0 0
      %922 = vmatpush2.bf16.msra.mxu0 0
      %923 = vmatprep.subr.bf16.mxu0 0
      %924 = vmatpush2.bf16.msra.mxu0 0
      %925 = vmatprep.subr.bf16.mxu0 0
      %926 = vmatpush2.bf16.msra.mxu0 0
      %927 = vmatprep.mubr.bf16.mxu0 0
      %928 = vmatmul.mubr.bf16.gmra.mxu0 %v890
      %v929 = vpop.f32.mrf.mxu0
      %v930 = vadd.f32 0.0, %v929
      %v931 = vpop.f32.mrf.mxu0
      %v932 = vpop.f32.mrf.mxu0
      %v933 = vadd.f32 0.0, %v932
      %v934 = vpop.f32.mrf.mxu0
      %935 = vmatprep.mubr.bf16.mxu0 0
      %936 = vmatmul.mubr.bf16.gmra.mxu0 %v893
      %v937 = vpop.f32.mrf.mxu0
      %v938 = vadd.f32 0.0, %v937
      %v939 = vpop.f32.mrf.mxu0
      %v940 = vpop.f32.mrf.mxu0
      %v941 = vadd.f32 0.0, %v940
      %v942 = vpop.f32.mrf.mxu0
      %943 = vdwg.mxu0
      %v944 = vadd.f32 %v861, %v930
      %v945 = vadd.f32 %v862, %v933
      %v946 = vadd.f32 %v863, %v938
      %v947 = vadd.f32 %v864, %v941
      %948 = vrot.lane.b32.xlu0 %v322, 104
      %v949 = vpop.permute.xlu0 %948
      %950 = vrot.lane.b32.xlu0 %v323, 104
      %v951 = vpop.permute.xlu0 %950
      %952 = vrot.lane.b32.xlu0 %v332, 104
      %v953 = vpop.permute.xlu0 %952
      %954 = vrot.lane.b32.xlu0 %v333, 104
      %v955 = vpop.permute.xlu0 %954
      %v957 = vsel %vm334, %v949, 0
      %v960 = vsel %vm334, %v951, 0
      %v963 = vsel %vm334, %v953, 0
      %v966 = vsel %vm334, %v955, 0
      %968 = vmatprep.subr.bf16.mxu0 0
      %969 = vmatpush1.bf16.xpose.msra.mxu0 0
      %970 = vmatprep.subr.bf16.mxu0 0
      %971 = vmatpush1.bf16.xpose.msra.mxu0 0
      %972 = vmatprep.subr.bf16.mxu0 0
      %973 = vmatpush1.bf16.xpose.msra.mxu0 0
      %974 = vmatprep.subr.bf16.mxu0 0
      %975 = vmatpush1.bf16.xpose.msra.mxu0 0
      %976 = vmatprep.subr.bf16.mxu0 0
      %977 = vmatpush1.bf16.xpose.msra.mxu0 0
      %978 = vmatprep.subr.bf16.mxu0 0
      %979 = vmatpush1.bf16.xpose.msra.mxu0 0
      %980 = vmatprep.subr.bf16.mxu0 0
      %981 = vmatpush1.bf16.xpose.msra.mxu0 %v966
      %982 = vmatprep.subr.bf16.mxu0 0
      %983 = vmatpush1.bf16.xpose.msra.mxu0 %v963
      %984 = vmatprep.subr.bf16.mxu0 0
      %985 = vmatpush2.bf16.xpose.msra.mxu0 0
      %986 = vmatprep.subr.bf16.mxu0 0
      %987 = vmatpush2.bf16.xpose.msra.mxu0 0
      %988 = vmatprep.subr.bf16.mxu0 0
      %989 = vmatpush2.bf16.xpose.msra.mxu0 0
      %990 = vmatprep.subr.bf16.mxu0 0
      %991 = vmatpush2.bf16.xpose.msra.mxu0 0
      %992 = vmatprep.subr.bf16.mxu0 0
      %993 = vmatpush2.bf16.xpose.msra.mxu0 0
      %994 = vmatprep.subr.bf16.mxu0 0
      %995 = vmatpush2.bf16.xpose.msra.mxu0 0
      %996 = vmatprep.subr.bf16.mxu0 0
      %997 = vmatpush2.bf16.xpose.msra.mxu0 0
      %998 = vmatprep.subr.bf16.mxu0 0
      %999 = vmatpush2.bf16.xpose.msra.mxu0 0
      %1000 = vmatprep.mubr.bf16.mxu0 0
      %1001 = vmatmul.mubr.bf16.gmra.mxu0 %v957
      %v1002 = vpop.f32.mrf.mxu0
      %v1003 = vadd.f32 0.0, %v1002
      %v1004 = vpop.f32.mrf.mxu0
      %v1005 = vpop.f32.mrf.mxu0
      %v1006 = vadd.f32 0.0, %v1005
      %v1007 = vpop.f32.mrf.mxu0
      %1008 = vmatprep.mubr.bf16.mxu0 0
      %1009 = vmatmul.mubr.bf16.gmra.mxu0 %v960
      %v1010 = vpop.f32.mrf.mxu0
      %v1011 = vadd.f32 0.0, %v1010
      %v1012 = vpop.f32.mrf.mxu0
      %v1013 = vpop.f32.mrf.mxu0
      %v1014 = vadd.f32 0.0, %v1013
      %v1015 = vpop.f32.mrf.mxu0
      %1016 = vdwg.mxu0
      %v1017 = vmul.f32 %v1003, 0.35355338
      %v1018 = vmul.f32 %v1006, 0.35355338
      %v1019 = vmul.f32 %v1011, 0.35355338
      %v1020 = vmul.f32 %v1014, 0.35355338
      %v1021 = vsel %vm401, %v1017, -1e+30
      %v1022 = vsel %vm401, %v1018, -1e+30
      %v1023 = vsel %vm401, %v1019, -1e+30
      %v1024 = vsel %vm401, %v1020, -1e+30
      %v1025 = vsel %vm406, %v1021, -inf
      %1026 = vmax.xlane.f32.xlu0 %v1025
      %v1027 = vpop.xlane.xlu0 %1026
      %v1028 = vsel %vm406, %v1022, -inf
      %1029 = vmax.xlane.f32.xlu0 %v1028
      %v1030 = vpop.xlane.xlu0 %1029
      %v1031 = vsel %vm406, %v1023, -inf
      %1032 = vmax.xlane.f32.xlu0 %v1031
      %v1033 = vpop.xlane.xlu0 %1032
      %v1034 = vsel %vm406, %v1024, -inf
      %1035 = vmax.xlane.f32.xlu0 %v1034
      %v1036 = vpop.xlane.xlu0 %1035
      %v1037 = vmax.f32 %v1027, -1e+30
      %v1038 = vmax.f32 %v1030, -1e+30
      %v1039 = vmax.f32 %v1033, -1e+30
      %v1040 = vmax.f32 %v1036, -1e+30
      %v1041 = vsub.f32 -1e+30, %v1037
      %v1042 = vsub.f32 -1e+30, %v1038
      %v1043 = vsub.f32 -1e+30, %v1039
      %v1044 = vsub.f32 -1e+30, %v1040
      %v1045 = vmul.f32 %v1041, 1.442695
      %v1046 = vpow.pop %v1045
      %v1047 = vmul.f32 %v1042, 1.442695
      %v1048 = vpow.pop %v1047
      %v1049 = vmul.f32 %v1043, 1.442695
      %v1050 = vpow.pop %v1049
      %v1051 = vmul.f32 %v1044, 1.442695
      %v1052 = vpow.pop %v1051
      %v1053 = vsub.f32 %v1021, %v1037
      %v1054 = vsub.f32 %v1022, %v1038
      %v1055 = vsub.f32 %v1023, %v1039
      %v1056 = vsub.f32 %v1024, %v1040
      %v1057 = vmul.f32 %v1053, 1.442695
      %v1058 = vpow.pop %v1057
      %v1059 = vmul.f32 %v1054, 1.442695
      %v1060 = vpow.pop %v1059
      %v1061 = vmul.f32 %v1055, 1.442695
      %v1062 = vpow.pop %v1061
      %v1063 = vmul.f32 %v1056, 1.442695
      %v1064 = vpow.pop %v1063
      %v1065 = vmul.f32 %v1046, 0.0
      %v1066 = vmul.f32 %v1048, 0.0
      %v1067 = vmul.f32 %v1050, 0.0
      %v1068 = vmul.f32 %v1052, 0.0
      %v1069 = vsel %vm406, %v1058, 0.0
      %1070 = vadd.xlane.f32.xlu0 %v1069
      %v1071 = vpop.xlane.xlu0 %1070
      %v1072 = vsel %vm406, %v1060, 0.0
      %1073 = vadd.xlane.f32.xlu0 %v1072
      %v1074 = vpop.xlane.xlu0 %1073
      %v1075 = vsel %vm406, %v1062, 0.0
      %1076 = vadd.xlane.f32.xlu0 %v1075
      %v1077 = vpop.xlane.xlu0 %1076
      %v1078 = vsel %vm406, %v1064, 0.0
      %1079 = vadd.xlane.f32.xlu0 %v1078
      %v1080 = vpop.xlane.xlu0 %1079
      %v1081 = vadd.f32 %v1065, %v1071
      %v1082 = vadd.f32 %v1066, %v1074
      %v1083 = vadd.f32 %v1067, %v1077
      %v1084 = vadd.f32 %v1068, %v1080
      %v1085 = vpack.c.bf16 %v1060, %v1058
      %v1086 = vpack.c.bf16 %v1064, %v1062
      %1087 = vrot.lane.b32.xlu0 %v477, 104
      %v1088 = vpop.permute.xlu0 %1087
      %1089 = vrot.lane.b32.xlu0 %v478, 104
      %v1090 = vpop.permute.xlu0 %1089
      %v1094 = vsel %vm406, %v1085, 0
      %v1097 = vsel %vm406, %v1086, 0
      %1099 = vmatprep.subr.bf16.mxu0 0
      %1100 = vmatpush1.bf16.msra.mxu0 0
      %1101 = vmatprep.subr.bf16.mxu0 0
      %1102 = vmatpush1.bf16.msra.mxu0 0
      %1103 = vmatprep.subr.bf16.mxu0 0
      %1104 = vmatpush1.bf16.msra.mxu0 0
      %1105 = vmatprep.subr.bf16.mxu0 0
      %1106 = vmatpush1.bf16.msra.mxu0 0
      %1107 = vmatprep.subr.bf16.mxu0 0
      %1108 = vmatpush1.bf16.msra.mxu0 0
      %1109 = vmatprep.subr.bf16.mxu0 0
      %1110 = vmatpush1.bf16.msra.mxu0 0
      %1111 = vmatprep.subr.bf16.mxu0 0
      %1112 = vmatpush1.bf16.msra.mxu0 %v1090
      %1113 = vmatprep.subr.bf16.mxu0 0
      %1114 = vmatpush1.bf16.msra.mxu0 %v1088
      %1115 = vmatprep.subr.bf16.mxu0 0
      %1116 = vmatpush2.bf16.msra.mxu0 0
      %1117 = vmatprep.subr.bf16.mxu0 0
      %1118 = vmatpush2.bf16.msra.mxu0 0
      %1119 = vmatprep.subr.bf16.mxu0 0
      %1120 = vmatpush2.bf16.msra.mxu0 0
      %1121 = vmatprep.subr.bf16.mxu0 0
      %1122 = vmatpush2.bf16.msra.mxu0 0
      %1123 = vmatprep.subr.bf16.mxu0 0
      %1124 = vmatpush2.bf16.msra.mxu0 0
      %1125 = vmatprep.subr.bf16.mxu0 0
      %1126 = vmatpush2.bf16.msra.mxu0 0
      %1127 = vmatprep.subr.bf16.mxu0 0
      %1128 = vmatpush2.bf16.msra.mxu0 0
      %1129 = vmatprep.subr.bf16.mxu0 0
      %1130 = vmatpush2.bf16.msra.mxu0 0
      %1131 = vmatprep.mubr.bf16.mxu0 0
      %1132 = vmatmul.mubr.bf16.gmra.mxu0 %v1094
      %v1133 = vpop.f32.mrf.mxu0
      %v1134 = vadd.f32 0.0, %v1133
      %v1135 = vpop.f32.mrf.mxu0
      %v1136 = vpop.f32.mrf.mxu0
      %v1137 = vadd.f32 0.0, %v1136
      %v1138 = vpop.f32.mrf.mxu0
      %1139 = vmatprep.mubr.bf16.mxu0 0
      %1140 = vmatmul.mubr.bf16.gmra.mxu0 %v1097
      %v1141 = vpop.f32.mrf.mxu0
      %v1142 = vadd.f32 0.0, %v1141
      %v1143 = vpop.f32.mrf.mxu0
      %v1144 = vpop.f32.mrf.mxu0
      %v1145 = vadd.f32 0.0, %v1144
      %v1146 = vpop.f32.mrf.mxu0
      %1147 = vdwg.mxu0
      %v1148 = vadd.f32 %v1065, %v1134
      %v1149 = vadd.f32 %v1066, %v1137
      %v1150 = vadd.f32 %v1067, %v1142
      %v1151 = vadd.f32 %v1068, %v1145
      %v1152 = vrcp.pop %v463
      %v1153 = vrcp.pop %v464
      %v1154 = vrcp.pop %v465
      %v1155 = vrcp.pop %v466
      %v1156 = vmul.f32 %v536, %v1152
      %v1157 = vmul.f32 %v537, %v1153
      %v1158 = vmul.f32 %v538, %v1154
      %v1159 = vmul.f32 %v539, %v1155
      %v1160 = vrcp.pop %v673
      %v1161 = vrcp.pop %v674
      %v1162 = vrcp.pop %v675
      %v1163 = vrcp.pop %v676
      %v1164 = vmul.f32 %v740, %v1160
      %v1165 = vmul.f32 %v741, %v1161
      %v1166 = vmul.f32 %v742, %v1162
      %v1167 = vmul.f32 %v743, %v1163
      %v1168 = vrcp.pop %v877
      %v1169 = vrcp.pop %v878
      %v1170 = vrcp.pop %v879
      %v1171 = vrcp.pop %v880
      %v1172 = vmul.f32 %v944, %v1168
      %v1173 = vmul.f32 %v945, %v1169
      %v1174 = vmul.f32 %v946, %v1170
      %v1175 = vmul.f32 %v947, %v1171
      %v1176 = vrcp.pop %v1081
      %v1177 = vrcp.pop %v1082
      %v1178 = vrcp.pop %v1083
      %v1179 = vrcp.pop %v1084
      %v1180 = vmul.f32 %v1148, %v1176
      %v1181 = vmul.f32 %v1149, %v1177
      %v1182 = vmul.f32 %v1150, %v1178
      %v1183 = vmul.f32 %v1151, %v1179
      %1188 = vrot.lane.b32.xlu0 %v1164, 8
      %v1189 = vpop.permute.xlu0 %1188
      %1190 = vrot.lane.b32.xlu0 %v1165, 8
      %v1191 = vpop.permute.xlu0 %1190
      %1192 = vrot.lane.b32.xlu0 %v1166, 8
      %v1193 = vpop.permute.xlu0 %1192
      %1194 = vrot.lane.b32.xlu0 %v1167, 8
      %v1195 = vpop.permute.xlu0 %1194
      %1204 = vrot.lane.b32.xlu0 %v1172, 16
      %v1205 = vpop.permute.xlu0 %1204
      %1206 = vrot.lane.b32.xlu0 %v1173, 16
      %v1207 = vpop.permute.xlu0 %1206
      %1208 = vrot.lane.b32.xlu0 %v1174, 16
      %v1209 = vpop.permute.xlu0 %1208
      %1210 = vrot.lane.b32.xlu0 %v1175, 16
      %v1211 = vpop.permute.xlu0 %1210
      %1220 = vrot.lane.b32.xlu0 %v1180, 24
      %v1221 = vpop.permute.xlu0 %1220
      %1222 = vrot.lane.b32.xlu0 %v1181, 24
      %v1223 = vpop.permute.xlu0 %1222
      %1224 = vrot.lane.b32.xlu0 %v1182, 24
      %v1225 = vpop.permute.xlu0 %1224
      %1226 = vrot.lane.b32.xlu0 %v1183, 24
      %v1227 = vpop.permute.xlu0 %1226
      %v1232 = vsel %vm334, %v1156, %v1189
      %v1233 = vsel %vm334, %v1157, %v1191
      %v1234 = vsel %vm334, %v1158, %v1193
      %v1235 = vsel %vm334, %v1159, %v1195
      %vm1236 = vcmask 130048
      %v1237 = vsel %vm1236, %v1232, %v1205
      %v1238 = vsel %vm1236, %v1233, %v1207
      %v1239 = vsel %vm1236, %v1234, %v1209
      %v1240 = vsel %vm1236, %v1235, %v1211
      %vm1241 = vcmask 195584
      %v1242 = vsel %vm1241, %v1237, %v1221
      %v1243 = vsel %vm1241, %v1238, %v1223
      %v1244 = vsel %vm1241, %v1239, %v1225
      %v1245 = vsel %vm1241, %v1240, %v1227
      %v1246 = vpack.c.bf16 %v1243, %v1242
      %v1247 = vpack.c.bf16 %v1245, %v1244
      %v1250 = vunpack.c.l.b16 %v1246
      %v1251 = vunpack.c.h.b16 %v1246
      %v1252 = vunpack.c.l.b16 %v1247
      %v1253 = vunpack.c.h.b16 %v1247
      %v1254 = vpack.c.b16 %v1250, %v1250
      %v1255 = vpack.c.b16 %v1251, %v1251
      %v1256 = vpack.c.b16 %v1252, %v1252
      %v1257 = vpack.c.b16 %v1253, %v1253
      %vm1262 = vcmask 257024
      %1263 = vst.msk [vmem:[%s296] sm:$0xf] %vm1262, %v1254
      %1264 = vst.msk [vmem:[%s296 + $0x4] sm:$0xf] %vm1262, %v1255
      %1265 = vst.msk [vmem:[%s296 + $0x8] sm:$0xf] %vm1262, %v1256
      %1266 = vst.msk [vmem:[%s296 + $0xc] sm:$0xf] %vm1262, %v1257
      %s1267 = smul.u32 4, %s21
      %p1268 = scmp.lt.s32.totalorder %s19, 1
      %s1269 = scalar_select %p1268, %s19, 1
      %p1270 = scmp.lt.s32.totalorder %s1267, 3
      %s1271 = scalar_select %p1270, %s1267, 3
      %p1272 = scmp.lt.s32.totalorder %s20, 0
      %s1273 = scalar_select %p1272, %s20, 0
      %s1274 = sadd.s32 %s1273, %s1271
      %s1275 = smul.addr %s1269, 4
      %s1276 = sadd.s32 %s1274, %s1275
      %s1277 = smul.addr %s1276, 4
      %s1278 = scalar_lea.vmem %s3, %s1277
      // Predicated region
      $region33: #{_lambda_.10} parent=31 // pred_check
        %p1279 = pneg %p141
      $region34: #{_lambda_.10} parent=31 // pred_check_branch
        %1281 = sbr.rel (%p1279) target = $region36
      $region35: #{_lambda_.10} parent=31 // pred_region
        %s1282 = smul.u32 4, %s21
      $region36: #{_lambda_.10} parent=31 // pred_fallthru
        _
    $region32: #{_lambda_.10} parent=5 // pred_fallthru
      _
    %p1283 = scmp.le.s32.totalorder 2, %s9
    // Predicated region
    $region37: #{_lambda_.10} parent=5 // pred_check
      %p1284 = pneg %p1283
    $region38: #{_lambda_.10} parent=5 // pred_check_branch
      %1286 = sbr.rel (%p1284) target = $region40
    $region39: #{_lambda_.10} parent=5 // pred_region
      %s1287 = ssub.s32 %s9, 2
      // Predicated region
      $region41: #{_lambda_.10} parent=39 // pred_check
        %p1288 = pneg %p147
      $region42: #{_lambda_.10} parent=39 // pred_check_branch
        %1290 = sbr.rel (%p1288) target = $region44
      $region43: #{_lambda_.10} parent=39 // pred_region
        %s1291 = smul.u32 4, %s24
        %p1292 = scmp.lt.s32.totalorder %s22, 1
        %s1293 = scalar_select %p1292, %s22, 1
        %p1294 = scmp.lt.s32.totalorder %s1291, 3
        %s1295 = scalar_select %p1294, %s1291, 3
        %p1296 = scmp.lt.s32.totalorder %s23, 0
        %s1297 = scalar_select %p1296, %s23, 0
        %s1298 = sadd.s32 %s1297, %s1295
        %s1299 = smul.addr %s1293, 4
        %s1300 = sadd.s32 %s1298, %s1299
        %s1301 = smul.addr %s1300, 4
        %s1302 = scalar_lea.vmem %s3, %s1301
      $region44: #{_lambda_.10} parent=39 // pred_fallthru
        _
    $region40: #{_lambda_.10} parent=5 // pred_fallthru
      _
  $region6: #{_lambda_.10} parent=0 // loop_footer
    %s13 = sadd.s32 1, %s9
  $region7: #{_lambda_.10} parent=0 // loop_footer_branch
    %8 = sbr.rel target = $region3
  $region8: #{_lambda_.10} parent=0 // loop_exit
    _

// kernel: _lambda_.15
$region0: #{_lambda_.15}
  #allocation0 [shape = 'u32[]', space=smem, size = 0x4, offset = 0x4, fixed_abs, tag = 'smem constant byte address 0x4 - core index']
  #allocation1 [shape = 'u32[144,128]{1,0:T(1,128)}', space=vmem, size = 0x12000, scoped, tag = 'internal scratch']
  %s0 = inlined_call_operand.vmem [shape: f32[2,32], index: 0, kind: input, shape index: {}]
  %s1 = inlined_call_operand.vmem [shape: f32[1,32], index: 1, kind: input, shape index: {}]
  %s2 = inlined_call_operand.vmem [shape: f32[1,32], index: 2, kind: input, shape index: {}]
  %s3 = inlined_call_operand.hbm [shape: f32[2,32], index: 3, kind: output, shape index: {}]
  %s4 = sld [smem:[#allocation0]]
  $region22: #{_lambda_.15} parent=0
    _
  %s6 = ssub.s32 1, %s4
  %s7 = scalar_select 0, %s6, %s4
  $region1: #{_lambda_.15} parent=0
    #allocation2 [shape = 'u8[1024]{0}', space=vmem, size = 0x400, scoped, tag = 'output window, operand 0, single buffered']
    #allocation3 [shape = 's32[1]{0}', space=sflag, size = 0x4, scoped, tag = 'scoped memory for _lambda_.15']
    %8 = vsyncpa [#allocation3], 0
    // Predicated region
    $region2: #{_lambda_.15} parent=1 // pred_check
      _
    $region3: #{_lambda_.15} parent=1 // pred_check_branch
      %10 = sbr.rel (0) target = $region5
    $region4: #{_lambda_.15} parent=1 // pred_region
      _
    $region5: #{_lambda_.15} parent=1 // pred_fallthru
      _
    // Predicated region
    $region6: #{_lambda_.15} parent=1 // pred_check
      _
    $region7: #{_lambda_.15} parent=1 // pred_check_branch
      %12 = sbr.rel (0) target = $region9
    $region8: #{_lambda_.15} parent=1 // pred_region
      _
    $region9: #{_lambda_.15} parent=1 // pred_fallthru
      _
    // Predicated region
    $region10: #{_lambda_.15} parent=1 // pred_check
      _
    $region11: #{_lambda_.15} parent=1 // pred_check_branch
      %14 = sbr.rel (0) target = $region13
    $region12: #{_lambda_.15} parent=1 // pred_region
      _
    $region13: #{_lambda_.15} parent=1 // pred_fallthru
      _
    %v15 = vld [vmem:[%s0] sm:$0x3]
    %v16 = vld [vmem:[%s1] sm:$0x1]
    %v17 = vld [vmem:[%s2] sm:$0x1]
    %vm18 = vcmask 254976
    %v19 = vsel %vm18, %v15, 0.0
    %20 = vadd.xlane.f32.xlu0 %v19
    %v21 = vpop.xlane.xlu0 %20
    %v22 = vrcp.pop 32.0
    %v23 = vmul.f32 %v21, %v22
    %v24 = vsub.f32 %v15, %v23
    %v25 = vmul.f32 %v24, %v24
    %v26 = vsel %vm18, %v25, 0.0
    %27 = vadd.xlane.f32.xlu0 %v26
    %v28 = vpop.xlane.xlu0 %27
    %v29 = vmul.f32 %v28, %v22
    %v30 = vadd.f32 %v29, 1e-05
    %v31 = vrsqrt.pop %v30
    %v32 = vmul.f32 %v24, %v31
    %v34 = vlaneseq
    %v35 = vshrl.u32 %v34, 7
    %v36 = vsub.s32 0, %v35
    %v37 = vrot.slane %v16, %v36
    %v39 = vmul.f32 %v32, %v37
    %v41 = vlaneseq
    %v42 = vshrl.u32 %v41, 7
    %v43 = vsub.s32 0, %v42
    %v44 = vrot.slane %v17, %v43
    %v46 = vadd.f32 %v39, %v44
    %47 = vst.msk [vmem:[#allocation2] sm:$0x3] %vm18, %v46
    // Predicated region
    $region14: #{_lambda_.15} parent=1 // pred_check
      _
    $region15: #{_lambda_.15} parent=1 // pred_check_branch
      %49 = sbr.rel (0) target = $region17
    $region16: #{_lambda_.15} parent=1 // pred_region
      %s51 = ssub.s32 32, 32
      %52 = vsyncadd [#allocation3], %s51
      %s54 = sshll.u32 [#allocation2], 4
      %s55 = int_to_ptr.vmem [resolvable:$true] %s54
      %57 = dma.vmem_to_hbm [thread:$0]  %s55, 32, %s3, [#allocation3]
    $region17: #{_lambda_.15} parent=1 // pred_fallthru
      _
    // Predicated region
    $region18: #{_lambda_.15} parent=1 // pred_check
      _
    $region19: #{_lambda_.15} parent=1 // pred_check_branch
      %59 = sbr.rel (0) target = $region21
    $region20: #{_lambda_.15} parent=1 // pred_region
      %60 = dma.done [#allocation3], 32
    $region21: #{_lambda_.15} parent=1 // pred_fallthru
      _
    %61 = vsyncpa [#allocation3], 1

</llo_original>
